<compile_context>
chip_gen: v7x
topology: tpu7x:2x2x1
jax: 0.10.0
libtpu: 0.0.40
codegen_flags: <defaults>
</compile_context>

<pallas_src>
import numpy as np
import jax
import jax.numpy as jnp
from jax.experimental import pallas as pl
from jax.experimental.pallas import tpu as pltpu

MM_DTYPE = jnp.bfloat16   # MXU operand dtype (accumulation is always float32)

# Row padding (multiples of 8 sublanes) for the stacked tap matrices.
MP_ROWS, MP_PAD = 100, 104    # maxpool   18x18 -> 10x10
C24_ROWS, C24_PAD = 49, 56    # conv2/4   10x10 ->  7x7
C3_ROWS, C3_PAD = 25, 32      # conv3      7x7  ->  5x5


# ----------------------------------------------------------------------------
# Static gather / pooling matrices (numpy, trace-time constants)
# ----------------------------------------------------------------------------
def conv2x2_tap_mats(h, w, oh, ow, pad):
    """Selection matrices for a kernel=2, stride=2 conv/pool.

    mats[t] @ featmap (rows = h*w spatial, row-major) gathers, for every output
    position, the input pixel feeding tap t = kh*2+kw.  An all-zero row encodes
    an out-of-bounds (zero-padded) tap.
    """
    mats = np.zeros((4, oh * ow, h * w), np.float32)
    for kh in range(2):
        for kw in range(2):
            t = kh * 2 + kw
            for r in range(oh):
                for c in range(ow):
                    ih, iw = 2 * r + kh - pad, 2 * c + kw - pad
                    if 0 <= ih < h and 0 <= iw < w:
                        mats[t, r * ow + c, ih * w + iw] = 1.0
    return mats


def stack_taps(mats, pad_rows):
    """Stack the 4 tap matrices along M, padding each block to pad_rows rows."""
    t, r, c = mats.shape
    out = np.zeros((t, pad_rows, c), np.float32)
    out[:, :r, :] = mats
    return out.reshape(t * pad_rows, c)


def adaptive_pool_matrix(in_size, out_size):
    P = np.zeros((out_size, in_size), np.float32)
    for i in range(out_size):
        s = (i * in_size) // out_size
        e = -(-((i + 1) * in_size) // out_size)  # ceil
        P[i, s:e] = 1.0 / (e - s)
    return P


def avgpool_matrix(in_size, k, stride):
    out_size = (in_size - k) // stride + 1
    P = np.zeros((out_size, in_size), np.float32)
    for i in range(out_size):
        P[i, i * stride:i * stride + k] = 1.0 / k
    return P


def bn_fold(gamma, beta, mean, var, eps=1e-5):
    scale = gamma / jnp.sqrt(var + eps)
    return scale, beta - mean * scale


# ----------------------------------------------------------------------------
# The single fused kernel (one grid program per BB-sized batch block)
# ----------------------------------------------------------------------------
def _fused_forward_kernel(patch_ref, w1_ref, t1_ref,
                          tmp_ref, t24_ref, w24_ref, t2_ref, b4_ref,
                          t3_ref, w3_ref, mada_ref, wf2_ref, rsel_ref,
                          bfc_ref, out_ref):
    bf16 = MM_DTYPE
    f32 = jnp.float32
    n2 = t2_ref.shape[-1]          # 16 * BB  (conv2 lane count)

    def mm(a, b):
        return jnp.dot(a, b, preferred_element_type=f32)

    # conv1 (bn1 scale folded into weight) + bn1 shift + relu1
    h1 = jnp.maximum(mm(patch_ref[0], w1_ref[...]) + t1_ref[...], 0.0)
    h1 = h1.astype(bf16)                                     # (324, 32*BB)

    # maxpool 2x2/s2/p1: one stacked-tap gather matmul, elementwise max.
    # NOTE: zero padding taps emulate -inf padding only because h1 >= 0 (relu1).
    gmp = mm(tmp_ref[...], h1)                               # (4*MP_PAD, 32*BB)
    mp = gmp[0:MP_ROWS]
    for t in range(1, 4):
        mp = jnp.maximum(mp, gmp[t * MP_PAD: t * MP_PAD + MP_ROWS])
    mp = mp.astype(bf16)                                     # (100, 32*BB)

    # conv2 (bn2 scale folded) and conv4 share tap geometry (10x10 -> 7x7).
    # Their weights are concatenated: first 16*BB lanes conv2, last 8*BB conv4.
    g24 = mm(t24_ref[...], mp).astype(bf16)                  # (4*C24_PAD, 32*BB)
    y = mm(g24[0:C24_ROWS], w24_ref[0])
    for t in range(1, 4):
        y = y + mm(g24[t * C24_PAD: t * C24_PAD + C24_ROWS], w24_ref[t])
    h2 = jnp.maximum(y[:, :n2] + t2_ref[...], 0.0).astype(bf16)   # (49, 16*BB)
    r4 = y[:, n2:] + b4_ref[...]                                  # (49, 8*BB) f32

    # conv3 (no bias, no bn): stacked-tap gather + 4 channel matmuls
    g3 = mm(t3_ref[...], h2).astype(bf16)                    # (4*C3_PAD, 16*BB)
    x3 = mm(g3[0:C3_ROWS], w3_ref[0])
    for t in range(1, 4):
        x3 = x3 + mm(g3[t * C3_PAD: t * C3_PAD + C3_ROWS], w3_ref[t])

    # AdaptiveAvgPool2d(5) on the conv4 branch, then add + relu3
    r5 = mm(mada_ref[...], r4.astype(bf16))                  # (25, 8*BB)
    a = jnp.maximum(x3 + r5, 0.0)                            # (25, 8*BB) f32

    # AvgPool2d(3,s1) + NCHW flatten + fc, folded into wf2 at trace time:
    #   wf2[o, p, b*8+c] = sum_k mavg[k, p] * W_fc[o, c*9 + k]
    # u[o, lane] = sum_p a[p, lane] * wf2[o, p, lane]   (VPU multiply + reduce)
    u = jnp.concatenate(
        [jnp.sum(a * wf2_ref[o], axis=0, keepdims=True) for o in range(10)],
        axis=0)                                              # (10, 8*BB) f32
    # grouped-lane sum per batch + bias; output is (10, BB), transposed in wrapper
    out_ref[0] = mm(u, rsel_ref[...]) + bfc_ref[...]         # (10, BB)


# ----------------------------------------------------------------------------
# Wrapper
# ----------------------------------------------------------------------------
def single_residual_forward(x_nchw, p, block_batch=8):
    """Forward pass.  block_batch (BB) = batch elements per grid program.

    Guidance: BB>=8 saturates the 256-wide MXU on v6e/v7x (BB>=4 is enough for
    v5e's 128-wide MXU); on v7x keep ceil(B/BB) >= 2 when B allows so both
    TensorCores receive programs.
    """
    bf16, f32 = MM_DTYPE, jnp.float32
    B = x_nchw.shape[0]
    BB = max(1, min(block_batch, B))
    B_pad = ((B + BB - 1) // BB) * BB
    if B_pad != B:
        x_nchw = jnp.pad(x_nchw, ((0, B_pad - B), (0, 0), (0, 0), (0, 0)))
    nb = B_pad // BB

    # conv1 im2col, lane-stacked batch-major: pad + reshape + one transpose.
    # rows = 18x18 output positions (row-major); cols = b*12 + ci*4 + kh*2 + kw
    xp = jnp.pad(x_nchw, ((0, 0), (0, 0), (2, 2), (2, 2)))          # (B_pad,3,36,36)
    xv = xp.reshape(nb, BB, 3, 18, 2, 18, 2)
    patch = xv.transpose(0, 3, 5, 1, 2, 4, 6).reshape(nb, 324, BB * 12).astype(bf16)

    # Static tap / pooling matrices (shared across the grid), taps stacked on M.
    tmp_s = jnp.asarray(stack_taps(conv2x2_tap_mats(18, 18, 10, 10, pad=1), MP_PAD), bf16)
    t24_s = jnp.asarray(stack_taps(conv2x2_tap_mats(10, 10, 7, 7, pad=2), C24_PAD), bf16)
    t3_s = jnp.asarray(stack_taps(conv2x2_tap_mats(7, 7, 5, 5, pad=2), C3_PAD), bf16)
    P5 = adaptive_pool_matrix(7, 5)
    mada = jnp.asarray(np.kron(P5, P5), bf16)                       # (25, 49)
    A3 = avgpool_matrix(5, 3, 1)
    mavg = np.kron(A3, A3)                                          # (9, 25)

    # BN folding (eval mode) + block-diagonal (batch-blocked) weights.
    s1, t1 = bn_fold(p["bn1_gamma"], p["bn1_beta"], p["bn1_mean"], p["bn1_var"])
    s2, t2 = bn_fold(p["bn2_gamma"], p["bn2_beta"], p["bn2_mean"], p["bn2_var"])
    eye = jnp.eye(BB, dtype=f32)

    w1 = p["w_conv1"].reshape(32, 12).T * s1[None, :]               # bn1 scale folded
    w1big = jnp.kron(eye, w1).astype(bf16)                          # (12BB, 32BB)
    t1big = jnp.tile(t1, BB).reshape(1, 32 * BB).astype(f32)

    w2 = p["w_conv2"].transpose(2, 3, 1, 0).reshape(4, 32, 16) * s2[None, None, :]
    w4 = p["w_conv4"].transpose(2, 3, 1, 0).reshape(4, 32, 8)
    w24big = jnp.stack(
        [jnp.concatenate([jnp.kron(eye, w2[t]), jnp.kron(eye, w4[t])], axis=1)
         for t in range(4)], axis=0).astype(bf16)                   # (4, 32BB, 24BB)
    t2big = jnp.tile(t2, BB).reshape(1, 16 * BB).astype(f32)
    b4big = jnp.tile(p["b_conv4"], BB).reshape(1, 8 * BB).astype(f32)

    w3 = p["w_conv3"].transpose(2, 3, 1, 0).reshape(4, 16, 8)
    w3big = jnp.stack([jnp.kron(eye, w3[t]) for t in range(4)], 0).astype(bf16)

    # AvgPool(3) + flatten + fc folded into one weight: wf2[o,p,c] tiled over BB.
    wfc3 = p["w_fc"].reshape(10, 8, 9)                              # [o, c, k]
    wf2 = jnp.einsum('kp,ock->opc', jnp.asarray(mavg, f32), wfc3)   # (10, 25, 8)
    wf2 = jnp.tile(wf2, (1, 1, BB)).astype(f32)                     # (10, 25, 8BB)
    rsel = jnp.kron(eye, jnp.ones((8, 1), f32))                     # (8BB, BB)
    bfc = p["b_fc"].reshape(10, 1).astype(f32)

    def shared(rank):
        return lambda b: (0,) * rank

    in_specs = [
        pl.BlockSpec((1, 324, 12 * BB), lambda b: (b, 0, 0)),   # conv1 patches
        pl.BlockSpec((12 * BB, 32 * BB), shared(2)),            # w1 (block-diag)
        pl.BlockSpec((1, 32 * BB), shared(2)),                  # bn1 shift
        pl.BlockSpec((4 * MP_PAD, 324), shared(2)),             # maxpool taps (stacked)
        pl.BlockSpec((4 * C24_PAD, 100), shared(2)),            # conv2/conv4 taps
        pl.BlockSpec((4, 32 * BB, 24 * BB), shared(3)),         # w2|w4 (block-diag)
        pl.BlockSpec((1, 16 * BB), shared(2)),                  # bn2 shift
        pl.BlockSpec((1, 8 * BB), shared(2)),                   # conv4 bias
        pl.BlockSpec((4 * C3_PAD, 49), shared(2)),              # conv3 taps
        pl.BlockSpec((4, 16 * BB, 8 * BB), shared(3)),          # w3 (block-diag)
        pl.BlockSpec((25, 49), shared(2)),                      # adaptive avg pool 7->5
        pl.BlockSpec((10, 25, 8 * BB), shared(3)),              # folded avgpool+fc weight
        pl.BlockSpec((8 * BB, BB), shared(2)),                  # per-batch lane-group sum
        pl.BlockSpec((10, 1), shared(2)),                       # fc bias
    ]

    out = pl.pallas_call(
        _fused_forward_kernel,
        out_shape=jax.ShapeDtypeStruct((nb, 10, BB), f32),
        grid=(nb,),
        in_specs=in_specs,
        out_specs=pl.BlockSpec((1, 10, BB), lambda b: (b, 0, 0)),
        compiler_params=pltpu.CompilerParams(
            dimension_semantics=("parallel",)),
    )(patch, w1big, t1big, tmp_s, t24_s, w24big, t2big, b4big,
      t3_s, w3big, mada, wf2, rsel, bfc)

    # (nb, 10, BB) -> (B, 10)
    return out.transpose(0, 2, 1).reshape(B_pad, 10)[:B]


# ----------------------------------------------------------------------------
# Parameters (eval-mode BatchNorm running stats)
# ----------------------------------------------------------------------------
def init_params(key):
    ks = jax.random.split(key, 12)
    p = {}
    p["w_conv1"] = jax.random.normal(ks[0], (32, 3, 2, 2), jnp.float32) * 0.1
    p["w_conv2"] = jax.random.normal(ks[1], (16, 32, 2, 2), jnp.float32) * 0.1
    p["w_conv3"] = jax.random.normal(ks[2], (8, 16, 2, 2), jnp.float32) * 0.1
    p["w_conv4"] = jax.random.normal(ks[3], (8, 32, 2, 2), jnp.float32) * 0.1
    p["b_conv4"] = jax.random.normal(ks[4], (8,), jnp.float32) * 0.1
    p["w_fc"] = jax.random.normal(ks[5], (10, 72), jnp.float32) * 0.1
    p["b_fc"] = jax.random.normal(ks[6], (10,), jnp.float32) * 0.1
    p["bn1_gamma"] = jax.random.normal(ks[7], (32,), jnp.float32) * 0.1 + 1.0
    p["bn1_beta"] = jax.random.normal(ks[8], (32,), jnp.float32) * 0.1
    p["bn1_mean"] = jnp.zeros((32,), jnp.float32)
    p["bn1_var"] = jnp.ones((32,), jnp.float32)
    p["bn2_gamma"] = jax.random.normal(ks[9], (16,), jnp.float32) * 0.1 + 1.0
    p["bn2_beta"] = jax.random.normal(ks[10], (16,), jnp.float32) * 0.1
    p["bn2_mean"] = jnp.zeros((16,), jnp.float32)
    p["bn2_var"] = jnp.ones((16,), jnp.float32)
    return p


if __name__ == "__main__":
    key = jax.random.PRNGKey(0)
    k_in, k_param = jax.random.split(key)
    x = jax.random.normal(k_in, (2, 3, 32, 32), jnp.float32)  # NCHW like PyTorch
    params = init_params(k_param)

    fwd = jax.jit(single_residual_forward)
    out = jax.block_until_ready(fwd(x, params))
    assert out.shape == (2, 10) and out.dtype == jnp.float32
    assert bool(jnp.all(jnp.isfinite(out)))
    print("KERNEL_OK")
</pallas_src>

<mosaic_0001>
module attributes {stable_mosaic.version = 11 : i64} {
  func.func @_fused_forward_kernel(%arg0: i32, %arg1: memref<1x324x24xbf16, #tpu.memory_space<vmem>>, %arg2: memref<24x64xbf16, #tpu.memory_space<vmem>>, %arg3: memref<1x64xf32, #tpu.memory_space<vmem>>, %arg4: memref<416x324xbf16, #tpu.memory_space<vmem>>, %arg5: memref<224x100xbf16, #tpu.memory_space<vmem>>, %arg6: memref<4x64x48xbf16, #tpu.memory_space<vmem>>, %arg7: memref<1x32xf32, #tpu.memory_space<vmem>>, %arg8: memref<1x16xf32, #tpu.memory_space<vmem>>, %arg9: memref<128x49xbf16, #tpu.memory_space<vmem>>, %arg10: memref<4x32x16xbf16, #tpu.memory_space<vmem>>, %arg11: memref<25x49xbf16, #tpu.memory_space<vmem>>, %arg12: memref<10x25x16xf32, #tpu.memory_space<vmem>>, %arg13: memref<16x2xf32, #tpu.memory_space<vmem>>, %arg14: memref<10x1xf32, #tpu.memory_space<vmem>>, %arg15: memref<1x10x2xf32, #tpu.memory_space<vmem>>) attributes {dimension_semantics = [#tpu.dimension_semantics<parallel>], iteration_bounds = array<i64: 1>, scalar_prefetch = 0 : i64, scratch_operands = 0 : i64, tpu.core_type = #tpu.core_type<tc>, window_params = [{transform_indices = @transform_0, window_bounds = array<i64: 1, 324, 24>}, {pipeline_mode = #tpu.pipeline_mode<synchronous>, transform_indices = @transform_1, window_bounds = array<i64: 24, 64>}, {pipeline_mode = #tpu.pipeline_mode<synchronous>, transform_indices = @transform_2, window_bounds = array<i64: 1, 64>}, {pipeline_mode = #tpu.pipeline_mode<synchronous>, transform_indices = @transform_3, window_bounds = array<i64: 416, 324>}, {pipeline_mode = #tpu.pipeline_mode<synchronous>, transform_indices = @transform_4, window_bounds = array<i64: 224, 100>}, {pipeline_mode = #tpu.pipeline_mode<synchronous>, transform_indices = @transform_5, window_bounds = array<i64: 4, 64, 48>}, {pipeline_mode = #tpu.pipeline_mode<synchronous>, transform_indices = @transform_6, window_bounds = array<i64: 1, 32>}, {pipeline_mode = #tpu.pipeline_mode<synchronous>, transform_indices = @transform_7, window_bounds = array<i64: 1, 16>}, {pipeline_mode = #tpu.pipeline_mode<synchronous>, transform_indices = @transform_8, window_bounds = array<i64: 128, 49>}, {pipeline_mode = #tpu.pipeline_mode<synchronous>, transform_indices = @transform_9, window_bounds = array<i64: 4, 32, 16>}, {pipeline_mode = #tpu.pipeline_mode<synchronous>, transform_indices = @transform_10, window_bounds = array<i64: 25, 49>}, {pipeline_mode = #tpu.pipeline_mode<synchronous>, transform_indices = @transform_11, window_bounds = array<i64: 10, 25, 16>}, {pipeline_mode = #tpu.pipeline_mode<synchronous>, transform_indices = @transform_12, window_bounds = array<i64: 16, 2>}, {pipeline_mode = #tpu.pipeline_mode<synchronous>, transform_indices = @transform_13, window_bounds = array<i64: 10, 1>}, {transform_indices = @transform_14, window_bounds = array<i64: 1, 10, 2>}]} {
    %c0 = arith.constant 0 : index
    %c0_0 = arith.constant 0 : index
    %c0_1 = arith.constant 0 : index
    %0 = vector.load %arg1[%c0, %c0_0, %c0_1] : memref<1x324x24xbf16, #tpu.memory_space<vmem>>, vector<1x324x24xbf16>
    %1 = vector.shape_cast %0 : vector<1x324x24xbf16> to vector<324x24xbf16>
    %c0_2 = arith.constant 0 : index
    %c0_3 = arith.constant 0 : index
    %2 = vector.load %arg2[%c0_2, %c0_3] : memref<24x64xbf16, #tpu.memory_space<vmem>>, vector<24x64xbf16>
    %cst = arith.constant dense<0.000000e+00> : vector<324x64xf32>
    %3 = tpu.matmul %1, %2, %cst {dimension_numbers = #tpu.dot_dimension_numbers<[1], [0], [0], [1], [0, 0, 1, 1], [], []>} : vector<324x24xbf16>, vector<24x64xbf16>, vector<324x64xf32> -> vector<324x64xf32>
    %c0_4 = arith.constant 0 : index
    %c0_5 = arith.constant 0 : index
    %4 = vector.load %arg3[%c0_4, %c0_5] : memref<1x64xf32, #tpu.memory_space<vmem>>, vector<1x64xf32>
    %5 = vector.broadcast %4 : vector<1x64xf32> to vector<324x64xf32>
    %6 = arith.addf %3, %5 : vector<324x64xf32>
    %cst_6 = arith.constant 0.000000e+00 : f32
    %7 = vector.broadcast %cst_6 : f32 to vector<324x64xf32>
    %8 = arith.maximumf %6, %7 : vector<324x64xf32>
    %9 = arith.truncf %8 : vector<324x64xf32> to vector<324x64xbf16>
    %c0_7 = arith.constant 0 : index
    %c0_8 = arith.constant 0 : index
    %10 = vector.load %arg4[%c0_7, %c0_8] : memref<416x324xbf16, #tpu.memory_space<vmem>>, vector<416x324xbf16>
    %cst_9 = arith.constant dense<0.000000e+00> : vector<416x64xf32>
    %11 = tpu.matmul %10, %9, %cst_9 {dimension_numbers = #tpu.dot_dimension_numbers<[1], [0], [0], [1], [0, 0, 1, 1], [], []>} : vector<416x324xbf16>, vector<324x64xbf16>, vector<416x64xf32> -> vector<416x64xf32>
    %12 = vector.extract_strided_slice %11 {offsets = [0, 0], sizes = [100, 64], strides = [1, 1]} : vector<416x64xf32> to vector<100x64xf32>
    %13 = vector.extract_strided_slice %11 {offsets = [104, 0], sizes = [100, 64], strides = [1, 1]} : vector<416x64xf32> to vector<100x64xf32>
    %14 = arith.maximumf %12, %13 : vector<100x64xf32>
    %15 = vector.extract_strided_slice %11 {offsets = [208, 0], sizes = [100, 64], strides = [1, 1]} : vector<416x64xf32> to vector<100x64xf32>
    %16 = arith.maximumf %14, %15 : vector<100x64xf32>
    %17 = vector.extract_strided_slice %11 {offsets = [312, 0], sizes = [100, 64], strides = [1, 1]} : vector<416x64xf32> to vector<100x64xf32>
    %18 = arith.maximumf %16, %17 : vector<100x64xf32>
    %19 = arith.truncf %18 : vector<100x64xf32> to vector<100x64xbf16>
    %c0_10 = arith.constant 0 : index
    %c0_11 = arith.constant 0 : index
    %20 = vector.load %arg5[%c0_10, %c0_11] : memref<224x100xbf16, #tpu.memory_space<vmem>>, vector<224x100xbf16>
    %cst_12 = arith.constant dense<0.000000e+00> : vector<224x64xf32>
    %21 = tpu.matmul %20, %19, %cst_12 {dimension_numbers = #tpu.dot_dimension_numbers<[1], [0], [0], [1], [0, 0, 1, 1], [], []>} : vector<224x100xbf16>, vector<100x64xbf16>, vector<224x64xf32> -> vector<224x64xf32>
    %22 = arith.truncf %21 : vector<224x64xf32> to vector<224x64xbf16>
    %23 = vector.extract_strided_slice %22 {offsets = [0, 0], sizes = [49, 64], strides = [1, 1]} : vector<224x64xbf16> to vector<49x64xbf16>
    %c0_13 = arith.constant 0 : index
    %c0_14 = arith.constant 0 : index
    %c0_15 = arith.constant 0 : index
    %24 = vector.load %arg6[%c0_13, %c0_14, %c0_15] : memref<4x64x48xbf16, #tpu.memory_space<vmem>>, vector<1x64x48xbf16>
    %25 = vector.shape_cast %24 : vector<1x64x48xbf16> to vector<64x48xbf16>
    %cst_16 = arith.constant dense<0.000000e+00> : vector<49x48xf32>
    %26 = tpu.matmul %23, %25, %cst_16 {dimension_numbers = #tpu.dot_dimension_numbers<[1], [0], [0], [1], [0, 0, 1, 1], [], []>} : vector<49x64xbf16>, vector<64x48xbf16>, vector<49x48xf32> -> vector<49x48xf32>
    %27 = vector.extract_strided_slice %22 {offsets = [56, 0], sizes = [49, 64], strides = [1, 1]} : vector<224x64xbf16> to vector<49x64xbf16>
    %c1 = arith.constant 1 : index
    %c0_17 = arith.constant 0 : index
    %c0_18 = arith.constant 0 : index
    %28 = vector.load %arg6[%c1, %c0_17, %c0_18] : memref<4x64x48xbf16, #tpu.memory_space<vmem>>, vector<1x64x48xbf16>
    %29 = vector.shape_cast %28 : vector<1x64x48xbf16> to vector<64x48xbf16>
    %cst_19 = arith.constant dense<0.000000e+00> : vector<49x48xf32>
    %30 = tpu.matmul %27, %29, %cst_19 {dimension_numbers = #tpu.dot_dimension_numbers<[1], [0], [0], [1], [0, 0, 1, 1], [], []>} : vector<49x64xbf16>, vector<64x48xbf16>, vector<49x48xf32> -> vector<49x48xf32>
    %31 = arith.addf %26, %30 : vector<49x48xf32>
    %32 = vector.extract_strided_slice %22 {offsets = [112, 0], sizes = [49, 64], strides = [1, 1]} : vector<224x64xbf16> to vector<49x64xbf16>
    %c2 = arith.constant 2 : index
    %c0_20 = arith.constant 0 : index
    %c0_21 = arith.constant 0 : index
    %33 = vector.load %arg6[%c2, %c0_20, %c0_21] : memref<4x64x48xbf16, #tpu.memory_space<vmem>>, vector<1x64x48xbf16>
    %34 = vector.shape_cast %33 : vector<1x64x48xbf16> to vector<64x48xbf16>
    %cst_22 = arith.constant dense<0.000000e+00> : vector<49x48xf32>
    %35 = tpu.matmul %32, %34, %cst_22 {dimension_numbers = #tpu.dot_dimension_numbers<[1], [0], [0], [1], [0, 0, 1, 1], [], []>} : vector<49x64xbf16>, vector<64x48xbf16>, vector<49x48xf32> -> vector<49x48xf32>
    %36 = arith.addf %31, %35 : vector<49x48xf32>
    %37 = vector.extract_strided_slice %22 {offsets = [168, 0], sizes = [49, 64], strides = [1, 1]} : vector<224x64xbf16> to vector<49x64xbf16>
    %c3 = arith.constant 3 : index
    %c0_23 = arith.constant 0 : index
    %c0_24 = arith.constant 0 : index
    %38 = vector.load %arg6[%c3, %c0_23, %c0_24] : memref<4x64x48xbf16, #tpu.memory_space<vmem>>, vector<1x64x48xbf16>
    %39 = vector.shape_cast %38 : vector<1x64x48xbf16> to vector<64x48xbf16>
    %cst_25 = arith.constant dense<0.000000e+00> : vector<49x48xf32>
    %40 = tpu.matmul %37, %39, %cst_25 {dimension_numbers = #tpu.dot_dimension_numbers<[1], [0], [0], [1], [0, 0, 1, 1], [], []>} : vector<49x64xbf16>, vector<64x48xbf16>, vector<49x48xf32> -> vector<49x48xf32>
    %41 = arith.addf %36, %40 : vector<49x48xf32>
    %42 = vector.extract_strided_slice %41 {offsets = [0, 0], sizes = [49, 32], strides = [1, 1]} : vector<49x48xf32> to vector<49x32xf32>
    %c0_26 = arith.constant 0 : index
    %c0_27 = arith.constant 0 : index
    %43 = vector.load %arg7[%c0_26, %c0_27] : memref<1x32xf32, #tpu.memory_space<vmem>>, vector<1x32xf32>
    %44 = vector.broadcast %43 : vector<1x32xf32> to vector<49x32xf32>
    %45 = arith.addf %42, %44 : vector<49x32xf32>
    %cst_28 = arith.constant 0.000000e+00 : f32
    %46 = vector.broadcast %cst_28 : f32 to vector<49x32xf32>
    %47 = arith.maximumf %45, %46 : vector<49x32xf32>
    %48 = arith.truncf %47 : vector<49x32xf32> to vector<49x32xbf16>
    %49 = vector.extract_strided_slice %41 {offsets = [0, 32], sizes = [49, 16], strides = [1, 1]} : vector<49x48xf32> to vector<49x16xf32>
    %c0_29 = arith.constant 0 : index
    %c0_30 = arith.constant 0 : index
    %50 = vector.load %arg8[%c0_29, %c0_30] : memref<1x16xf32, #tpu.memory_space<vmem>>, vector<1x16xf32>
    %51 = vector.broadcast %50 : vector<1x16xf32> to vector<49x16xf32>
    %52 = arith.addf %49, %51 : vector<49x16xf32>
    %c0_31 = arith.constant 0 : index
    %c0_32 = arith.constant 0 : index
    %53 = vector.load %arg9[%c0_31, %c0_32] : memref<128x49xbf16, #tpu.memory_space<vmem>>, vector<128x49xbf16>
    %cst_33 = arith.constant dense<0.000000e+00> : vector<128x32xf32>
    %54 = tpu.matmul %53, %48, %cst_33 {dimension_numbers = #tpu.dot_dimension_numbers<[1], [0], [0], [1], [0, 0, 1, 1], [], []>} : vector<128x49xbf16>, vector<49x32xbf16>, vector<128x32xf32> -> vector<128x32xf32>
    %55 = arith.truncf %54 : vector<128x32xf32> to vector<128x32xbf16>
    %56 = vector.extract_strided_slice %55 {offsets = [0, 0], sizes = [25, 32], strides = [1, 1]} : vector<128x32xbf16> to vector<25x32xbf16>
    %c0_34 = arith.constant 0 : index
    %c0_35 = arith.constant 0 : index
    %c0_36 = arith.constant 0 : index
    %57 = vector.load %arg10[%c0_34, %c0_35, %c0_36] : memref<4x32x16xbf16, #tpu.memory_space<vmem>>, vector<1x32x16xbf16>
    %58 = vector.shape_cast %57 : vector<1x32x16xbf16> to vector<32x16xbf16>
    %cst_37 = arith.constant dense<0.000000e+00> : vector<25x16xf32>
    %59 = tpu.matmul %56, %58, %cst_37 {dimension_numbers = #tpu.dot_dimension_numbers<[1], [0], [0], [1], [0, 0, 1, 1], [], []>} : vector<25x32xbf16>, vector<32x16xbf16>, vector<25x16xf32> -> vector<25x16xf32>
    %60 = vector.extract_strided_slice %55 {offsets = [32, 0], sizes = [25, 32], strides = [1, 1]} : vector<128x32xbf16> to vector<25x32xbf16>
    %c1_38 = arith.constant 1 : index
    %c0_39 = arith.constant 0 : index
    %c0_40 = arith.constant 0 : index
    %61 = vector.load %arg10[%c1_38, %c0_39, %c0_40] : memref<4x32x16xbf16, #tpu.memory_space<vmem>>, vector<1x32x16xbf16>
    %62 = vector.shape_cast %61 : vector<1x32x16xbf16> to vector<32x16xbf16>
    %cst_41 = arith.constant dense<0.000000e+00> : vector<25x16xf32>
    %63 = tpu.matmul %60, %62, %cst_41 {dimension_numbers = #tpu.dot_dimension_numbers<[1], [0], [0], [1], [0, 0, 1, 1], [], []>} : vector<25x32xbf16>, vector<32x16xbf16>, vector<25x16xf32> -> vector<25x16xf32>
    %64 = arith.addf %59, %63 : vector<25x16xf32>
    %65 = vector.extract_strided_slice %55 {offsets = [64, 0], sizes = [25, 32], strides = [1, 1]} : vector<128x32xbf16> to vector<25x32xbf16>
    %c2_42 = arith.constant 2 : index
    %c0_43 = arith.constant 0 : index
    %c0_44 = arith.constant 0 : index
    %66 = vector.load %arg10[%c2_42, %c0_43, %c0_44] : memref<4x32x16xbf16, #tpu.memory_space<vmem>>, vector<1x32x16xbf16>
    %67 = vector.shape_cast %66 : vector<1x32x16xbf16> to vector<32x16xbf16>
    %cst_45 = arith.constant dense<0.000000e+00> : vector<25x16xf32>
    %68 = tpu.matmul %65, %67, %cst_45 {dimension_numbers = #tpu.dot_dimension_numbers<[1], [0], [0], [1], [0, 0, 1, 1], [], []>} : vector<25x32xbf16>, vector<32x16xbf16>, vector<25x16xf32> -> vector<25x16xf32>
    %69 = arith.addf %64, %68 : vector<25x16xf32>
    %70 = vector.extract_strided_slice %55 {offsets = [96, 0], sizes = [25, 32], strides = [1, 1]} : vector<128x32xbf16> to vector<25x32xbf16>
    %c3_46 = arith.constant 3 : index
    %c0_47 = arith.constant 0 : index
    %c0_48 = arith.constant 0 : index
    %71 = vector.load %arg10[%c3_46, %c0_47, %c0_48] : memref<4x32x16xbf16, #tpu.memory_space<vmem>>, vector<1x32x16xbf16>
    %72 = vector.shape_cast %71 : vector<1x32x16xbf16> to vector<32x16xbf16>
    %cst_49 = arith.constant dense<0.000000e+00> : vector<25x16xf32>
    %73 = tpu.matmul %70, %72, %cst_49 {dimension_numbers = #tpu.dot_dimension_numbers<[1], [0], [0], [1], [0, 0, 1, 1], [], []>} : vector<25x32xbf16>, vector<32x16xbf16>, vector<25x16xf32> -> vector<25x16xf32>
    %74 = arith.addf %69, %73 : vector<25x16xf32>
    %c0_50 = arith.constant 0 : index
    %c0_51 = arith.constant 0 : index
    %75 = vector.load %arg11[%c0_50, %c0_51] : memref<25x49xbf16, #tpu.memory_space<vmem>>, vector<25x49xbf16>
    %76 = arith.truncf %52 : vector<49x16xf32> to vector<49x16xbf16>
    %cst_52 = arith.constant dense<0.000000e+00> : vector<25x16xf32>
    %77 = tpu.matmul %75, %76, %cst_52 {dimension_numbers = #tpu.dot_dimension_numbers<[1], [0], [0], [1], [0, 0, 1, 1], [], []>} : vector<25x49xbf16>, vector<49x16xbf16>, vector<25x16xf32> -> vector<25x16xf32>
    %78 = arith.addf %74, %77 : vector<25x16xf32>
    %cst_53 = arith.constant 0.000000e+00 : f32
    %79 = vector.broadcast %cst_53 : f32 to vector<25x16xf32>
    %80 = arith.maximumf %78, %79 : vector<25x16xf32>
    %c0_54 = arith.constant 0 : index
    %c0_55 = arith.constant 0 : index
    %c0_56 = arith.constant 0 : index
    %81 = vector.load %arg12[%c0_54, %c0_55, %c0_56] : memref<10x25x16xf32, #tpu.memory_space<vmem>>, vector<1x25x16xf32>
    %82 = vector.shape_cast %81 : vector<1x25x16xf32> to vector<25x16xf32>
    %83 = arith.mulf %80, %82 : vector<25x16xf32>
    %cst_57 = arith.constant dense<0.000000e+00> : vector<16xf32>
    %84 = vector.multi_reduction <add>, %83, %cst_57 [0] : vector<25x16xf32> to vector<16xf32>
    %85 = vector.shape_cast %84 : vector<16xf32> to vector<1x16xf32>
    %c1_58 = arith.constant 1 : index
    %c0_59 = arith.constant 0 : index
    %c0_60 = arith.constant 0 : index
    %86 = vector.load %arg12[%c1_58, %c0_59, %c0_60] : memref<10x25x16xf32, #tpu.memory_space<vmem>>, vector<1x25x16xf32>
    %87 = vector.shape_cast %86 : vector<1x25x16xf32> to vector<25x16xf32>
    %88 = arith.mulf %80, %87 : vector<25x16xf32>
    %cst_61 = arith.constant dense<0.000000e+00> : vector<16xf32>
    %89 = vector.multi_reduction <add>, %88, %cst_61 [0] : vector<25x16xf32> to vector<16xf32>
    %90 = vector.shape_cast %89 : vector<16xf32> to vector<1x16xf32>
    %c2_62 = arith.constant 2 : index
    %c0_63 = arith.constant 0 : index
    %c0_64 = arith.constant 0 : index
    %91 = vector.load %arg12[%c2_62, %c0_63, %c0_64] : memref<10x25x16xf32, #tpu.memory_space<vmem>>, vector<1x25x16xf32>
    %92 = vector.shape_cast %91 : vector<1x25x16xf32> to vector<25x16xf32>
    %93 = arith.mulf %80, %92 : vector<25x16xf32>
    %cst_65 = arith.constant dense<0.000000e+00> : vector<16xf32>
    %94 = vector.multi_reduction <add>, %93, %cst_65 [0] : vector<25x16xf32> to vector<16xf32>
    %95 = vector.shape_cast %94 : vector<16xf32> to vector<1x16xf32>
    %c3_66 = arith.constant 3 : index
    %c0_67 = arith.constant 0 : index
    %c0_68 = arith.constant 0 : index
    %96 = vector.load %arg12[%c3_66, %c0_67, %c0_68] : memref<10x25x16xf32, #tpu.memory_space<vmem>>, vector<1x25x16xf32>
    %97 = vector.shape_cast %96 : vector<1x25x16xf32> to vector<25x16xf32>
    %98 = arith.mulf %80, %97 : vector<25x16xf32>
    %cst_69 = arith.constant dense<0.000000e+00> : vector<16xf32>
    %99 = vector.multi_reduction <add>, %98, %cst_69 [0] : vector<25x16xf32> to vector<16xf32>
    %100 = vector.shape_cast %99 : vector<16xf32> to vector<1x16xf32>
    %c4 = arith.constant 4 : index
    %c0_70 = arith.constant 0 : index
    %c0_71 = arith.constant 0 : index
    %101 = vector.load %arg12[%c4, %c0_70, %c0_71] : memref<10x25x16xf32, #tpu.memory_space<vmem>>, vector<1x25x16xf32>
    %102 = vector.shape_cast %101 : vector<1x25x16xf32> to vector<25x16xf32>
    %103 = arith.mulf %80, %102 : vector<25x16xf32>
    %cst_72 = arith.constant dense<0.000000e+00> : vector<16xf32>
    %104 = vector.multi_reduction <add>, %103, %cst_72 [0] : vector<25x16xf32> to vector<16xf32>
    %105 = vector.shape_cast %104 : vector<16xf32> to vector<1x16xf32>
    %c5 = arith.constant 5 : index
    %c0_73 = arith.constant 0 : index
    %c0_74 = arith.constant 0 : index
    %106 = vector.load %arg12[%c5, %c0_73, %c0_74] : memref<10x25x16xf32, #tpu.memory_space<vmem>>, vector<1x25x16xf32>
    %107 = vector.shape_cast %106 : vector<1x25x16xf32> to vector<25x16xf32>
    %108 = arith.mulf %80, %107 : vector<25x16xf32>
    %cst_75 = arith.constant dense<0.000000e+00> : vector<16xf32>
    %109 = vector.multi_reduction <add>, %108, %cst_75 [0] : vector<25x16xf32> to vector<16xf32>
    %110 = vector.shape_cast %109 : vector<16xf32> to vector<1x16xf32>
    %c6 = arith.constant 6 : index
    %c0_76 = arith.constant 0 : index
    %c0_77 = arith.constant 0 : index
    %111 = vector.load %arg12[%c6, %c0_76, %c0_77] : memref<10x25x16xf32, #tpu.memory_space<vmem>>, vector<1x25x16xf32>
    %112 = vector.shape_cast %111 : vector<1x25x16xf32> to vector<25x16xf32>
    %113 = arith.mulf %80, %112 : vector<25x16xf32>
    %cst_78 = arith.constant dense<0.000000e+00> : vector<16xf32>
    %114 = vector.multi_reduction <add>, %113, %cst_78 [0] : vector<25x16xf32> to vector<16xf32>
    %115 = vector.shape_cast %114 : vector<16xf32> to vector<1x16xf32>
    %c7 = arith.constant 7 : index
    %c0_79 = arith.constant 0 : index
    %c0_80 = arith.constant 0 : index
    %116 = vector.load %arg12[%c7, %c0_79, %c0_80] : memref<10x25x16xf32, #tpu.memory_space<vmem>>, vector<1x25x16xf32>
    %117 = vector.shape_cast %116 : vector<1x25x16xf32> to vector<25x16xf32>
    %118 = arith.mulf %80, %117 : vector<25x16xf32>
    %cst_81 = arith.constant dense<0.000000e+00> : vector<16xf32>
    %119 = vector.multi_reduction <add>, %118, %cst_81 [0] : vector<25x16xf32> to vector<16xf32>
    %120 = vector.shape_cast %119 : vector<16xf32> to vector<1x16xf32>
    %c8 = arith.constant 8 : index
    %c0_82 = arith.constant 0 : index
    %c0_83 = arith.constant 0 : index
    %121 = vector.load %arg12[%c8, %c0_82, %c0_83] : memref<10x25x16xf32, #tpu.memory_space<vmem>>, vector<1x25x16xf32>
    %122 = vector.shape_cast %121 : vector<1x25x16xf32> to vector<25x16xf32>
    %123 = arith.mulf %80, %122 : vector<25x16xf32>
    %cst_84 = arith.constant dense<0.000000e+00> : vector<16xf32>
    %124 = vector.multi_reduction <add>, %123, %cst_84 [0] : vector<25x16xf32> to vector<16xf32>
    %125 = vector.shape_cast %124 : vector<16xf32> to vector<1x16xf32>
    %c9 = arith.constant 9 : index
    %c0_85 = arith.constant 0 : index
    %c0_86 = arith.constant 0 : index
    %126 = vector.load %arg12[%c9, %c0_85, %c0_86] : memref<10x25x16xf32, #tpu.memory_space<vmem>>, vector<1x25x16xf32>
    %127 = vector.shape_cast %126 : vector<1x25x16xf32> to vector<25x16xf32>
    %128 = arith.mulf %80, %127 : vector<25x16xf32>
    %cst_87 = arith.constant dense<0.000000e+00> : vector<16xf32>
    %129 = vector.multi_reduction <add>, %128, %cst_87 [0] : vector<25x16xf32> to vector<16xf32>
    %130 = vector.shape_cast %129 : vector<16xf32> to vector<1x16xf32>
    %131 = tpu.concatenate %85, %90, %95, %100, %105, %110, %115, %120, %125, %130 in 0 : vector<1x16xf32>, vector<1x16xf32>, vector<1x16xf32>, vector<1x16xf32>, vector<1x16xf32>, vector<1x16xf32>, vector<1x16xf32>, vector<1x16xf32>, vector<1x16xf32>, vector<1x16xf32> -> vector<10x16xf32>
    %c0_88 = arith.constant 0 : index
    %c0_89 = arith.constant 0 : index
    %132 = vector.load %arg13[%c0_88, %c0_89] : memref<16x2xf32, #tpu.memory_space<vmem>>, vector<16x2xf32>
    %cst_90 = arith.constant dense<0.000000e+00> : vector<10x2xf32>
    %133 = tpu.matmul %131, %132, %cst_90 {dimension_numbers = #tpu.dot_dimension_numbers<[1], [0], [0], [1], [0, 0, 1, 1], [], []>} : vector<10x16xf32>, vector<16x2xf32>, vector<10x2xf32> -> vector<10x2xf32>
    %c0_91 = arith.constant 0 : index
    %c0_92 = arith.constant 0 : index
    %134 = vector.load %arg14[%c0_91, %c0_92] : memref<10x1xf32, #tpu.memory_space<vmem>>, vector<10x1xf32>
    %135 = vector.broadcast %134 : vector<10x1xf32> to vector<10x2xf32>
    %136 = arith.addf %133, %135 : vector<10x2xf32>
    %c0_93 = arith.constant 0 : index
    %c0_94 = arith.constant 0 : index
    %c0_95 = arith.constant 0 : index
    %137 = vector.load %arg15[%c0_93, %c0_94, %c0_95] : memref<1x10x2xf32, #tpu.memory_space<vmem>>, vector<1x10x2xf32>
    %138 = vector.shape_cast %137 : vector<1x10x2xf32> to vector<10x2xf32>
    %139 = vector.shape_cast %136 : vector<10x2xf32> to vector<1x10x2xf32>
    tpu.vector_store %arg15[%c0_93, %c0_94, %c0_95], %139 {strides = array<i32>} : memref<1x10x2xf32, #tpu.memory_space<vmem>>, vector<1x10x2xf32>,
    return
  }
  func.func @transform_0(%arg0: i32) -> (i32, i32, i32) {
    %c0_i32 = arith.constant 0 : i32
    %c0_i32_0 = arith.constant 0 : i32
    %c0_i32_1 = arith.constant 0 : i32
    return %arg0, %c0_i32, %c0_i32_0 : i32, i32, i32
  }
  func.func @transform_1(%arg0: i32) -> (i32, i32) {
    %c0_i32 = arith.constant 0 : i32
    %c0_i32_0 = arith.constant 0 : i32
    %c0_i32_1 = arith.constant 0 : i32
    return %c0_i32, %c0_i32_0 : i32, i32
  }
  func.func @transform_2(%arg0: i32) -> (i32, i32) {
    %c0_i32 = arith.constant 0 : i32
    %c0_i32_0 = arith.constant 0 : i32
    %c0_i32_1 = arith.constant 0 : i32
    return %c0_i32, %c0_i32_0 : i32, i32
  }
  func.func @transform_3(%arg0: i32) -> (i32, i32) {
    %c0_i32 = arith.constant 0 : i32
    %c0_i32_0 = arith.constant 0 : i32
    %c0_i32_1 = arith.constant 0 : i32
    return %c0_i32, %c0_i32_0 : i32, i32
  }
  func.func @transform_4(%arg0: i32) -> (i32, i32) {
    %c0_i32 = arith.constant 0 : i32
    %c0_i32_0 = arith.constant 0 : i32
    %c0_i32_1 = arith.constant 0 : i32
    return %c0_i32, %c0_i32_0 : i32, i32
  }
  func.func @transform_5(%arg0: i32) -> (i32, i32, i32) {
    %c0_i32 = arith.constant 0 : i32
    %c0_i32_0 = arith.constant 0 : i32
    %c0_i32_1 = arith.constant 0 : i32
    %c0_i32_2 = arith.constant 0 : i32
    return %c0_i32, %c0_i32_0, %c0_i32_1 : i32, i32, i32
  }
  func.func @transform_6(%arg0: i32) -> (i32, i32) {
    %c0_i32 = arith.constant 0 : i32
    %c0_i32_0 = arith.constant 0 : i32
    %c0_i32_1 = arith.constant 0 : i32
    return %c0_i32, %c0_i32_0 : i32, i32
  }
  func.func @transform_7(%arg0: i32) -> (i32, i32) {
    %c0_i32 = arith.constant 0 : i32
    %c0_i32_0 = arith.constant 0 : i32
    %c0_i32_1 = arith.constant 0 : i32
    return %c0_i32, %c0_i32_0 : i32, i32
  }
  func.func @transform_8(%arg0: i32) -> (i32, i32) {
    %c0_i32 = arith.constant 0 : i32
    %c0_i32_0 = arith.constant 0 : i32
    %c0_i32_1 = arith.constant 0 : i32
    return %c0_i32, %c0_i32_0 : i32, i32
  }
  func.func @transform_9(%arg0: i32) -> (i32, i32, i32) {
    %c0_i32 = arith.constant 0 : i32
    %c0_i32_0 = arith.constant 0 : i32
    %c0_i32_1 = arith.constant 0 : i32
    %c0_i32_2 = arith.constant 0 : i32
    return %c0_i32, %c0_i32_0, %c0_i32_1 : i32, i32, i32
  }
  func.func @transform_10(%arg0: i32) -> (i32, i32) {
    %c0_i32 = arith.constant 0 : i32
    %c0_i32_0 = arith.constant 0 : i32
    %c0_i32_1 = arith.constant 0 : i32
    return %c0_i32, %c0_i32_0 : i32, i32
  }
  func.func @transform_11(%arg0: i32) -> (i32, i32, i32) {
    %c0_i32 = arith.constant 0 : i32
    %c0_i32_0 = arith.constant 0 : i32
    %c0_i32_1 = arith.constant 0 : i32
    %c0_i32_2 = arith.constant 0 : i32
    return %c0_i32, %c0_i32_0, %c0_i32_1 : i32, i32, i32
  }
  func.func @transform_12(%arg0: i32) -> (i32, i32) {
    %c0_i32 = arith.constant 0 : i32
    %c0_i32_0 = arith.constant 0 : i32
    %c0_i32_1 = arith.constant 0 : i32
    return %c0_i32, %c0_i32_0 : i32, i32
  }
  func.func @transform_13(%arg0: i32) -> (i32, i32) {
    %c0_i32 = arith.constant 0 : i32
    %c0_i32_0 = arith.constant 0 : i32
    %c0_i32_1 = arith.constant 0 : i32
    return %c0_i32, %c0_i32_0 : i32, i32
  }
  func.func @transform_14(%arg0: i32) -> (i32, i32, i32) {
    %c0_i32 = arith.constant 0 : i32
    %c0_i32_0 = arith.constant 0 : i32
    %c0_i32_1 = arith.constant 0 : i32
    return %arg0, %c0_i32, %c0_i32_0 : i32, i32, i32
  }
}

</mosaic_0001>

<llo_original>
// kernel: tile.23
$region0: #{tile.23}
  #allocation0 [shape = 's32[1]{0}', space=sflag, size = 0x4, scoped, tag = 'scoped memory for tile.23']
  %s0 = inlined_call_operand.vmem [shape: f32[32], index: 0, kind: input, shape index: {}]
  %s1 = inlined_call_operand.vmem [shape: f32[2,32], index: 1, kind: output, shape index: {}]
  // Predicated region
  $region2: #{tile.23} parent=0 // pred_check
    _
  $region3: #{tile.23} parent=0 // pred_check_branch
    %3 = sbr.rel (0) target = $region5
  $region4: #{tile.23} parent=0 // pred_region
    _
  $region5: #{tile.23} parent=0 // pred_fallthru
    _
  %v4 = vld [vmem:[%s0] ss:$0 sm:$0xff]
  %5 = vst [vmem:[%s1] sm:$0x3] %v4

// kernel: tile.24
$region0: #{tile.24}
  %s0 = inlined_call_operand.vmem [shape: f32[2,32], index: 0, kind: input, shape index: {}]
  %s1 = inlined_call_operand.vmem [shape: f32[1,64], index: 1, kind: output, shape index: {}]
  $region1: #{tile.24} parent=0
    #allocation0 [shape = 'u8[4096]{0}', space=vmem, size = 0x1000, scoped, tag = 'scoped mem for output reshape']
    #allocation1 [shape = 'u8[4096]{0}', space=vmem, size = 0x1000, scoped, tag = 'scoped mem for input reshape']
    %s3 = sshllo.u32 0, 2
    %v4 = vld [vmem:[%s0] sm:%s3]
    %5 = vst [vmem:[#allocation1] sm:%s3] %v4
    %v6 = vld [vmem:[#allocation1] sm:$0x1]
    %vm7 = vcmask 261120
    %8 = vst.msk [vmem:[#allocation0] sm:$0x1] %vm7, %v6
    %s9 = scalar_lea.vmem [#allocation1], 1
    %v10 = vld [vmem:[%s9] sm:$0x1]
    %11 = vrot.lane.b32.xlu0 %v10, 32
    %v12 = vpop.permute.xlu0 %11
    %vm13 = vcmask 523520
    %14 = vst.msk [vmem:[#allocation0] sm:$0x1] %vm13, %v12
    %s16 = sshllo.u32 0, 1
    %v18 = vld [vmem:[#allocation0] sm:%s16]
    %s19 = sshllo.u32 0, 1
    %20 = vst [vmem:[%s1] sm:%s19] %v18

// kernel: tile.28
$region0: #{tile.28}
  #allocation0 [shape = 's32[1]{0}', space=sflag, size = 0x4, scoped, tag = 'scoped memory for tile.28']
  %s0 = inlined_call_operand.vmem [shape: f32[16], index: 0, kind: input, shape index: {}]
  %s1 = inlined_call_operand.vmem [shape: f32[2,16], index: 1, kind: output, shape index: {}]
  // Predicated region
  $region2: #{tile.28} parent=0 // pred_check
    _
  $region3: #{tile.28} parent=0 // pred_check_branch
    %3 = sbr.rel (0) target = $region5
  $region4: #{tile.28} parent=0 // pred_region
    _
  $region5: #{tile.28} parent=0 // pred_fallthru
    _
  %v4 = vld [vmem:[%s0] ss:$0 sm:$0xff]
  %5 = vst [vmem:[%s1] sm:$0x3] %v4

// kernel: tile.29
$region0: #{tile.29}
  %s0 = inlined_call_operand.vmem [shape: f32[2,16], index: 0, kind: input, shape index: {}]
  %s1 = inlined_call_operand.vmem [shape: f32[1,32], index: 1, kind: output, shape index: {}]
  $region1: #{tile.29} parent=0
    #allocation0 [shape = 'u8[4096]{0}', space=vmem, size = 0x1000, scoped, tag = 'scoped mem for output reshape']
    #allocation1 [shape = 'u8[4096]{0}', space=vmem, size = 0x1000, scoped, tag = 'scoped mem for input reshape']
    %s3 = sshllo.u32 0, 2
    %v4 = vld [vmem:[%s0] sm:%s3]
    %5 = vst [vmem:[#allocation1] sm:%s3] %v4
    %v6 = vld [vmem:[#allocation1] sm:$0x1]
    %vm7 = vcmask 130048
    %8 = vst.msk [vmem:[#allocation0] sm:$0x1] %vm7, %v6
    %s9 = scalar_lea.vmem [#allocation1], 1
    %v10 = vld [vmem:[%s9] sm:$0x1]
    %11 = vrot.lane.b32.xlu0 %v10, 16
    %v12 = vpop.permute.xlu0 %11
    %vm13 = vcmask 261248
    %14 = vst.msk [vmem:[#allocation0] sm:$0x1] %vm13, %v12
    %s16 = sshllo.u32 0, 1
    %v18 = vld [vmem:[#allocation0] sm:%s16]
    %s19 = sshllo.u32 0, 1
    %20 = vst [vmem:[%s1] sm:%s19] %v18

// kernel: tile.33
$region0: #{tile.33}
  #allocation0 [shape = 's32[1]{0}', space=sflag, size = 0x4, scoped, tag = 'scoped memory for tile.33']
  %s0 = inlined_call_operand.vmem [shape: f32[8], index: 0, kind: input, shape index: {}]
  %s1 = inlined_call_operand.vmem [shape: f32[2,8], index: 1, kind: output, shape index: {}]
  // Predicated region
  $region2: #{tile.33} parent=0 // pred_check
    _
  $region3: #{tile.33} parent=0 // pred_check_branch
    %3 = sbr.rel (0) target = $region5
  $region4: #{tile.33} parent=0 // pred_region
    _
  $region5: #{tile.33} parent=0 // pred_fallthru
    _
  %v4 = vld [vmem:[%s0] ss:$0 sm:$0xff]
  %5 = vst [vmem:[%s1] sm:$0x3] %v4

// kernel: tile.34
$region0: #{tile.34}
  %s0 = inlined_call_operand.vmem [shape: f32[2,8], index: 0, kind: input, shape index: {}]
  %s1 = inlined_call_operand.vmem [shape: f32[1,16], index: 1, kind: output, shape index: {}]
  $region1: #{tile.34} parent=0
    #allocation0 [shape = 'u8[4096]{0}', space=vmem, size = 0x1000, scoped, tag = 'scoped mem for output reshape']
    #allocation1 [shape = 'u8[4096]{0}', space=vmem, size = 0x1000, scoped, tag = 'scoped mem for input reshape']
    %s3 = sshllo.u32 0, 2
    %v4 = vld [vmem:[%s0] sm:%s3]
    %5 = vst [vmem:[#allocation1] sm:%s3] %v4
    %v6 = vld [vmem:[#allocation1] sm:$0x1]
    %vm7 = vcmask 64512
    %8 = vst.msk [vmem:[#allocation0] sm:$0x1] %vm7, %v6
    %s9 = scalar_lea.vmem [#allocation1], 1
    %v10 = vld [vmem:[%s9] sm:$0x1]
    %11 = vrot.lane.b32.xlu0 %v10, 8
    %v12 = vpop.permute.xlu0 %11
    %vm13 = vcmask 130112
    %14 = vst.msk [vmem:[#allocation0] sm:$0x1] %vm13, %v12
    %s16 = sshllo.u32 0, 1
    %v18 = vld [vmem:[#allocation0] sm:%s16]
    %s19 = sshllo.u32 0, 1
    %20 = vst [vmem:[%s1] sm:%s19] %v18

// kernel: single_residual_forward.1
$region0: #{single_residual_forward.1}
  #allocation0 [shape = 'u32[]', space=smem, size = 0x4, offset = 0x4, fixed_abs, tag = 'smem constant byte address 0x4 - core index']
  #allocation1 [shape = 'u32[144,128]{1,0:T(1,128)}', space=vmem, size = 0x12000, scoped, tag = 'internal scratch']
  %s0 = inlined_call_operand.vmem [shape: bf16[1,324,24], index: 0, kind: input, shape index: {}]
  %s1 = inlined_call_operand.vmem [shape: bf16[24,64], index: 1, kind: input, shape index: {}]
  %s2 = inlined_call_operand.vmem [shape: f32[1,64], index: 2, kind: input, shape index: {}]
  %s3 = inlined_call_operand.vmem [shape: bf16[416,324], index: 3, kind: input, shape index: {}]
  %s4 = inlined_call_operand.vmem [shape: bf16[224,100], index: 4, kind: input, shape index: {}]
  %s5 = inlined_call_operand.vmem [shape: bf16[4,64,48], index: 5, kind: input, shape index: {}]
  %s6 = inlined_call_operand.vmem [shape: f32[1,32], index: 6, kind: input, shape index: {}]
  %s7 = inlined_call_operand.vmem [shape: f32[1,16], index: 7, kind: input, shape index: {}]
  %s8 = inlined_call_operand.vmem [shape: bf16[128,49], index: 8, kind: input, shape index: {}]
  %s9 = inlined_call_operand.vmem [shape: bf16[4,32,16], index: 9, kind: input, shape index: {}]
  %s10 = inlined_call_operand.vmem [shape: bf16[25,49], index: 10, kind: input, shape index: {}]
  %s11 = inlined_call_operand.vmem [shape: f32[10,25,16], index: 11, kind: input, shape index: {}]
  %s12 = inlined_call_operand.vmem [shape: f32[16,2], index: 12, kind: input, shape index: {}]
  %s13 = inlined_call_operand.vmem [shape: f32[10,1], index: 13, kind: input, shape index: {}]
  %s14 = inlined_call_operand.vmem [shape: f32[1,10,2], index: 14, kind: output, shape index: {}]
  %s15 = sld [smem:[#allocation0]]
  $region66: #{single_residual_forward.1} parent=0
    _
  %s17 = ssub.s32 1, %s15
  %s18 = scalar_select 0, %s17, %s15
  // Predicated region
  $region2: #{single_residual_forward.1} parent=0 // pred_check
    _
  $region3: #{single_residual_forward.1} parent=0 // pred_check_branch
    %20 = sbr.rel (0) target = $region5
  $region4: #{single_residual_forward.1} parent=0 // pred_region
    _
  $region5: #{single_residual_forward.1} parent=0 // pred_fallthru
    _
  // Predicated region
  $region6: #{single_residual_forward.1} parent=0 // pred_check
    _
  $region7: #{single_residual_forward.1} parent=0 // pred_check_branch
    %22 = sbr.rel (0) target = $region9
  $region8: #{single_residual_forward.1} parent=0 // pred_region
    _
  $region9: #{single_residual_forward.1} parent=0 // pred_fallthru
    _
  // Predicated region
  $region10: #{single_residual_forward.1} parent=0 // pred_check
    _
  $region11: #{single_residual_forward.1} parent=0 // pred_check_branch
    %24 = sbr.rel (0) target = $region13
  $region12: #{single_residual_forward.1} parent=0 // pred_region
    _
  $region13: #{single_residual_forward.1} parent=0 // pred_fallthru
    _
  // Predicated region
  $region14: #{single_residual_forward.1} parent=0 // pred_check
    _
  $region15: #{single_residual_forward.1} parent=0 // pred_check_branch
    %26 = sbr.rel (0) target = $region17
  $region16: #{single_residual_forward.1} parent=0 // pred_region
    _
  $region17: #{single_residual_forward.1} parent=0 // pred_fallthru
    _
  // Predicated region
  $region18: #{single_residual_forward.1} parent=0 // pred_check
    _
  $region19: #{single_residual_forward.1} parent=0 // pred_check_branch
    %28 = sbr.rel (0) target = $region21
  $region20: #{single_residual_forward.1} parent=0 // pred_region
    _
  $region21: #{single_residual_forward.1} parent=0 // pred_fallthru
    _
  // Predicated region
  $region22: #{single_residual_forward.1} parent=0 // pred_check
    _
  $region23: #{single_residual_forward.1} parent=0 // pred_check_branch
    %30 = sbr.rel (0) target = $region25
  $region24: #{single_residual_forward.1} parent=0 // pred_region
    _
  $region25: #{single_residual_forward.1} parent=0 // pred_fallthru
    _
  // Predicated region
  $region26: #{single_residual_forward.1} parent=0 // pred_check
    _
  $region27: #{single_residual_forward.1} parent=0 // pred_check_branch
    %32 = sbr.rel (0) target = $region29
  $region28: #{single_residual_forward.1} parent=0 // pred_region
    _
  $region29: #{single_residual_forward.1} parent=0 // pred_fallthru
    _
  // Predicated region
  $region30: #{single_residual_forward.1} parent=0 // pred_check
    _
  $region31: #{single_residual_forward.1} parent=0 // pred_check_branch
    %34 = sbr.rel (0) target = $region33
  $region32: #{single_residual_forward.1} parent=0 // pred_region
    _
  $region33: #{single_residual_forward.1} parent=0 // pred_fallthru
    _
  // Predicated region
  $region34: #{single_residual_forward.1} parent=0 // pred_check
    _
  $region35: #{single_residual_forward.1} parent=0 // pred_check_branch
    %36 = sbr.rel (0) target = $region37
  $region36: #{single_residual_forward.1} parent=0 // pred_region
    _
  $region37: #{single_residual_forward.1} parent=0 // pred_fallthru
    _
  // Predicated region
  $region38: #{single_residual_forward.1} parent=0 // pred_check
    _
  $region39: #{single_residual_forward.1} parent=0 // pred_check_branch
    %38 = sbr.rel (0) target = $region41
  $region40: #{single_residual_forward.1} parent=0 // pred_region
    _
  $region41: #{single_residual_forward.1} parent=0 // pred_fallthru
    _
  // Predicated region
  $region42: #{single_residual_forward.1} parent=0 // pred_check
    _
  $region43: #{single_residual_forward.1} parent=0 // pred_check_branch
    %40 = sbr.rel (0) target = $region45
  $region44: #{single_residual_forward.1} parent=0 // pred_region
    _
  $region45: #{single_residual_forward.1} parent=0 // pred_fallthru
    _
  // Predicated region
  $region46: #{single_residual_forward.1} parent=0 // pred_check
    _
  $region47: #{single_residual_forward.1} parent=0 // pred_check_branch
    %42 = sbr.rel (0) target = $region49
  $region48: #{single_residual_forward.1} parent=0 // pred_region
    _
  $region49: #{single_residual_forward.1} parent=0 // pred_fallthru
    _
  // Predicated region
  $region50: #{single_residual_forward.1} parent=0 // pred_check
    _
  $region51: #{single_residual_forward.1} parent=0 // pred_check_branch
    %44 = sbr.rel (0) target = $region53
  $region52: #{single_residual_forward.1} parent=0 // pred_region
    _
  $region53: #{single_residual_forward.1} parent=0 // pred_fallthru
    _
  // Predicated region
  $region54: #{single_residual_forward.1} parent=0 // pred_check
    _
  $region55: #{single_residual_forward.1} parent=0 // pred_check_branch
    %46 = sbr.rel (0) target = $region57
  $region56: #{single_residual_forward.1} parent=0 // pred_region
    _
  $region57: #{single_residual_forward.1} parent=0 // pred_fallthru
    _
  %v48 = vld [vmem:[%s0] sm:$0xf]
  %v49 = vld [vmem:[%s0 + $0x4] sm:$0xf]
  %v50 = vld [vmem:[%s0 + $0x8] sm:$0xf]
  %v51 = vld [vmem:[%s0 + $0xc] sm:$0xf]
  %v52 = vld [vmem:[%s0 + $0x10] sm:$0xf]
  %v53 = vld [vmem:[%s0 + $0x14] sm:$0xf]
  %v54 = vld [vmem:[%s0 + $0x18] sm:$0xf]
  %v55 = vld [vmem:[%s0 + $0x1c] sm:$0xf]
  %v56 = vld [vmem:[%s0 + $0x20] sm:$0xf]
  %v57 = vld [vmem:[%s0 + $0x24] sm:$0xf]
  %v58 = vld [vmem:[%s0 + $0x28] sm:$0xf]
  %v59 = vld [vmem:[%s0 + $0x2c] sm:$0xf]
  %v60 = vld [vmem:[%s0 + $0x30] sm:$0xf]
  %v61 = vld [vmem:[%s0 + $0x34] sm:$0xf]
  %v62 = vld [vmem:[%s0 + $0x38] sm:$0xf]
  %v63 = vld [vmem:[%s0 + $0x3c] sm:$0xf]
  %v64 = vld [vmem:[%s0 + $0x40] sm:$0xf]
  %v65 = vld [vmem:[%s0 + $0x44] sm:$0xf]
  %v66 = vld [vmem:[%s0 + $0x48] sm:$0xf]
  %v67 = vld [vmem:[%s0 + $0x4c] sm:$0xf]
  %v68 = vld [vmem:[%s0 + $0x50] sm:$0xf]
  %v69 = vld [vmem:[%s0 + $0x54] sm:$0xf]
  %v70 = vld [vmem:[%s0 + $0x58] sm:$0xf]
  %v71 = vld [vmem:[%s0 + $0x5c] sm:$0xf]
  %v72 = vld [vmem:[%s0 + $0x60] sm:$0xf]
  %v73 = vld [vmem:[%s0 + $0x64] sm:$0xf]
  %v74 = vld [vmem:[%s0 + $0x68] sm:$0xf]
  %v75 = vld [vmem:[%s0 + $0x6c] sm:$0xf]
  %v76 = vld [vmem:[%s0 + $0x70] sm:$0xf]
  %v77 = vld [vmem:[%s0 + $0x74] sm:$0xf]
  %v78 = vld [vmem:[%s0 + $0x78] sm:$0xf]
  %v79 = vld [vmem:[%s0 + $0x7c] sm:$0xf]
  %v80 = vld [vmem:[%s0 + $0x80] sm:$0xf]
  %v81 = vld [vmem:[%s0 + $0x84] sm:$0xf]
  %v82 = vld [vmem:[%s0 + $0x88] sm:$0xf]
  %v83 = vld [vmem:[%s0 + $0x8c] sm:$0xf]
  %v84 = vld [vmem:[%s0 + $0x90] sm:$0xf]
  %v85 = vld [vmem:[%s0 + $0x94] sm:$0xf]
  %v86 = vld [vmem:[%s0 + $0x98] sm:$0xf]
  %v87 = vld [vmem:[%s0 + $0x9c] sm:$0xf]
  %v88 = vld [vmem:[%s0 + $0xa0] sm:$0x3]
  %v89 = vld [vmem:[%s1] sm:$0xf]
  %v90 = vld [vmem:[%s1 + $0x4] sm:$0xf]
  %v91 = vld [vmem:[%s1 + $0x8] sm:$0xf]
  %v92 = vld [vmem:[%s2] sm:$0x1]
  %v94 = vlaneseq
  %v95 = vshrl.u32 %v94, 7
  %v96 = vsub.s32 0, %v95
  %v97 = vrot.slane %v92, %v96
  %v140 = vunpack.c.l.b16 %v48
  %v141 = vunpack.c.l.b16 %v49
  %v142 = vunpack.c.l.b16 %v50
  %v143 = vunpack.c.l.b16 %v51
  %v144 = vunpack.c.l.b16 %v52
  %v145 = vunpack.c.l.b16 %v53
  %v146 = vunpack.c.l.b16 %v54
  %v147 = vunpack.c.l.b16 %v55
  %v148 = vunpack.c.l.b16 %v56
  %v149 = vunpack.c.l.b16 %v57
  %v150 = vunpack.c.l.b16 %v58
  %v151 = vunpack.c.l.b16 %v59
  %v152 = vunpack.c.l.b16 %v60
  %v153 = vunpack.c.l.b16 %v61
  %v154 = vunpack.c.l.b16 %v62
  %v155 = vunpack.c.l.b16 %v63
  %v156 = vunpack.c.l.b16 %v64
  %v157 = vunpack.c.l.b16 %v65
  %v158 = vunpack.c.l.b16 %v66
  %v159 = vunpack.c.l.b16 %v67
  %v160 = vunpack.c.l.b16 %v68
  %v161 = vunpack.c.l.b16 %v69
  %v162 = vunpack.c.l.b16 %v70
  %v163 = vunpack.c.l.b16 %v71
  %v164 = vunpack.c.l.b16 %v72
  %v165 = vunpack.c.l.b16 %v73
  %v166 = vunpack.c.l.b16 %v74
  %v167 = vunpack.c.l.b16 %v75
  %v168 = vunpack.c.l.b16 %v76
  %v169 = vunpack.c.l.b16 %v77
  %v170 = vunpack.c.l.b16 %v78
  %v171 = vunpack.c.l.b16 %v79
  %v172 = vunpack.c.l.b16 %v80
  %v173 = vunpack.c.l.b16 %v81
  %v174 = vunpack.c.l.b16 %v82
  %v175 = vunpack.c.l.b16 %v83
  %v176 = vunpack.c.l.b16 %v84
  %v177 = vunpack.c.l.b16 %v85
  %v178 = vunpack.c.l.b16 %v86
  %v179 = vunpack.c.l.b16 %v87
  %v180 = vunpack.c.l.b16 %v88
  %v181 = vpack.c.b16 %v141, %v140
  %v182 = vpack.c.b16 %v143, %v142
  %v183 = vpack.c.b16 %v145, %v144
  %v184 = vpack.c.b16 %v147, %v146
  %v185 = vpack.c.b16 %v149, %v148
  %v186 = vpack.c.b16 %v151, %v150
  %v187 = vpack.c.b16 %v153, %v152
  %v188 = vpack.c.b16 %v155, %v154
  %v189 = vpack.c.b16 %v157, %v156
  %v190 = vpack.c.b16 %v159, %v158
  %v191 = vpack.c.b16 %v161, %v160
  %v192 = vpack.c.b16 %v163, %v162
  %v193 = vpack.c.b16 %v165, %v164
  %v194 = vpack.c.b16 %v167, %v166
  %v195 = vpack.c.b16 %v169, %v168
  %v196 = vpack.c.b16 %v171, %v170
  %v197 = vpack.c.b16 %v173, %v172
  %v198 = vpack.c.b16 %v175, %v174
  %v199 = vpack.c.b16 %v177, %v176
  %v200 = vpack.c.b16 %v179, %v178
  %v201 = vpack.c.b16 %v180, %v180
  %v205 = vunpack.c.l.b16 %v89
  %v206 = vunpack.c.l.b16 %v90
  %v207 = vunpack.c.l.b16 %v91
  %v208 = vpack.c.b16 %v206, %v205
  %v209 = vpack.c.b16 %v207, %v207
  %vm211 = vcmask 195584
  %v213 = vsel %vm211, %v181, 0
  %v216 = vsel %vm211, %v182, 0
  %v219 = vsel %vm211, %v183, 0
  %v222 = vsel %vm211, %v184, 0
  %v225 = vsel %vm211, %v185, 0
  %v228 = vsel %vm211, %v186, 0
  %v231 = vsel %vm211, %v187, 0
  %v234 = vsel %vm211, %v188, 0
  %v237 = vsel %vm211, %v189, 0
  %v240 = vsel %vm211, %v190, 0
  %v243 = vsel %vm211, %v191, 0
  %v246 = vsel %vm211, %v192, 0
  %v249 = vsel %vm211, %v193, 0
  %v252 = vsel %vm211, %v194, 0
  %v255 = vsel %vm211, %v195, 0
  %v258 = vsel %vm211, %v196, 0
  %v261 = vsel %vm211, %v197, 0
  %v264 = vsel %vm211, %v198, 0
  %v267 = vsel %vm211, %v199, 0
  %v270 = vsel %vm211, %v200, 0
  %v273 = vsel %vm211, %v201, 0
  %vm275 = vcmask 1043456
  %v277 = vsel %vm275, %v209, 0
  %279 = vmatprep.subr.bf16.mxu0 0
  %280 = vmatpush1.bf16.msra.mxu0 %v208
  %281 = vmatprep.subr.bf16.mxu0 0
  %282 = vmatpush1.bf16.msra.mxu0 %v277
  %283 = vmatprep.subr.bf16.mxu0 0
  %284 = vmatpush1.bf16.msra.mxu0 0
  %285 = vmatprep.subr.bf16.mxu0 0
  %286 = vmatpush1.bf16.msra.mxu0 0
  %287 = vmatprep.subr.bf16.mxu0 0
  %288 = vmatpush1.bf16.msra.mxu0 0
  %289 = vmatprep.subr.bf16.mxu0 0
  %290 = vmatpush1.bf16.msra.mxu0 0
  %291 = vmatprep.subr.bf16.mxu0 0
  %292 = vmatpush1.bf16.msra.mxu0 0
  %293 = vmatprep.subr.bf16.mxu0 0
  %294 = vmatpush1.bf16.msra.mxu0 0
  %295 = vmatprep.subr.bf16.mxu0 0
  %296 = vmatpush1.bf16.msra.mxu0 0
  %297 = vmatprep.subr.bf16.mxu0 0
  %298 = vmatpush1.bf16.msra.mxu0 0
  %299 = vmatprep.subr.bf16.mxu0 0
  %300 = vmatpush1.bf16.msra.mxu0 0
  %301 = vmatprep.subr.bf16.mxu0 0
  %302 = vmatpush1.bf16.msra.mxu0 0
  %303 = vmatprep.subr.bf16.mxu0 0
  %304 = vmatpush1.bf16.msra.mxu0 0
  %305 = vmatprep.subr.bf16.mxu0 0
  %306 = vmatpush1.bf16.msra.mxu0 0
  %307 = vmatprep.subr.bf16.mxu0 0
  %308 = vmatpush1.bf16.msra.mxu0 0
  %309 = vmatprep.subr.bf16.mxu0 0
  %310 = vmatpush1.bf16.msra.mxu0 0
  %311 = vmatprep.mubr.bf16.mxu0 0
  %312 = vmatmul.mubr.bf16.gmra.mrb[0].mxu0 %v213
  %v313 = vpop.f32.mrb[0].mxu0
  %v314 = vadd.f32 %v97, %v313
  %v315 = vpop.f32.mrb[0].mxu0
  %v316 = vpop.f32.mrb[0].mxu0
  %v317 = vadd.f32 %v97, %v316
  %v318 = vpop.f32.mrb[0].mxu0
  %319 = vmatprep.mubr.bf16.mxu0 0
  %320 = vmatmul.mubr.bf16.gmra.mrb[0].mxu0 %v216
  %v321 = vpop.f32.mrb[0].mxu0
  %v322 = vadd.f32 %v97, %v321
  %v323 = vpop.f32.mrb[0].mxu0
  %v324 = vpop.f32.mrb[0].mxu0
  %v325 = vadd.f32 %v97, %v324
  %v326 = vpop.f32.mrb[0].mxu0
  %327 = vmatprep.mubr.bf16.mxu0 0
  %328 = vmatmul.mubr.bf16.gmra.mrb[0].mxu0 %v219
  %v329 = vpop.f32.mrb[0].mxu0
  %v330 = vadd.f32 %v97, %v329
  %v331 = vpop.f32.mrb[0].mxu0
  %v332 = vpop.f32.mrb[0].mxu0
  %v333 = vadd.f32 %v97, %v332
  %v334 = vpop.f32.mrb[0].mxu0
  %335 = vmatprep.mubr.bf16.mxu0 0
  %336 = vmatmul.mubr.bf16.gmra.mrb[0].mxu0 %v222
  %v337 = vpop.f32.mrb[0].mxu0
  %v338 = vadd.f32 %v97, %v337
  %v339 = vpop.f32.mrb[0].mxu0
  %v340 = vpop.f32.mrb[0].mxu0
  %v341 = vadd.f32 %v97, %v340
  %v342 = vpop.f32.mrb[0].mxu0
  %343 = vmatprep.mubr.bf16.mxu0 0
  %344 = vmatmul.mubr.bf16.gmra.mrb[0].mxu0 %v225
  %v345 = vpop.f32.mrb[0].mxu0
  %v346 = vadd.f32 %v97, %v345
  %v347 = vpop.f32.mrb[0].mxu0
  %v348 = vpop.f32.mrb[0].mxu0
  %v349 = vadd.f32 %v97, %v348
  %v350 = vpop.f32.mrb[0].mxu0
  %351 = vmatprep.mubr.bf16.mxu0 0
  %352 = vmatmul.mubr.bf16.gmra.mrb[0].mxu0 %v228
  %v353 = vpop.f32.mrb[0].mxu0
  %v354 = vadd.f32 %v97, %v353
  %v355 = vpop.f32.mrb[0].mxu0
  %v356 = vpop.f32.mrb[0].mxu0
  %v357 = vadd.f32 %v97, %v356
  %v358 = vpop.f32.mrb[0].mxu0
  %359 = vmatprep.mubr.bf16.mxu0 0
  %360 = vmatmul.mubr.bf16.gmra.mrb[0].mxu0 %v231
  %v361 = vpop.f32.mrb[0].mxu0
  %v362 = vadd.f32 %v97, %v361
  %v363 = vpop.f32.mrb[0].mxu0
  %v364 = vpop.f32.mrb[0].mxu0
  %v365 = vadd.f32 %v97, %v364
  %v366 = vpop.f32.mrb[0].mxu0
  %367 = vmatprep.mubr.bf16.mxu0 0
  %368 = vmatmul.mubr.bf16.gmra.mrb[0].mxu0 %v234
  %v369 = vpop.f32.mrb[0].mxu0
  %v370 = vadd.f32 %v97, %v369
  %v371 = vpop.f32.mrb[0].mxu0
  %v372 = vpop.f32.mrb[0].mxu0
  %v373 = vadd.f32 %v97, %v372
  %v374 = vpop.f32.mrb[0].mxu0
  %375 = vmatprep.mubr.bf16.mxu0 0
  %376 = vmatmul.mubr.bf16.gmra.mrb[0].mxu0 %v237
  %v377 = vpop.f32.mrb[0].mxu0
  %v378 = vadd.f32 %v97, %v377
  %v379 = vpop.f32.mrb[0].mxu0
  %v380 = vpop.f32.mrb[0].mxu0
  %v381 = vadd.f32 %v97, %v380
  %v382 = vpop.f32.mrb[0].mxu0
  %383 = vmatprep.mubr.bf16.mxu0 0
  %384 = vmatmul.mubr.bf16.gmra.mrb[0].mxu0 %v240
  %v385 = vpop.f32.mrb[0].mxu0
  %v386 = vadd.f32 %v97, %v385
  %v387 = vpop.f32.mrb[0].mxu0
  %v388 = vpop.f32.mrb[0].mxu0
  %v389 = vadd.f32 %v97, %v388
  %v390 = vpop.f32.mrb[0].mxu0
  %391 = vmatprep.mubr.bf16.mxu0 0
  %392 = vmatmul.mubr.bf16.gmra.mrb[0].mxu0 %v243
  %v393 = vpop.f32.mrb[0].mxu0
  %v394 = vadd.f32 %v97, %v393
  %v395 = vpop.f32.mrb[0].mxu0
  %v396 = vpop.f32.mrb[0].mxu0
  %v397 = vadd.f32 %v97, %v396
  %v398 = vpop.f32.mrb[0].mxu0
  %399 = vmatprep.mubr.bf16.mxu0 0
  %400 = vmatmul.mubr.bf16.gmra.mrb[0].mxu0 %v246
  %v401 = vpop.f32.mrb[0].mxu0
  %v402 = vadd.f32 %v97, %v401
  %v403 = vpop.f32.mrb[0].mxu0
  %v404 = vpop.f32.mrb[0].mxu0
  %v405 = vadd.f32 %v97, %v404
  %v406 = vpop.f32.mrb[0].mxu0
  %407 = vmatprep.mubr.bf16.mxu0 0
  %408 = vmatmul.mubr.bf16.gmra.mrb[0].mxu0 %v249
  %v409 = vpop.f32.mrb[0].mxu0
  %v410 = vadd.f32 %v97, %v409
  %v411 = vpop.f32.mrb[0].mxu0
  %v412 = vpop.f32.mrb[0].mxu0
  %v413 = vadd.f32 %v97, %v412
  %v414 = vpop.f32.mrb[0].mxu0
  %415 = vmatprep.mubr.bf16.mxu0 0
  %416 = vmatmul.mubr.bf16.gmra.mrb[0].mxu0 %v252
  %v417 = vpop.f32.mrb[0].mxu0
  %v418 = vadd.f32 %v97, %v417
  %v419 = vpop.f32.mrb[0].mxu0
  %v420 = vpop.f32.mrb[0].mxu0
  %v421 = vadd.f32 %v97, %v420
  %v422 = vpop.f32.mrb[0].mxu0
  %423 = vmatprep.mubr.bf16.mxu0 0
  %424 = vmatmul.mubr.bf16.gmra.mrb[0].mxu0 %v255
  %v425 = vpop.f32.mrb[0].mxu0
  %v426 = vadd.f32 %v97, %v425
  %v427 = vpop.f32.mrb[0].mxu0
  %v428 = vpop.f32.mrb[0].mxu0
  %v429 = vadd.f32 %v97, %v428
  %v430 = vpop.f32.mrb[0].mxu0
  %431 = vmatprep.mubr.bf16.mxu0 0
  %432 = vmatmul.mubr.bf16.gmra.mrb[0].mxu0 %v258
  %v433 = vpop.f32.mrb[0].mxu0
  %v434 = vadd.f32 %v97, %v433
  %v435 = vpop.f32.mrb[0].mxu0
  %v436 = vpop.f32.mrb[0].mxu0
  %v437 = vadd.f32 %v97, %v436
  %v438 = vpop.f32.mrb[0].mxu0
  %439 = vmatprep.mubr.bf16.mxu0 0
  %440 = vmatmul.mubr.bf16.gmra.mrb[0].mxu0 %v261
  %v441 = vpop.f32.mrb[0].mxu0
  %v442 = vadd.f32 %v97, %v441
  %v443 = vpop.f32.mrb[0].mxu0
  %v444 = vpop.f32.mrb[0].mxu0
  %v445 = vadd.f32 %v97, %v444
  %v446 = vpop.f32.mrb[0].mxu0
  %447 = vmatprep.mubr.bf16.mxu0 0
  %448 = vmatmul.mubr.bf16.gmra.mrb[0].mxu0 %v264
  %v449 = vpop.f32.mrb[0].mxu0
  %v450 = vadd.f32 %v97, %v449
  %v451 = vpop.f32.mrb[0].mxu0
  %v452 = vpop.f32.mrb[0].mxu0
  %v453 = vadd.f32 %v97, %v452
  %v454 = vpop.f32.mrb[0].mxu0
  %455 = vmatprep.mubr.bf16.mxu0 0
  %456 = vmatmul.mubr.bf16.gmra.mrb[0].mxu0 %v267
  %v457 = vpop.f32.mrb[0].mxu0
  %v458 = vadd.f32 %v97, %v457
  %v459 = vpop.f32.mrb[0].mxu0
  %v460 = vpop.f32.mrb[0].mxu0
  %v461 = vadd.f32 %v97, %v460
  %v462 = vpop.f32.mrb[0].mxu0
  %463 = vmatprep.mubr.bf16.mxu0 0
  %464 = vmatmul.mubr.bf16.gmra.mrb[0].mxu0 %v270
  %v465 = vpop.f32.mrb[0].mxu0
  %v466 = vadd.f32 %v97, %v465
  %v467 = vpop.f32.mrb[0].mxu0
  %v468 = vpop.f32.mrb[0].mxu0
  %v469 = vadd.f32 %v97, %v468
  %v470 = vpop.f32.mrb[0].mxu0
  %471 = vmatprep.mubr.bf16.mxu0 0
  %472 = vmatmul.mubr.bf16.gmra.mrb[0].mxu0 %v273
  %v473 = vpop.f32.mrb[0].mxu0
  %v474 = vadd.f32 %v97, %v473
  %v475 = vpop.f32.mrb[0].mxu0
  %v476 = vpop.f32.mrb[0].mxu0
  %v477 = vpop.f32.mrb[0].mxu0
  %478 = vdwg.mxu0
  %v479 = vmax.f32 %v314, 0.0
  %v480 = vmax.f32 %v317, 0.0
  %v481 = vmax.f32 %v322, 0.0
  %v482 = vmax.f32 %v325, 0.0
  %v483 = vmax.f32 %v330, 0.0
  %v484 = vmax.f32 %v333, 0.0
  %v485 = vmax.f32 %v338, 0.0
  %v486 = vmax.f32 %v341, 0.0
  %v487 = vmax.f32 %v346, 0.0
  %v488 = vmax.f32 %v349, 0.0
  %v489 = vmax.f32 %v354, 0.0
  %v490 = vmax.f32 %v357, 0.0
  %v491 = vmax.f32 %v362, 0.0
  %v492 = vmax.f32 %v365, 0.0
  %v493 = vmax.f32 %v370, 0.0
  %v494 = vmax.f32 %v373, 0.0
  %v495 = vmax.f32 %v378, 0.0
  %v496 = vmax.f32 %v381, 0.0
  %v497 = vmax.f32 %v386, 0.0
  %v498 = vmax.f32 %v389, 0.0
  %v499 = vmax.f32 %v394, 0.0
  %v500 = vmax.f32 %v397, 0.0
  %v501 = vmax.f32 %v402, 0.0
  %v502 = vmax.f32 %v405, 0.0
  %v503 = vmax.f32 %v410, 0.0
  %v504 = vmax.f32 %v413, 0.0
  %v505 = vmax.f32 %v418, 0.0
  %v506 = vmax.f32 %v421, 0.0
  %v507 = vmax.f32 %v426, 0.0
  %v508 = vmax.f32 %v429, 0.0
  %v509 = vmax.f32 %v434, 0.0
  %v510 = vmax.f32 %v437, 0.0
  %v511 = vmax.f32 %v442, 0.0
  %v512 = vmax.f32 %v445, 0.0
  %v513 = vmax.f32 %v450, 0.0
  %v514 = vmax.f32 %v453, 0.0
  %v515 = vmax.f32 %v458, 0.0
  %v516 = vmax.f32 %v461, 0.0
  %v517 = vmax.f32 %v466, 0.0
  %v518 = vmax.f32 %v469, 0.0
  %v519 = vmax.f32 %v474, 0.0
  %v520 = vpack.c.bf16 %v480, %v479
  %v521 = vpack.c.bf16 %v482, %v481
  %v522 = vpack.c.bf16 %v484, %v483
  %v523 = vpack.c.bf16 %v486, %v485
  %v524 = vpack.c.bf16 %v488, %v487
  %v525 = vpack.c.bf16 %v490, %v489
  %v526 = vpack.c.bf16 %v492, %v491
  %v527 = vpack.c.bf16 %v494, %v493
  %v528 = vpack.c.bf16 %v496, %v495
  %v529 = vpack.c.bf16 %v498, %v497
  %v530 = vpack.c.bf16 %v500, %v499
  %v531 = vpack.c.bf16 %v502, %v501
  %v532 = vpack.c.bf16 %v504, %v503
  %v533 = vpack.c.bf16 %v506, %v505
  %v534 = vpack.c.bf16 %v508, %v507
  %v535 = vpack.c.bf16 %v510, %v509
  %v536 = vpack.c.bf16 %v512, %v511
  %v537 = vpack.c.bf16 %v514, %v513
  %v538 = vpack.c.bf16 %v516, %v515
  %v539 = vpack.c.bf16 %v518, %v517
  %v540 = vpack.c.bf16 %v519, %v519
  %v541 = vld [vmem:[%s3] sm:$0xff]
  %v542 = vld [vmem:[%s3 + $0x8] sm:$0xf]
  %v543 = vld [vmem:[%s3 + $0xc] sm:$0xff]
  %v544 = vld [vmem:[%s3 + $0x14] sm:$0xf]
  %v545 = vld [vmem:[%s3 + $0x18] sm:$0xff]
  %v546 = vld [vmem:[%s3 + $0x20] sm:$0xf]
  %v547 = vld [vmem:[%s3 + $0x24] sm:$0xff]
  %v548 = vld [vmem:[%s3 + $0x2c] sm:$0xf]
  %v549 = vld [vmem:[%s3 + $0x30] sm:$0xff]
  %v550 = vld [vmem:[%s3 + $0x38] sm:$0xf]
  %v551 = vld [vmem:[%s3 + $0x3c] sm:$0xff]
  %v552 = vld [vmem:[%s3 + $0x44] sm:$0xf]
  %v553 = vld [vmem:[%s3 + $0x48] sm:$0xff]
  %v554 = vld [vmem:[%s3 + $0x50] sm:$0xf]
  %v555 = vld [vmem:[%s3 + $0x54] sm:$0xff]
  %v556 = vld [vmem:[%s3 + $0x5c] sm:$0xf]
  %v557 = vld [vmem:[%s3 + $0x60] sm:$0xff]
  %v558 = vld [vmem:[%s3 + $0x68] sm:$0xf]
  %v559 = vld [vmem:[%s3 + $0x6c] sm:$0xff]
  %v560 = vld [vmem:[%s3 + $0x74] sm:$0xf]
  %v561 = vld [vmem:[%s3 + $0x78] sm:$0xff]
  %v562 = vld [vmem:[%s3 + $0x80] sm:$0xf]
  %v563 = vld [vmem:[%s3 + $0x84] sm:$0xff]
  %v564 = vld [vmem:[%s3 + $0x8c] sm:$0xf]
  %v565 = vld [vmem:[%s3 + $0x90] sm:$0xff]
  %v566 = vld [vmem:[%s3 + $0x98] sm:$0xf]
  %v567 = vld [vmem:[%s3 + $0x9c] sm:$0xff]
  %v568 = vld [vmem:[%s3 + $0xa4] sm:$0xf]
  %v569 = vld [vmem:[%s3 + $0xa8] sm:$0xff]
  %v570 = vld [vmem:[%s3 + $0xb0] sm:$0xf]
  %v571 = vld [vmem:[%s3 + $0xb4] sm:$0xff]
  %v572 = vld [vmem:[%s3 + $0xbc] sm:$0xf]
  %v573 = vld [vmem:[%s3 + $0xc0] sm:$0xff]
  %v574 = vld [vmem:[%s3 + $0xc8] sm:$0xf]
  %v575 = vld [vmem:[%s3 + $0xcc] sm:$0xff]
  %v576 = vld [vmem:[%s3 + $0xd4] sm:$0xf]
  %v577 = vld [vmem:[%s3 + $0xd8] sm:$0xff]
  %v578 = vld [vmem:[%s3 + $0xe0] sm:$0xf]
  %v579 = vld [vmem:[%s3 + $0xe4] sm:$0xff]
  %v580 = vld [vmem:[%s3 + $0xec] sm:$0xf]
  %v581 = vld [vmem:[%s3 + $0xf0] sm:$0xff]
  %v582 = vld [vmem:[%s3 + $0xf8] sm:$0xf]
  %v583 = vld [vmem:[%s3 + $0xfc] sm:$0xff]
  %v584 = vld [vmem:[%s3 + $0x104] sm:$0xf]
  %v585 = vld [vmem:[%s3 + $0x108] sm:$0xff]
  %v586 = vld [vmem:[%s3 + $0x110] sm:$0xf]
  %v587 = vld [vmem:[%s3 + $0x114] sm:$0xff]
  %v588 = vld [vmem:[%s3 + $0x11c] sm:$0xf]
  %v589 = vld [vmem:[%s3 + $0x120] sm:$0xff]
  %v590 = vld [vmem:[%s3 + $0x128] sm:$0xf]
  %v591 = vld [vmem:[%s3 + $0x12c] sm:$0xff]
  %v592 = vld [vmem:[%s3 + $0x134] sm:$0xf]
  %v593 = vld [vmem:[%s3 + $0x138] sm:$0xff]
  %v594 = vld [vmem:[%s3 + $0x140] sm:$0xf]
  %v595 = vld [vmem:[%s3 + $0x144] sm:$0xff]
  %v596 = vld [vmem:[%s3 + $0x14c] sm:$0xf]
  %v597 = vld [vmem:[%s3 + $0x150] sm:$0xff]
  %v598 = vld [vmem:[%s3 + $0x158] sm:$0xf]
  %v599 = vld [vmem:[%s3 + $0x15c] sm:$0xff]
  %v600 = vld [vmem:[%s3 + $0x164] sm:$0xf]
  %v601 = vld [vmem:[%s3 + $0x168] sm:$0xff]
  %v602 = vld [vmem:[%s3 + $0x170] sm:$0xf]
  %v603 = vld [vmem:[%s3 + $0x174] sm:$0xff]
  %v604 = vld [vmem:[%s3 + $0x17c] sm:$0xf]
  %v605 = vld [vmem:[%s3 + $0x180] sm:$0xff]
  %v606 = vld [vmem:[%s3 + $0x188] sm:$0xf]
  %v607 = vld [vmem:[%s3 + $0x18c] sm:$0xff]
  %v608 = vld [vmem:[%s3 + $0x194] sm:$0xf]
  %v609 = vld [vmem:[%s3 + $0x198] sm:$0xff]
  %v610 = vld [vmem:[%s3 + $0x1a0] sm:$0xf]
  %v611 = vld [vmem:[%s3 + $0x1a4] sm:$0xff]
  %v612 = vld [vmem:[%s3 + $0x1ac] sm:$0xf]
  %v613 = vld [vmem:[%s3 + $0x1b0] sm:$0xff]
  %v614 = vld [vmem:[%s3 + $0x1b8] sm:$0xf]
  %v615 = vld [vmem:[%s3 + $0x1bc] sm:$0xff]
  %v616 = vld [vmem:[%s3 + $0x1c4] sm:$0xf]
  %v617 = vld [vmem:[%s3 + $0x1c8] sm:$0xff]
  %v618 = vld [vmem:[%s3 + $0x1d0] sm:$0xf]
  %v619 = vld [vmem:[%s3 + $0x1d4] sm:$0xff]
  %v620 = vld [vmem:[%s3 + $0x1dc] sm:$0xf]
  %v621 = vld [vmem:[%s3 + $0x1e0] sm:$0xff]
  %v622 = vld [vmem:[%s3 + $0x1e8] sm:$0xf]
  %v623 = vld [vmem:[%s3 + $0x1ec] sm:$0xff]
  %v624 = vld [vmem:[%s3 + $0x1f4] sm:$0xf]
  %v625 = vld [vmem:[%s3 + $0x1f8] sm:$0xff]
  %v626 = vld [vmem:[%s3 + $0x200] sm:$0xf]
  %v627 = vld [vmem:[%s3 + $0x204] sm:$0xff]
  %v628 = vld [vmem:[%s3 + $0x20c] sm:$0xf]
  %v629 = vld [vmem:[%s3 + $0x210] sm:$0xff]
  %v630 = vld [vmem:[%s3 + $0x218] sm:$0xf]
  %v631 = vld [vmem:[%s3 + $0x21c] sm:$0xff]
  %v632 = vld [vmem:[%s3 + $0x224] sm:$0xf]
  %v633 = vld [vmem:[%s3 + $0x228] sm:$0xff]
  %v634 = vld [vmem:[%s3 + $0x230] sm:$0xf]
  %v635 = vld [vmem:[%s3 + $0x234] sm:$0xff]
  %v636 = vld [vmem:[%s3 + $0x23c] sm:$0xf]
  %v637 = vld [vmem:[%s3 + $0x240] sm:$0xff]
  %v638 = vld [vmem:[%s3 + $0x248] sm:$0xf]
  %v639 = vld [vmem:[%s3 + $0x24c] sm:$0xff]
  %v640 = vld [vmem:[%s3 + $0x254] sm:$0xf]
  %v641 = vld [vmem:[%s3 + $0x258] sm:$0xff]
  %v642 = vld [vmem:[%s3 + $0x260] sm:$0xf]
  %v643 = vld [vmem:[%s3 + $0x264] sm:$0xff]
  %v644 = vld [vmem:[%s3 + $0x26c] sm:$0xf]
  %v749 = vunpack.c.l.b16 %v541
  %v750 = vunpack.c.h.b16 %v541
  %v751 = vunpack.c.l.b16 %v542
  %v752 = vunpack.c.l.b16 %v543
  %v753 = vunpack.c.h.b16 %v543
  %v754 = vunpack.c.l.b16 %v544
  %v755 = vunpack.c.l.b16 %v545
  %v756 = vunpack.c.h.b16 %v545
  %v757 = vunpack.c.l.b16 %v546
  %v758 = vunpack.c.l.b16 %v547
  %v759 = vunpack.c.h.b16 %v547
  %v760 = vunpack.c.l.b16 %v548
  %v761 = vunpack.c.l.b16 %v549
  %v762 = vunpack.c.h.b16 %v549
  %v763 = vunpack.c.l.b16 %v550
  %v764 = vunpack.c.l.b16 %v551
  %v765 = vunpack.c.h.b16 %v551
  %v766 = vunpack.c.l.b16 %v552
  %v767 = vunpack.c.l.b16 %v553
  %v768 = vunpack.c.h.b16 %v553
  %v769 = vunpack.c.l.b16 %v554
  %v770 = vunpack.c.l.b16 %v555
  %v771 = vunpack.c.h.b16 %v555
  %v772 = vunpack.c.l.b16 %v556
  %v773 = vunpack.c.l.b16 %v557
  %v774 = vunpack.c.h.b16 %v557
  %v775 = vunpack.c.l.b16 %v558
  %v776 = vunpack.c.l.b16 %v559
  %v777 = vunpack.c.h.b16 %v559
  %v778 = vunpack.c.l.b16 %v560
  %v779 = vunpack.c.l.b16 %v561
  %v780 = vunpack.c.h.b16 %v561
  %v781 = vunpack.c.l.b16 %v562
  %v782 = vunpack.c.l.b16 %v563
  %v783 = vunpack.c.h.b16 %v563
  %v784 = vunpack.c.l.b16 %v564
  %v785 = vunpack.c.l.b16 %v565
  %v786 = vunpack.c.h.b16 %v565
  %v787 = vunpack.c.l.b16 %v566
  %v788 = vunpack.c.l.b16 %v567
  %v789 = vunpack.c.h.b16 %v567
  %v790 = vunpack.c.l.b16 %v568
  %v791 = vunpack.c.l.b16 %v569
  %v792 = vunpack.c.h.b16 %v569
  %v793 = vunpack.c.l.b16 %v570
  %v794 = vunpack.c.l.b16 %v571
  %v795 = vunpack.c.h.b16 %v571
  %v796 = vunpack.c.l.b16 %v572
  %v797 = vunpack.c.l.b16 %v573
  %v798 = vunpack.c.h.b16 %v573
  %v799 = vunpack.c.l.b16 %v574
  %v800 = vunpack.c.l.b16 %v575
  %v801 = vunpack.c.h.b16 %v575
  %v802 = vunpack.c.l.b16 %v576
  %v803 = vunpack.c.l.b16 %v577
  %v804 = vunpack.c.h.b16 %v577
  %v805 = vunpack.c.l.b16 %v578
  %v806 = vunpack.c.l.b16 %v579
  %v807 = vunpack.c.h.b16 %v579
  %v808 = vunpack.c.l.b16 %v580
  %v809 = vunpack.c.l.b16 %v581
  %v810 = vunpack.c.h.b16 %v581
  %v811 = vunpack.c.l.b16 %v582
  %v812 = vunpack.c.l.b16 %v583
  %v813 = vunpack.c.h.b16 %v583
  %v814 = vunpack.c.l.b16 %v584
  %v815 = vunpack.c.l.b16 %v585
  %v816 = vunpack.c.h.b16 %v585
  %v817 = vunpack.c.l.b16 %v586
  %v818 = vunpack.c.l.b16 %v587
  %v819 = vunpack.c.h.b16 %v587
  %v820 = vunpack.c.l.b16 %v588
  %v821 = vunpack.c.l.b16 %v589
  %v822 = vunpack.c.h.b16 %v589
  %v823 = vunpack.c.l.b16 %v590
  %v824 = vunpack.c.l.b16 %v591
  %v825 = vunpack.c.h.b16 %v591
  %v826 = vunpack.c.l.b16 %v592
  %v827 = vunpack.c.l.b16 %v593
  %v828 = vunpack.c.h.b16 %v593
  %v829 = vunpack.c.l.b16 %v594
  %v830 = vunpack.c.l.b16 %v595
  %v831 = vunpack.c.h.b16 %v595
  %v832 = vunpack.c.l.b16 %v596
  %v833 = vunpack.c.l.b16 %v597
  %v834 = vunpack.c.h.b16 %v597
  %v835 = vunpack.c.l.b16 %v598
  %v836 = vunpack.c.l.b16 %v599
  %v837 = vunpack.c.h.b16 %v599
  %v838 = vunpack.c.l.b16 %v600
  %v839 = vunpack.c.l.b16 %v601
  %v840 = vunpack.c.h.b16 %v601
  %v841 = vunpack.c.l.b16 %v602
  %v842 = vunpack.c.l.b16 %v603
  %v843 = vunpack.c.h.b16 %v603
  %v844 = vunpack.c.l.b16 %v604
  %v845 = vunpack.c.l.b16 %v605
  %v846 = vunpack.c.h.b16 %v605
  %v847 = vunpack.c.l.b16 %v606
  %v848 = vunpack.c.l.b16 %v607
  %v849 = vunpack.c.h.b16 %v607
  %v850 = vunpack.c.l.b16 %v608
  %v851 = vunpack.c.l.b16 %v609
  %v852 = vunpack.c.h.b16 %v609
  %v853 = vunpack.c.l.b16 %v610
  %v854 = vunpack.c.l.b16 %v611
  %v855 = vunpack.c.h.b16 %v611
  %v856 = vunpack.c.l.b16 %v612
  %v857 = vunpack.c.l.b16 %v613
  %v858 = vunpack.c.h.b16 %v613
  %v859 = vunpack.c.l.b16 %v614
  %v860 = vunpack.c.l.b16 %v615
  %v861 = vunpack.c.h.b16 %v615
  %v862 = vunpack.c.l.b16 %v616
  %v863 = vunpack.c.l.b16 %v617
  %v864 = vunpack.c.h.b16 %v617
  %v865 = vunpack.c.l.b16 %v618
  %v866 = vunpack.c.l.b16 %v619
  %v867 = vunpack.c.h.b16 %v619
  %v868 = vunpack.c.l.b16 %v620
  %v869 = vunpack.c.l.b16 %v621
  %v870 = vunpack.c.h.b16 %v621
  %v871 = vunpack.c.l.b16 %v622
  %v872 = vunpack.c.l.b16 %v623
  %v873 = vunpack.c.h.b16 %v623
  %v874 = vunpack.c.l.b16 %v624
  %v875 = vunpack.c.l.b16 %v625
  %v876 = vunpack.c.h.b16 %v625
  %v877 = vunpack.c.l.b16 %v626
  %v878 = vunpack.c.l.b16 %v627
  %v879 = vunpack.c.h.b16 %v627
  %v880 = vunpack.c.l.b16 %v628
  %v881 = vunpack.c.l.b16 %v629
  %v882 = vunpack.c.h.b16 %v629
  %v883 = vunpack.c.l.b16 %v630
  %v884 = vunpack.c.l.b16 %v631
  %v885 = vunpack.c.h.b16 %v631
  %v886 = vunpack.c.l.b16 %v632
  %v887 = vunpack.c.l.b16 %v633
  %v888 = vunpack.c.h.b16 %v633
  %v889 = vunpack.c.l.b16 %v634
  %v890 = vunpack.c.l.b16 %v635
  %v891 = vunpack.c.h.b16 %v635
  %v892 = vunpack.c.l.b16 %v636
  %v893 = vunpack.c.l.b16 %v637
  %v894 = vunpack.c.h.b16 %v637
  %v895 = vunpack.c.l.b16 %v638
  %v896 = vunpack.c.l.b16 %v639
  %v897 = vunpack.c.h.b16 %v639
  %v898 = vunpack.c.l.b16 %v640
  %v899 = vunpack.c.l.b16 %v641
  %v900 = vunpack.c.h.b16 %v641
  %v901 = vunpack.c.l.b16 %v642
  %v902 = vunpack.c.l.b16 %v643
  %v903 = vunpack.c.h.b16 %v643
  %v904 = vunpack.c.l.b16 %v644
  %v905 = vpack.c.b16 %v752, %v749
  %v906 = vpack.c.b16 %v753, %v750
  %v907 = vpack.c.b16 %v754, %v751
  %v908 = vpack.c.b16 %v758, %v755
  %v909 = vpack.c.b16 %v759, %v756
  %v910 = vpack.c.b16 %v760, %v757
  %v911 = vpack.c.b16 %v764, %v761
  %v912 = vpack.c.b16 %v765, %v762
  %v913 = vpack.c.b16 %v766, %v763
  %v914 = vpack.c.b16 %v770, %v767
  %v915 = vpack.c.b16 %v771, %v768
  %v916 = vpack.c.b16 %v772, %v769
  %v917 = vpack.c.b16 %v776, %v773
  %v918 = vpack.c.b16 %v777, %v774
  %v919 = vpack.c.b16 %v778, %v775
  %v920 = vpack.c.b16 %v782, %v779
  %v921 = vpack.c.b16 %v783, %v780
  %v922 = vpack.c.b16 %v784, %v781
  %v923 = vpack.c.b16 %v788, %v785
  %v924 = vpack.c.b16 %v789, %v786
  %v925 = vpack.c.b16 %v790, %v787
  %v926 = vpack.c.b16 %v794, %v791
  %v927 = vpack.c.b16 %v795, %v792
  %v928 = vpack.c.b16 %v796, %v793
  %v929 = vpack.c.b16 %v800, %v797
  %v930 = vpack.c.b16 %v801, %v798
  %v931 = vpack.c.b16 %v802, %v799
  %v932 = vpack.c.b16 %v806, %v803
  %v933 = vpack.c.b16 %v807, %v804
  %v934 = vpack.c.b16 %v808, %v805
  %v935 = vpack.c.b16 %v812, %v809
  %v936 = vpack.c.b16 %v813, %v810
  %v937 = vpack.c.b16 %v814, %v811
  %v938 = vpack.c.b16 %v818, %v815
  %v939 = vpack.c.b16 %v819, %v816
  %v940 = vpack.c.b16 %v820, %v817
  %v941 = vpack.c.b16 %v824, %v821
  %v942 = vpack.c.b16 %v825, %v822
  %v943 = vpack.c.b16 %v826, %v823
  %v944 = vpack.c.b16 %v830, %v827
  %v945 = vpack.c.b16 %v831, %v828
  %v946 = vpack.c.b16 %v832, %v829
  %v947 = vpack.c.b16 %v836, %v833
  %v948 = vpack.c.b16 %v837, %v834
  %v949 = vpack.c.b16 %v838, %v835
  %v950 = vpack.c.b16 %v842, %v839
  %v951 = vpack.c.b16 %v843, %v840
  %v952 = vpack.c.b16 %v844, %v841
  %v953 = vpack.c.b16 %v848, %v845
  %v954 = vpack.c.b16 %v849, %v846
  %v955 = vpack.c.b16 %v850, %v847
  %v956 = vpack.c.b16 %v854, %v851
  %v957 = vpack.c.b16 %v855, %v852
  %v958 = vpack.c.b16 %v856, %v853
  %v959 = vpack.c.b16 %v860, %v857
  %v960 = vpack.c.b16 %v861, %v858
  %v961 = vpack.c.b16 %v862, %v859
  %v962 = vpack.c.b16 %v866, %v863
  %v963 = vpack.c.b16 %v867, %v864
  %v964 = vpack.c.b16 %v868, %v865
  %v965 = vpack.c.b16 %v872, %v869
  %v966 = vpack.c.b16 %v873, %v870
  %v967 = vpack.c.b16 %v874, %v871
  %v968 = vpack.c.b16 %v878, %v875
  %v969 = vpack.c.b16 %v879, %v876
  %v970 = vpack.c.b16 %v880, %v877
  %v971 = vpack.c.b16 %v884, %v881
  %v972 = vpack.c.b16 %v885, %v882
  %v973 = vpack.c.b16 %v886, %v883
  %v974 = vpack.c.b16 %v890, %v887
  %v975 = vpack.c.b16 %v891, %v888
  %v976 = vpack.c.b16 %v892, %v889
  %v977 = vpack.c.b16 %v896, %v893
  %v978 = vpack.c.b16 %v897, %v894
  %v979 = vpack.c.b16 %v898, %v895
  %v980 = vpack.c.b16 %v902, %v899
  %v981 = vpack.c.b16 %v903, %v900
  %v982 = vpack.c.b16 %v904, %v901
  %vm1035 = vcmask 556032
  %v1037 = vsel %vm1035, %v907, 0
  %v1040 = vsel %vm1035, %v910, 0
  %v1043 = vsel %vm1035, %v913, 0
  %v1046 = vsel %vm1035, %v916, 0
  %v1049 = vsel %vm1035, %v919, 0
  %v1052 = vsel %vm1035, %v922, 0
  %v1055 = vsel %vm1035, %v925, 0
  %v1058 = vsel %vm1035, %v928, 0
  %v1061 = vsel %vm1035, %v931, 0
  %v1064 = vsel %vm1035, %v934, 0
  %v1067 = vsel %vm1035, %v937, 0
  %v1070 = vsel %vm1035, %v940, 0
  %v1073 = vsel %vm1035, %v943, 0
  %v1076 = vsel %vm1035, %v946, 0
  %v1079 = vsel %vm1035, %v949, 0
  %v1082 = vsel %vm1035, %v952, 0
  %v1085 = vsel %vm1035, %v955, 0
  %v1088 = vsel %vm1035, %v958, 0
  %v1091 = vsel %vm1035, %v961, 0
  %v1094 = vsel %vm1035, %v964, 0
  %v1097 = vsel %vm1035, %v967, 0
  %v1100 = vsel %vm1035, %v970, 0
  %v1103 = vsel %vm1035, %v973, 0
  %v1106 = vsel %vm1035, %v976, 0
  %v1109 = vsel %vm1035, %v979, 0
  %v1112 = vsel %vm1035, %v982, 0
  %vm1114 = vcmask 1041408
  %v1116 = vsel %vm1114, %v540, 0
  %1118 = vmatprep.subr.bf16.mxu0 0
  %1119 = vmatpush1.bf16.msra.mxu0 %v520
  %1120 = vmatprep.subr.bf16.mxu0 0
  %1121 = vmatpush1.bf16.msra.mxu0 %v521
  %1122 = vmatprep.subr.bf16.mxu0 0
  %1123 = vmatpush1.bf16.msra.mxu0 %v522
  %1124 = vmatprep.subr.bf16.mxu0 0
  %1125 = vmatpush1.bf16.msra.mxu0 %v523
  %1126 = vmatprep.subr.bf16.mxu0 0
  %1127 = vmatpush1.bf16.msra.mxu0 %v524
  %1128 = vmatprep.subr.bf16.mxu0 0
  %1129 = vmatpush1.bf16.msra.mxu0 %v525
  %1130 = vmatprep.subr.bf16.mxu0 0
  %1131 = vmatpush1.bf16.msra.mxu0 %v526
  %1132 = vmatprep.subr.bf16.mxu0 0
  %1133 = vmatpush1.bf16.msra.mxu0 %v527
  %1134 = vmatprep.subr.bf16.mxu0 0
  %1135 = vmatpush1.bf16.msra.mxu0 %v528
  %1136 = vmatprep.subr.bf16.mxu0 0
  %1137 = vmatpush1.bf16.msra.mxu0 %v529
  %1138 = vmatprep.subr.bf16.mxu0 0
  %1139 = vmatpush1.bf16.msra.mxu0 %v530
  %1140 = vmatprep.subr.bf16.mxu0 0
  %1141 = vmatpush1.bf16.msra.mxu0 %v531
  %1142 = vmatprep.subr.bf16.mxu0 0
  %1143 = vmatpush1.bf16.msra.mxu0 %v532
  %1144 = vmatprep.subr.bf16.mxu0 0
  %1145 = vmatpush1.bf16.msra.mxu0 %v533
  %1146 = vmatprep.subr.bf16.mxu0 0
  %1147 = vmatpush1.bf16.msra.mxu0 %v534
  %1148 = vmatprep.subr.bf16.mxu0 0
  %1149 = vmatpush1.bf16.msra.mxu0 %v535
  %1150 = vmatprep.mubr.bf16.mxu0 %v906
  %1151 = vmatmul.mubr.bf16.gmra.mrb[0].mxu0 %v905
  %v1152 = vpop.f32.mrb[0].mxu0
  %v1153 = vadd.f32 0.0, %v1152
  %v1154 = vpop.f32.mrb[0].mxu0
  %v1155 = vpop.f32.mrb[0].mxu0
  %v1156 = vadd.f32 0.0, %v1155
  %v1157 = vpop.f32.mrb[0].mxu0
  %1158 = vmatprep.mubr.bf16.mxu0 %v909
  %1159 = vmatmul.mubr.bf16.gmra.mrb[0].mxu0 %v908
  %v1160 = vpop.f32.mrb[0].mxu0
  %v1161 = vadd.f32 0.0, %v1160
  %v1162 = vpop.f32.mrb[0].mxu0
  %v1163 = vpop.f32.mrb[0].mxu0
  %v1164 = vadd.f32 0.0, %v1163
  %v1165 = vpop.f32.mrb[0].mxu0
  %1166 = vmatprep.mubr.bf16.mxu0 %v912
  %1167 = vmatmul.mubr.bf16.gmra.mrb[0].mxu0 %v911
  %v1168 = vpop.f32.mrb[0].mxu0
  %v1169 = vadd.f32 0.0, %v1168
  %v1170 = vpop.f32.mrb[0].mxu0
  %v1171 = vpop.f32.mrb[0].mxu0
  %v1172 = vadd.f32 0.0, %v1171
  %v1173 = vpop.f32.mrb[0].mxu0
  %1174 = vmatprep.mubr.bf16.mxu0 %v915
  %1175 = vmatmul.mubr.bf16.gmra.mrb[0].mxu0 %v914
  %v1176 = vpop.f32.mrb[0].mxu0
  %v1177 = vadd.f32 0.0, %v1176
  %v1178 = vpop.f32.mrb[0].mxu0
  %v1179 = vpop.f32.mrb[0].mxu0
  %v1180 = vadd.f32 0.0, %v1179
  %v1181 = vpop.f32.mrb[0].mxu0
  %1182 = vmatprep.mubr.bf16.mxu0 %v918
  %1183 = vmatmul.mubr.bf16.gmra.mrb[0].mxu0 %v917
  %v1184 = vpop.f32.mrb[0].mxu0
  %v1185 = vadd.f32 0.0, %v1184
  %v1186 = vpop.f32.mrb[0].mxu0
  %v1187 = vpop.f32.mrb[0].mxu0
  %v1188 = vadd.f32 0.0, %v1187
  %v1189 = vpop.f32.mrb[0].mxu0
  %1190 = vmatprep.mubr.bf16.mxu0 %v921
  %1191 = vmatmul.mubr.bf16.gmra.mrb[0].mxu0 %v920
  %v1192 = vpop.f32.mrb[0].mxu0
  %v1193 = vadd.f32 0.0, %v1192
  %v1194 = vpop.f32.mrb[0].mxu0
  %v1195 = vpop.f32.mrb[0].mxu0
  %v1196 = vadd.f32 0.0, %v1195
  %v1197 = vpop.f32.mrb[0].mxu0
  %1198 = vmatprep.mubr.bf16.mxu0 %v924
  %1199 = vmatmul.mubr.bf16.gmra.mrb[0].mxu0 %v923
  %v1200 = vpop.f32.mrb[0].mxu0
  %v1201 = vadd.f32 0.0, %v1200
  %v1202 = vpop.f32.mrb[0].mxu0
  %v1203 = vpop.f32.mrb[0].mxu0
  %v1204 = vadd.f32 0.0, %v1203
  %v1205 = vpop.f32.mrb[0].mxu0
  %1206 = vmatprep.mubr.bf16.mxu0 %v927
  %1207 = vmatmul.mubr.bf16.gmra.mrb[0].mxu0 %v926
  %v1208 = vpop.f32.mrb[0].mxu0
  %v1209 = vadd.f32 0.0, %v1208
  %v1210 = vpop.f32.mrb[0].mxu0
  %v1211 = vpop.f32.mrb[0].mxu0
  %v1212 = vadd.f32 0.0, %v1211
  %v1213 = vpop.f32.mrb[0].mxu0
  %1214 = vmatprep.mubr.bf16.mxu0 %v930
  %1215 = vmatmul.mubr.bf16.gmra.mrb[0].mxu0 %v929
  %v1216 = vpop.f32.mrb[0].mxu0
  %v1217 = vadd.f32 0.0, %v1216
  %v1218 = vpop.f32.mrb[0].mxu0
  %v1219 = vpop.f32.mrb[0].mxu0
  %v1220 = vadd.f32 0.0, %v1219
  %v1221 = vpop.f32.mrb[0].mxu0
  %1222 = vmatprep.mubr.bf16.mxu0 %v933
  %1223 = vmatmul.mubr.bf16.gmra.mrb[0].mxu0 %v932
  %v1224 = vpop.f32.mrb[0].mxu0
  %v1225 = vadd.f32 0.0, %v1224
  %v1226 = vpop.f32.mrb[0].mxu0
  %v1227 = vpop.f32.mrb[0].mxu0
  %v1228 = vadd.f32 0.0, %v1227
  %v1229 = vpop.f32.mrb[0].mxu0
  %1230 = vmatprep.mubr.bf16.mxu0 %v936
  %1231 = vmatmul.mubr.bf16.gmra.mrb[0].mxu0 %v935
  %v1232 = vpop.f32.mrb[0].mxu0
  %v1233 = vadd.f32 0.0, %v1232
  %v1234 = vpop.f32.mrb[0].mxu0
  %v1235 = vpop.f32.mrb[0].mxu0
  %v1236 = vadd.f32 0.0, %v1235
  %v1237 = vpop.f32.mrb[0].mxu0
  %1238 = vmatprep.mubr.bf16.mxu0 %v939
  %1239 = vmatmul.mubr.bf16.gmra.mrb[0].mxu0 %v938
  %v1240 = vpop.f32.mrb[0].mxu0
  %v1241 = vadd.f32 0.0, %v1240
  %v1242 = vpop.f32.mrb[0].mxu0
  %v1243 = vpop.f32.mrb[0].mxu0
  %v1244 = vadd.f32 0.0, %v1243
  %v1245 = vpop.f32.mrb[0].mxu0
  %1246 = vmatprep.mubr.bf16.mxu0 %v942
  %1247 = vmatmul.mubr.bf16.gmra.mrb[0].mxu0 %v941
  %v1248 = vpop.f32.mrb[0].mxu0
  %v1249 = vadd.f32 0.0, %v1248
  %v1250 = vpop.f32.mrb[0].mxu0
  %v1251 = vpop.f32.mrb[0].mxu0
  %v1252 = vadd.f32 0.0, %v1251
  %v1253 = vpop.f32.mrb[0].mxu0
  %1254 = vmatprep.mubr.bf16.mxu0 %v945
  %1255 = vmatmul.mubr.bf16.gmra.mrb[0].mxu0 %v944
  %v1256 = vpop.f32.mrb[0].mxu0
  %v1257 = vadd.f32 0.0, %v1256
  %v1258 = vpop.f32.mrb[0].mxu0
  %v1259 = vpop.f32.mrb[0].mxu0
  %v1260 = vadd.f32 0.0, %v1259
  %v1261 = vpop.f32.mrb[0].mxu0
  %1262 = vmatprep.mubr.bf16.mxu0 %v948
  %1263 = vmatmul.mubr.bf16.gmra.mrb[0].mxu0 %v947
  %v1264 = vpop.f32.mrb[0].mxu0
  %v1265 = vadd.f32 0.0, %v1264
  %v1266 = vpop.f32.mrb[0].mxu0
  %v1267 = vpop.f32.mrb[0].mxu0
  %v1268 = vadd.f32 0.0, %v1267
  %v1269 = vpop.f32.mrb[0].mxu0
  %1270 = vmatprep.mubr.bf16.mxu0 %v951
  %1271 = vmatmul.mubr.bf16.gmra.mrb[0].mxu0 %v950
  %v1272 = vpop.f32.mrb[0].mxu0
  %v1273 = vadd.f32 0.0, %v1272
  %v1274 = vpop.f32.mrb[0].mxu0
  %v1275 = vpop.f32.mrb[0].mxu0
  %v1276 = vadd.f32 0.0, %v1275
  %v1277 = vpop.f32.mrb[0].mxu0
  %1278 = vmatprep.mubr.bf16.mxu0 %v954
  %1279 = vmatmul.mubr.bf16.gmra.mrb[0].mxu0 %v953
  %v1280 = vpop.f32.mrb[0].mxu0
  %v1281 = vadd.f32 0.0, %v1280
  %v1282 = vpop.f32.mrb[0].mxu0
  %v1283 = vpop.f32.mrb[0].mxu0
  %v1284 = vadd.f32 0.0, %v1283
  %v1285 = vpop.f32.mrb[0].mxu0
  %1286 = vmatprep.mubr.bf16.mxu0 %v957
  %1287 = vmatmul.mubr.bf16.gmra.mrb[0].mxu0 %v956
  %v1288 = vpop.f32.mrb[0].mxu0
  %v1289 = vadd.f32 0.0, %v1288
  %v1290 = vpop.f32.mrb[0].mxu0
  %v1291 = vpop.f32.mrb[0].mxu0
  %v1292 = vadd.f32 0.0, %v1291
  %v1293 = vpop.f32.mrb[0].mxu0
  %1294 = vmatprep.mubr.bf16.mxu0 %v960
  %1295 = vmatmul.mubr.bf16.gmra.mrb[0].mxu0 %v959
  %v1296 = vpop.f32.mrb[0].mxu0
  %v1297 = vadd.f32 0.0, %v1296
  %v1298 = vpop.f32.mrb[0].mxu0
  %v1299 = vpop.f32.mrb[0].mxu0
  %v1300 = vadd.f32 0.0, %v1299
  %v1301 = vpop.f32.mrb[0].mxu0
  %1302 = vmatprep.mubr.bf16.mxu0 %v963
  %1303 = vmatmul.mubr.bf16.gmra.mrb[0].mxu0 %v962
  %v1304 = vpop.f32.mrb[0].mxu0
  %v1305 = vadd.f32 0.0, %v1304
  %v1306 = vpop.f32.mrb[0].mxu0
  %v1307 = vpop.f32.mrb[0].mxu0
  %v1308 = vadd.f32 0.0, %v1307
  %v1309 = vpop.f32.mrb[0].mxu0
  %1310 = vmatprep.mubr.bf16.mxu0 %v966
  %1311 = vmatmul.mubr.bf16.gmra.mrb[0].mxu0 %v965
  %v1312 = vpop.f32.mrb[0].mxu0
  %v1313 = vadd.f32 0.0, %v1312
  %v1314 = vpop.f32.mrb[0].mxu0
  %v1315 = vpop.f32.mrb[0].mxu0
  %v1316 = vadd.f32 0.0, %v1315
  %v1317 = vpop.f32.mrb[0].mxu0
  %1318 = vmatprep.mubr.bf16.mxu0 %v969
  %1319 = vmatmul.mubr.bf16.gmra.mrb[0].mxu0 %v968
  %v1320 = vpop.f32.mrb[0].mxu0
  %v1321 = vadd.f32 0.0, %v1320
  %v1322 = vpop.f32.mrb[0].mxu0
  %v1323 = vpop.f32.mrb[0].mxu0
  %v1324 = vadd.f32 0.0, %v1323
  %v1325 = vpop.f32.mrb[0].mxu0
  %1326 = vmatprep.mubr.bf16.mxu0 %v972
  %1327 = vmatmul.mubr.bf16.gmra.mrb[0].mxu0 %v971
  %v1328 = vpop.f32.mrb[0].mxu0
  %v1329 = vadd.f32 0.0, %v1328
  %v1330 = vpop.f32.mrb[0].mxu0
  %v1331 = vpop.f32.mrb[0].mxu0
  %v1332 = vadd.f32 0.0, %v1331
  %v1333 = vpop.f32.mrb[0].mxu0
  %1334 = vmatprep.mubr.bf16.mxu0 %v975
  %1335 = vmatmul.mubr.bf16.gmra.mrb[0].mxu0 %v974
  %v1336 = vpop.f32.mrb[0].mxu0
  %v1337 = vadd.f32 0.0, %v1336
  %v1338 = vpop.f32.mrb[0].mxu0
  %v1339 = vpop.f32.mrb[0].mxu0
  %v1340 = vadd.f32 0.0, %v1339
  %v1341 = vpop.f32.mrb[0].mxu0
  %1342 = vmatprep.mubr.bf16.mxu0 %v978
  %1343 = vmatmul.mubr.bf16.gmra.mrb[0].mxu0 %v977
  %v1344 = vpop.f32.mrb[0].mxu0
  %v1345 = vadd.f32 0.0, %v1344
  %v1346 = vpop.f32.mrb[0].mxu0
  %v1347 = vpop.f32.mrb[0].mxu0
  %v1348 = vadd.f32 0.0, %v1347
  %v1349 = vpop.f32.mrb[0].mxu0
  %1350 = vmatprep.mubr.bf16.mxu0 %v981
  %1351 = vmatmul.mubr.bf16.gmra.mrb[0].mxu0 %v980
  %v1352 = vpop.f32.mrb[0].mxu0
  %v1353 = vadd.f32 0.0, %v1352
  %v1354 = vpop.f32.mrb[0].mxu0
  %v1355 = vpop.f32.mrb[0].mxu0
  %v1356 = vadd.f32 0.0, %v1355
  %v1357 = vpop.f32.mrb[0].mxu0
  %1358 = vdwg.mxu0
  %1359 = vmatprep.subr.bf16.mxu0 0
  %1360 = vmatpush1.bf16.msra.mxu0 %v536
  %1361 = vmatprep.subr.bf16.mxu0 0
  %1362 = vmatpush1.bf16.msra.mxu0 %v537
  %1363 = vmatprep.subr.bf16.mxu0 0
  %1364 = vmatpush1.bf16.msra.mxu0 %v538
  %1365 = vmatprep.subr.bf16.mxu0 0
  %1366 = vmatpush1.bf16.msra.mxu0 %v539
  %1367 = vmatprep.subr.bf16.mxu0 0
  %1368 = vmatpush1.bf16.msra.mxu0 %v1116
  %1369 = vmatprep.subr.bf16.mxu0 0
  %1370 = vmatpush1.bf16.msra.mxu0 0
  %1371 = vmatprep.subr.bf16.mxu0 0
  %1372 = vmatpush1.bf16.msra.mxu0 0
  %1373 = vmatprep.subr.bf16.mxu0 0
  %1374 = vmatpush1.bf16.msra.mxu0 0
  %1375 = vmatprep.subr.bf16.mxu0 0
  %1376 = vmatpush1.bf16.msra.mxu0 0
  %1377 = vmatprep.subr.bf16.mxu0 0
  %1378 = vmatpush1.bf16.msra.mxu0 0
  %1379 = vmatprep.subr.bf16.mxu0 0
  %1380 = vmatpush1.bf16.msra.mxu0 0
  %1381 = vmatprep.subr.bf16.mxu0 0
  %1382 = vmatpush1.bf16.msra.mxu0 0
  %1383 = vmatprep.subr.bf16.mxu0 0
  %1384 = vmatpush1.bf16.msra.mxu0 0
  %1385 = vmatprep.subr.bf16.mxu0 0
  %1386 = vmatpush1.bf16.msra.mxu0 0
  %1387 = vmatprep.subr.bf16.mxu0 0
  %1388 = vmatpush1.bf16.msra.mxu0 0
  %1389 = vmatprep.subr.bf16.mxu0 0
  %1390 = vmatpush1.bf16.msra.mxu0 0
  %1391 = vmatprep.mubr.bf16.mxu0 0
  %1392 = vmatmul.mubr.bf16.gmra.mrb[0].mxu0 %v1037
  %v1393 = vpop.f32.mrb[0].mxu0
  %v1394 = vadd.f32 %v1153, %v1393
  %v1395 = vpop.f32.mrb[0].mxu0
  %v1396 = vpop.f32.mrb[0].mxu0
  %v1397 = vadd.f32 %v1156, %v1396
  %v1398 = vpop.f32.mrb[0].mxu0
  %1399 = vmatprep.mubr.bf16.mxu0 0
  %1400 = vmatmul.mubr.bf16.gmra.mrb[0].mxu0 %v1040
  %v1401 = vpop.f32.mrb[0].mxu0
  %v1402 = vadd.f32 %v1161, %v1401
  %v1403 = vpop.f32.mrb[0].mxu0
  %v1404 = vpop.f32.mrb[0].mxu0
  %v1405 = vadd.f32 %v1164, %v1404
  %v1406 = vpop.f32.mrb[0].mxu0
  %1407 = vmatprep.mubr.bf16.mxu0 0
  %1408 = vmatmul.mubr.bf16.gmra.mrb[0].mxu0 %v1043
  %v1409 = vpop.f32.mrb[0].mxu0
  %v1410 = vadd.f32 %v1169, %v1409
  %v1411 = vpop.f32.mrb[0].mxu0
  %v1412 = vpop.f32.mrb[0].mxu0
  %v1413 = vadd.f32 %v1172, %v1412
  %v1414 = vpop.f32.mrb[0].mxu0
  %1415 = vmatprep.mubr.bf16.mxu0 0
  %1416 = vmatmul.mubr.bf16.gmra.mrb[0].mxu0 %v1046
  %v1417 = vpop.f32.mrb[0].mxu0
  %v1418 = vadd.f32 %v1177, %v1417
  %v1419 = vpop.f32.mrb[0].mxu0
  %v1420 = vpop.f32.mrb[0].mxu0
  %v1421 = vadd.f32 %v1180, %v1420
  %v1422 = vpop.f32.mrb[0].mxu0
  %1423 = vmatprep.mubr.bf16.mxu0 0
  %1424 = vmatmul.mubr.bf16.gmra.mrb[0].mxu0 %v1049
  %v1425 = vpop.f32.mrb[0].mxu0
  %v1426 = vadd.f32 %v1185, %v1425
  %v1427 = vpop.f32.mrb[0].mxu0
  %v1428 = vpop.f32.mrb[0].mxu0
  %v1429 = vadd.f32 %v1188, %v1428
  %v1430 = vpop.f32.mrb[0].mxu0
  %1431 = vmatprep.mubr.bf16.mxu0 0
  %1432 = vmatmul.mubr.bf16.gmra.mrb[0].mxu0 %v1052
  %v1433 = vpop.f32.mrb[0].mxu0
  %v1434 = vadd.f32 %v1193, %v1433
  %v1435 = vpop.f32.mrb[0].mxu0
  %v1436 = vpop.f32.mrb[0].mxu0
  %v1437 = vadd.f32 %v1196, %v1436
  %v1438 = vpop.f32.mrb[0].mxu0
  %1439 = vmatprep.mubr.bf16.mxu0 0
  %1440 = vmatmul.mubr.bf16.gmra.mrb[0].mxu0 %v1055
  %v1441 = vpop.f32.mrb[0].mxu0
  %v1442 = vadd.f32 %v1201, %v1441
  %v1443 = vpop.f32.mrb[0].mxu0
  %v1444 = vpop.f32.mrb[0].mxu0
  %v1445 = vadd.f32 %v1204, %v1444
  %v1446 = vpop.f32.mrb[0].mxu0
  %1447 = vmatprep.mubr.bf16.mxu0 0
  %1448 = vmatmul.mubr.bf16.gmra.mrb[0].mxu0 %v1058
  %v1449 = vpop.f32.mrb[0].mxu0
  %v1450 = vadd.f32 %v1209, %v1449
  %v1451 = vpop.f32.mrb[0].mxu0
  %v1452 = vpop.f32.mrb[0].mxu0
  %v1453 = vadd.f32 %v1212, %v1452
  %v1454 = vpop.f32.mrb[0].mxu0
  %1455 = vmatprep.mubr.bf16.mxu0 0
  %1456 = vmatmul.mubr.bf16.gmra.mrb[0].mxu0 %v1061
  %v1457 = vpop.f32.mrb[0].mxu0
  %v1458 = vadd.f32 %v1217, %v1457
  %v1459 = vpop.f32.mrb[0].mxu0
  %v1460 = vpop.f32.mrb[0].mxu0
  %v1461 = vadd.f32 %v1220, %v1460
  %v1462 = vpop.f32.mrb[0].mxu0
  %1463 = vmatprep.mubr.bf16.mxu0 0
  %1464 = vmatmul.mubr.bf16.gmra.mrb[0].mxu0 %v1064
  %v1465 = vpop.f32.mrb[0].mxu0
  %v1466 = vadd.f32 %v1225, %v1465
  %v1467 = vpop.f32.mrb[0].mxu0
  %v1468 = vpop.f32.mrb[0].mxu0
  %v1469 = vadd.f32 %v1228, %v1468
  %v1470 = vpop.f32.mrb[0].mxu0
  %1471 = vmatprep.mubr.bf16.mxu0 0
  %1472 = vmatmul.mubr.bf16.gmra.mrb[0].mxu0 %v1067
  %v1473 = vpop.f32.mrb[0].mxu0
  %v1474 = vadd.f32 %v1233, %v1473
  %v1475 = vpop.f32.mrb[0].mxu0
  %v1476 = vpop.f32.mrb[0].mxu0
  %v1477 = vadd.f32 %v1236, %v1476
  %v1478 = vpop.f32.mrb[0].mxu0
  %1479 = vmatprep.mubr.bf16.mxu0 0
  %1480 = vmatmul.mubr.bf16.gmra.mrb[0].mxu0 %v1070
  %v1481 = vpop.f32.mrb[0].mxu0
  %v1482 = vadd.f32 %v1241, %v1481
  %v1483 = vpop.f32.mrb[0].mxu0
  %v1484 = vpop.f32.mrb[0].mxu0
  %v1485 = vadd.f32 %v1244, %v1484
  %v1486 = vpop.f32.mrb[0].mxu0
  %1487 = vmatprep.mubr.bf16.mxu0 0
  %1488 = vmatmul.mubr.bf16.gmra.mrb[0].mxu0 %v1073
  %v1489 = vpop.f32.mrb[0].mxu0
  %v1490 = vadd.f32 %v1249, %v1489
  %v1491 = vpop.f32.mrb[0].mxu0
  %v1492 = vpop.f32.mrb[0].mxu0
  %v1493 = vadd.f32 %v1252, %v1492
  %v1494 = vpop.f32.mrb[0].mxu0
  %1495 = vmatprep.mubr.bf16.mxu0 0
  %1496 = vmatmul.mubr.bf16.gmra.mrb[0].mxu0 %v1076
  %v1497 = vpop.f32.mrb[0].mxu0
  %v1498 = vadd.f32 %v1257, %v1497
  %v1499 = vpop.f32.mrb[0].mxu0
  %v1500 = vpop.f32.mrb[0].mxu0
  %v1501 = vadd.f32 %v1260, %v1500
  %v1502 = vpop.f32.mrb[0].mxu0
  %1503 = vmatprep.mubr.bf16.mxu0 0
  %1504 = vmatmul.mubr.bf16.gmra.mrb[0].mxu0 %v1079
  %v1505 = vpop.f32.mrb[0].mxu0
  %v1506 = vadd.f32 %v1265, %v1505
  %v1507 = vpop.f32.mrb[0].mxu0
  %v1508 = vpop.f32.mrb[0].mxu0
  %v1509 = vadd.f32 %v1268, %v1508
  %v1510 = vpop.f32.mrb[0].mxu0
  %1511 = vmatprep.mubr.bf16.mxu0 0
  %1512 = vmatmul.mubr.bf16.gmra.mrb[0].mxu0 %v1082
  %v1513 = vpop.f32.mrb[0].mxu0
  %v1514 = vadd.f32 %v1273, %v1513
  %v1515 = vpop.f32.mrb[0].mxu0
  %v1516 = vpop.f32.mrb[0].mxu0
  %v1517 = vadd.f32 %v1276, %v1516
  %v1518 = vpop.f32.mrb[0].mxu0
  %1519 = vmatprep.mubr.bf16.mxu0 0
  %1520 = vmatmul.mubr.bf16.gmra.mrb[0].mxu0 %v1085
  %v1521 = vpop.f32.mrb[0].mxu0
  %v1522 = vadd.f32 %v1281, %v1521
  %v1523 = vpop.f32.mrb[0].mxu0
  %v1524 = vpop.f32.mrb[0].mxu0
  %v1525 = vadd.f32 %v1284, %v1524
  %v1526 = vpop.f32.mrb[0].mxu0
  %1527 = vmatprep.mubr.bf16.mxu0 0
  %1528 = vmatmul.mubr.bf16.gmra.mrb[0].mxu0 %v1088
  %v1529 = vpop.f32.mrb[0].mxu0
  %v1530 = vadd.f32 %v1289, %v1529
  %v1531 = vpop.f32.mrb[0].mxu0
  %v1532 = vpop.f32.mrb[0].mxu0
  %v1533 = vadd.f32 %v1292, %v1532
  %v1534 = vpop.f32.mrb[0].mxu0
  %1535 = vmatprep.mubr.bf16.mxu0 0
  %1536 = vmatmul.mubr.bf16.gmra.mrb[0].mxu0 %v1091
  %v1537 = vpop.f32.mrb[0].mxu0
  %v1538 = vadd.f32 %v1297, %v1537
  %v1539 = vpop.f32.mrb[0].mxu0
  %v1540 = vpop.f32.mrb[0].mxu0
  %v1541 = vadd.f32 %v1300, %v1540
  %v1542 = vpop.f32.mrb[0].mxu0
  %1543 = vmatprep.mubr.bf16.mxu0 0
  %1544 = vmatmul.mubr.bf16.gmra.mrb[0].mxu0 %v1094
  %v1545 = vpop.f32.mrb[0].mxu0
  %v1546 = vadd.f32 %v1305, %v1545
  %v1547 = vpop.f32.mrb[0].mxu0
  %v1548 = vpop.f32.mrb[0].mxu0
  %v1549 = vadd.f32 %v1308, %v1548
  %v1550 = vpop.f32.mrb[0].mxu0
  %1551 = vmatprep.mubr.bf16.mxu0 0
  %1552 = vmatmul.mubr.bf16.gmra.mrb[0].mxu0 %v1097
  %v1553 = vpop.f32.mrb[0].mxu0
  %v1554 = vadd.f32 %v1313, %v1553
  %v1555 = vpop.f32.mrb[0].mxu0
  %v1556 = vpop.f32.mrb[0].mxu0
  %v1557 = vadd.f32 %v1316, %v1556
  %v1558 = vpop.f32.mrb[0].mxu0
  %1559 = vmatprep.mubr.bf16.mxu0 0
  %1560 = vmatmul.mubr.bf16.gmra.mrb[0].mxu0 %v1100
  %v1561 = vpop.f32.mrb[0].mxu0
  %v1562 = vadd.f32 %v1321, %v1561
  %v1563 = vpop.f32.mrb[0].mxu0
  %v1564 = vpop.f32.mrb[0].mxu0
  %v1565 = vadd.f32 %v1324, %v1564
  %v1566 = vpop.f32.mrb[0].mxu0
  %1567 = vmatprep.mubr.bf16.mxu0 0
  %1568 = vmatmul.mubr.bf16.gmra.mrb[0].mxu0 %v1103
  %v1569 = vpop.f32.mrb[0].mxu0
  %v1570 = vadd.f32 %v1329, %v1569
  %v1571 = vpop.f32.mrb[0].mxu0
  %v1572 = vpop.f32.mrb[0].mxu0
  %v1573 = vadd.f32 %v1332, %v1572
  %v1574 = vpop.f32.mrb[0].mxu0
  %1575 = vmatprep.mubr.bf16.mxu0 0
  %1576 = vmatmul.mubr.bf16.gmra.mrb[0].mxu0 %v1106
  %v1577 = vpop.f32.mrb[0].mxu0
  %v1578 = vadd.f32 %v1337, %v1577
  %v1579 = vpop.f32.mrb[0].mxu0
  %v1580 = vpop.f32.mrb[0].mxu0
  %v1581 = vadd.f32 %v1340, %v1580
  %v1582 = vpop.f32.mrb[0].mxu0
  %1583 = vmatprep.mubr.bf16.mxu0 0
  %1584 = vmatmul.mubr.bf16.gmra.mrb[0].mxu0 %v1109
  %v1585 = vpop.f32.mrb[0].mxu0
  %v1586 = vadd.f32 %v1345, %v1585
  %v1587 = vpop.f32.mrb[0].mxu0
  %v1588 = vpop.f32.mrb[0].mxu0
  %v1589 = vadd.f32 %v1348, %v1588
  %v1590 = vpop.f32.mrb[0].mxu0
  %1591 = vmatprep.mubr.bf16.mxu0 0
  %1592 = vmatmul.mubr.bf16.gmra.mrb[0].mxu0 %v1112
  %v1593 = vpop.f32.mrb[0].mxu0
  %v1594 = vadd.f32 %v1353, %v1593
  %v1595 = vpop.f32.mrb[0].mxu0
  %v1596 = vpop.f32.mrb[0].mxu0
  %v1597 = vadd.f32 %v1356, %v1596
  %v1598 = vpop.f32.mrb[0].mxu0
  %1599 = vdwg.mxu0
  %v1600 = vmax.f32 %v1394, %v1445
  %v1601 = vmax.f32 %v1397, %v1450
  %v1602 = vmax.f32 %v1402, %v1453
  %v1603 = vmax.f32 %v1405, %v1458
  %v1604 = vmax.f32 %v1410, %v1461
  %v1605 = vmax.f32 %v1413, %v1466
  %v1606 = vmax.f32 %v1418, %v1469
  %v1607 = vmax.f32 %v1421, %v1474
  %v1608 = vmax.f32 %v1426, %v1477
  %v1609 = vmax.f32 %v1429, %v1482
  %v1610 = vmax.f32 %v1434, %v1485
  %v1611 = vmax.f32 %v1437, %v1490
  %v1612 = vmax.f32 %v1442, %v1493
  %v1613 = vmax.f32 %v1600, %v1498
  %v1614 = vmax.f32 %v1601, %v1501
  %v1615 = vmax.f32 %v1602, %v1506
  %v1616 = vmax.f32 %v1603, %v1509
  %v1617 = vmax.f32 %v1604, %v1514
  %v1618 = vmax.f32 %v1605, %v1517
  %v1619 = vmax.f32 %v1606, %v1522
  %v1620 = vmax.f32 %v1607, %v1525
  %v1621 = vmax.f32 %v1608, %v1530
  %v1622 = vmax.f32 %v1609, %v1533
  %v1623 = vmax.f32 %v1610, %v1538
  %v1624 = vmax.f32 %v1611, %v1541
  %v1625 = vmax.f32 %v1612, %v1546
  %v1626 = vmax.f32 %v1613, %v1549
  %v1627 = vmax.f32 %v1614, %v1554
  %v1628 = vmax.f32 %v1615, %v1557
  %v1629 = vmax.f32 %v1616, %v1562
  %v1630 = vmax.f32 %v1617, %v1565
  %v1631 = vmax.f32 %v1618, %v1570
  %v1632 = vmax.f32 %v1619, %v1573
  %v1633 = vmax.f32 %v1620, %v1578
  %v1634 = vmax.f32 %v1621, %v1581
  %v1635 = vmax.f32 %v1622, %v1586
  %v1636 = vmax.f32 %v1623, %v1589
  %v1637 = vmax.f32 %v1624, %v1594
  %v1638 = vmax.f32 %v1625, %v1597
  %v1639 = vpack.c.bf16 %v1627, %v1626
  %v1640 = vpack.c.bf16 %v1629, %v1628
  %v1641 = vpack.c.bf16 %v1631, %v1630
  %v1642 = vpack.c.bf16 %v1633, %v1632
  %v1643 = vpack.c.bf16 %v1635, %v1634
  %v1644 = vpack.c.bf16 %v1637, %v1636
  %v1645 = vpack.c.bf16 %v1638, %v1638
  %v1646 = vld [vmem:[%s4] sm:$0xf]
  %v1647 = vld [vmem:[%s4 + $0x4] sm:$0xf]
  %v1648 = vld [vmem:[%s4 + $0x8] sm:$0xf]
  %v1649 = vld [vmem:[%s4 + $0xc] sm:$0xf]
  %v1650 = vld [vmem:[%s4 + $0x10] sm:$0xf]
  %v1651 = vld [vmem:[%s4 + $0x14] sm:$0xf]
  %v1652 = vld [vmem:[%s4 + $0x18] sm:$0xf]
  %v1653 = vld [vmem:[%s4 + $0x1c] sm:$0xf]
  %v1654 = vld [vmem:[%s4 + $0x20] sm:$0xf]
  %v1655 = vld [vmem:[%s4 + $0x24] sm:$0xf]
  %v1656 = vld [vmem:[%s4 + $0x28] sm:$0xf]
  %v1657 = vld [vmem:[%s4 + $0x2c] sm:$0xf]
  %v1658 = vld [vmem:[%s4 + $0x30] sm:$0xf]
  %v1659 = vld [vmem:[%s4 + $0x34] sm:$0xf]
  %v1660 = vld [vmem:[%s4 + $0x38] sm:$0xf]
  %v1661 = vld [vmem:[%s4 + $0x3c] sm:$0xf]
  %v1662 = vld [vmem:[%s4 + $0x40] sm:$0xf]
  %v1663 = vld [vmem:[%s4 + $0x44] sm:$0xf]
  %v1664 = vld [vmem:[%s4 + $0x48] sm:$0xf]
  %v1665 = vld [vmem:[%s4 + $0x4c] sm:$0xf]
  %v1666 = vld [vmem:[%s4 + $0x50] sm:$0xf]
  %v1667 = vld [vmem:[%s4 + $0x54] sm:$0xf]
  %v1668 = vld [vmem:[%s4 + $0x58] sm:$0xf]
  %v1669 = vld [vmem:[%s4 + $0x5c] sm:$0xf]
  %v1670 = vld [vmem:[%s4 + $0x60] sm:$0xf]
  %v1671 = vld [vmem:[%s4 + $0x64] sm:$0xf]
  %v1672 = vld [vmem:[%s4 + $0x68] sm:$0xf]
  %v1673 = vld [vmem:[%s4 + $0x6c] sm:$0xf]
  %v1702 = vunpack.c.l.b16 %v1646
  %v1703 = vunpack.c.l.b16 %v1647
  %v1704 = vunpack.c.l.b16 %v1648
  %v1705 = vunpack.c.l.b16 %v1649
  %v1706 = vunpack.c.l.b16 %v1650
  %v1707 = vunpack.c.l.b16 %v1651
  %v1708 = vunpack.c.l.b16 %v1652
  %v1709 = vunpack.c.l.b16 %v1653
  %v1710 = vunpack.c.l.b16 %v1654
  %v1711 = vunpack.c.l.b16 %v1655
  %v1712 = vunpack.c.l.b16 %v1656
  %v1713 = vunpack.c.l.b16 %v1657
  %v1714 = vunpack.c.l.b16 %v1658
  %v1715 = vunpack.c.l.b16 %v1659
  %v1716 = vunpack.c.l.b16 %v1660
  %v1717 = vunpack.c.l.b16 %v1661
  %v1718 = vunpack.c.l.b16 %v1662
  %v1719 = vunpack.c.l.b16 %v1663
  %v1720 = vunpack.c.l.b16 %v1664
  %v1721 = vunpack.c.l.b16 %v1665
  %v1722 = vunpack.c.l.b16 %v1666
  %v1723 = vunpack.c.l.b16 %v1667
  %v1724 = vunpack.c.l.b16 %v1668
  %v1725 = vunpack.c.l.b16 %v1669
  %v1726 = vunpack.c.l.b16 %v1670
  %v1727 = vunpack.c.l.b16 %v1671
  %v1728 = vunpack.c.l.b16 %v1672
  %v1729 = vunpack.c.l.b16 %v1673
  %v1730 = vpack.c.b16 %v1703, %v1702
  %v1731 = vpack.c.b16 %v1705, %v1704
  %v1732 = vpack.c.b16 %v1707, %v1706
  %v1733 = vpack.c.b16 %v1709, %v1708
  %v1734 = vpack.c.b16 %v1711, %v1710
  %v1735 = vpack.c.b16 %v1713, %v1712
  %v1736 = vpack.c.b16 %v1715, %v1714
  %v1737 = vpack.c.b16 %v1717, %v1716
  %v1738 = vpack.c.b16 %v1719, %v1718
  %v1739 = vpack.c.b16 %v1721, %v1720
  %v1740 = vpack.c.b16 %v1723, %v1722
  %v1741 = vpack.c.b16 %v1725, %v1724
  %v1742 = vpack.c.b16 %v1727, %v1726
  %v1743 = vpack.c.b16 %v1729, %v1728
  %vm1744 = vcmask 818176
  %v1746 = vsel %vm1744, %v1730, 0
  %v1749 = vsel %vm1744, %v1731, 0
  %v1752 = vsel %vm1744, %v1732, 0
  %v1755 = vsel %vm1744, %v1733, 0
  %v1758 = vsel %vm1744, %v1734, 0
  %v1761 = vsel %vm1744, %v1735, 0
  %v1764 = vsel %vm1744, %v1736, 0
  %v1767 = vsel %vm1744, %v1737, 0
  %v1770 = vsel %vm1744, %v1738, 0
  %v1773 = vsel %vm1744, %v1739, 0
  %v1776 = vsel %vm1744, %v1740, 0
  %v1779 = vsel %vm1744, %v1741, 0
  %v1782 = vsel %vm1744, %v1742, 0
  %v1785 = vsel %vm1744, %v1743, 0
  %v1788 = vsel %vm1114, %v1645, 0
  %1790 = vmatprep.subr.bf16.mxu0 0
  %1791 = vmatpush1.bf16.msra.mxu0 %v1639
  %1792 = vmatprep.subr.bf16.mxu0 0
  %1793 = vmatpush1.bf16.msra.mxu0 %v1640
  %1794 = vmatprep.subr.bf16.mxu0 0
  %1795 = vmatpush1.bf16.msra.mxu0 %v1641
  %1796 = vmatprep.subr.bf16.mxu0 0
  %1797 = vmatpush1.bf16.msra.mxu0 %v1642
  %1798 = vmatprep.subr.bf16.mxu0 0
  %1799 = vmatpush1.bf16.msra.mxu0 %v1643
  %1800 = vmatprep.subr.bf16.mxu0 0
  %1801 = vmatpush1.bf16.msra.mxu0 %v1644
  %1802 = vmatprep.subr.bf16.mxu0 0
  %1803 = vmatpush1.bf16.msra.mxu0 %v1788
  %1804 = vmatprep.subr.bf16.mxu0 0
  %1805 = vmatpush1.bf16.msra.mxu0 0
  %1806 = vmatprep.subr.bf16.mxu0 0
  %1807 = vmatpush1.bf16.msra.mxu0 0
  %1808 = vmatprep.subr.bf16.mxu0 0
  %1809 = vmatpush1.bf16.msra.mxu0 0
  %1810 = vmatprep.subr.bf16.mxu0 0
  %1811 = vmatpush1.bf16.msra.mxu0 0
  %1812 = vmatprep.subr.bf16.mxu0 0
  %1813 = vmatpush1.bf16.msra.mxu0 0
  %1814 = vmatprep.subr.bf16.mxu0 0
  %1815 = vmatpush1.bf16.msra.mxu0 0
  %1816 = vmatprep.subr.bf16.mxu0 0
  %1817 = vmatpush1.bf16.msra.mxu0 0
  %1818 = vmatprep.subr.bf16.mxu0 0
  %1819 = vmatpush1.bf16.msra.mxu0 0
  %1820 = vmatprep.subr.bf16.mxu0 0
  %1821 = vmatpush1.bf16.msra.mxu0 0
  %1822 = vmatprep.mubr.bf16.mxu0 0
  %1823 = vmatmul.mubr.bf16.gmra.mrb[0].mxu0 %v1746
  %v1824 = vpop.f32.mrb[0].mxu0
  %v1825 = vadd.f32 0.0, %v1824
  %v1826 = vpop.f32.mrb[0].mxu0
  %v1827 = vpop.f32.mrb[0].mxu0
  %v1828 = vadd.f32 0.0, %v1827
  %v1829 = vpop.f32.mrb[0].mxu0
  %1830 = vmatprep.mubr.bf16.mxu0 0
  %1831 = vmatmul.mubr.bf16.gmra.mrb[0].mxu0 %v1749
  %v1832 = vpop.f32.mrb[0].mxu0
  %v1833 = vadd.f32 0.0, %v1832
  %v1834 = vpop.f32.mrb[0].mxu0
  %v1835 = vpop.f32.mrb[0].mxu0
  %v1836 = vadd.f32 0.0, %v1835
  %v1837 = vpop.f32.mrb[0].mxu0
  %1838 = vmatprep.mubr.bf16.mxu0 0
  %1839 = vmatmul.mubr.bf16.gmra.mrb[0].mxu0 %v1752
  %v1840 = vpop.f32.mrb[0].mxu0
  %v1841 = vadd.f32 0.0, %v1840
  %v1842 = vpop.f32.mrb[0].mxu0
  %v1843 = vpop.f32.mrb[0].mxu0
  %v1844 = vadd.f32 0.0, %v1843
  %v1845 = vpop.f32.mrb[0].mxu0
  %1846 = vmatprep.mubr.bf16.mxu0 0
  %1847 = vmatmul.mubr.bf16.gmra.mrb[0].mxu0 %v1755
  %v1848 = vpop.f32.mrb[0].mxu0
  %v1849 = vadd.f32 0.0, %v1848
  %v1850 = vpop.f32.mrb[0].mxu0
  %v1851 = vpop.f32.mrb[0].mxu0
  %v1852 = vadd.f32 0.0, %v1851
  %v1853 = vpop.f32.mrb[0].mxu0
  %1854 = vmatprep.mubr.bf16.mxu0 0
  %1855 = vmatmul.mubr.bf16.gmra.mrb[0].mxu0 %v1758
  %v1856 = vpop.f32.mrb[0].mxu0
  %v1857 = vadd.f32 0.0, %v1856
  %v1858 = vpop.f32.mrb[0].mxu0
  %v1859 = vpop.f32.mrb[0].mxu0
  %v1860 = vadd.f32 0.0, %v1859
  %v1861 = vpop.f32.mrb[0].mxu0
  %1862 = vmatprep.mubr.bf16.mxu0 0
  %1863 = vmatmul.mubr.bf16.gmra.mrb[0].mxu0 %v1761
  %v1864 = vpop.f32.mrb[0].mxu0
  %v1865 = vadd.f32 0.0, %v1864
  %v1866 = vpop.f32.mrb[0].mxu0
  %v1867 = vpop.f32.mrb[0].mxu0
  %v1868 = vadd.f32 0.0, %v1867
  %v1869 = vpop.f32.mrb[0].mxu0
  %1870 = vmatprep.mubr.bf16.mxu0 0
  %1871 = vmatmul.mubr.bf16.gmra.mrb[0].mxu0 %v1764
  %v1872 = vpop.f32.mrb[0].mxu0
  %v1873 = vadd.f32 0.0, %v1872
  %v1874 = vpop.f32.mrb[0].mxu0
  %v1875 = vpop.f32.mrb[0].mxu0
  %v1876 = vadd.f32 0.0, %v1875
  %v1877 = vpop.f32.mrb[0].mxu0
  %1878 = vmatprep.mubr.bf16.mxu0 0
  %1879 = vmatmul.mubr.bf16.gmra.mrb[0].mxu0 %v1767
  %v1880 = vpop.f32.mrb[0].mxu0
  %v1881 = vadd.f32 0.0, %v1880
  %v1882 = vpop.f32.mrb[0].mxu0
  %v1883 = vpop.f32.mrb[0].mxu0
  %v1884 = vadd.f32 0.0, %v1883
  %v1885 = vpop.f32.mrb[0].mxu0
  %1886 = vmatprep.mubr.bf16.mxu0 0
  %1887 = vmatmul.mubr.bf16.gmra.mrb[0].mxu0 %v1770
  %v1888 = vpop.f32.mrb[0].mxu0
  %v1889 = vadd.f32 0.0, %v1888
  %v1890 = vpop.f32.mrb[0].mxu0
  %v1891 = vpop.f32.mrb[0].mxu0
  %v1892 = vadd.f32 0.0, %v1891
  %v1893 = vpop.f32.mrb[0].mxu0
  %1894 = vmatprep.mubr.bf16.mxu0 0
  %1895 = vmatmul.mubr.bf16.gmra.mrb[0].mxu0 %v1773
  %v1896 = vpop.f32.mrb[0].mxu0
  %v1897 = vadd.f32 0.0, %v1896
  %v1898 = vpop.f32.mrb[0].mxu0
  %v1899 = vpop.f32.mrb[0].mxu0
  %v1900 = vadd.f32 0.0, %v1899
  %v1901 = vpop.f32.mrb[0].mxu0
  %1902 = vmatprep.mubr.bf16.mxu0 0
  %1903 = vmatmul.mubr.bf16.gmra.mrb[0].mxu0 %v1776
  %v1904 = vpop.f32.mrb[0].mxu0
  %v1905 = vadd.f32 0.0, %v1904
  %v1906 = vpop.f32.mrb[0].mxu0
  %v1907 = vpop.f32.mrb[0].mxu0
  %v1908 = vadd.f32 0.0, %v1907
  %v1909 = vpop.f32.mrb[0].mxu0
  %1910 = vmatprep.mubr.bf16.mxu0 0
  %1911 = vmatmul.mubr.bf16.gmra.mrb[0].mxu0 %v1779
  %v1912 = vpop.f32.mrb[0].mxu0
  %v1913 = vadd.f32 0.0, %v1912
  %v1914 = vpop.f32.mrb[0].mxu0
  %v1915 = vpop.f32.mrb[0].mxu0
  %v1916 = vadd.f32 0.0, %v1915
  %v1917 = vpop.f32.mrb[0].mxu0
  %1918 = vmatprep.mubr.bf16.mxu0 0
  %1919 = vmatmul.mubr.bf16.gmra.mrb[0].mxu0 %v1782
  %v1920 = vpop.f32.mrb[0].mxu0
  %v1921 = vadd.f32 0.0, %v1920
  %v1922 = vpop.f32.mrb[0].mxu0
  %v1923 = vpop.f32.mrb[0].mxu0
  %v1924 = vadd.f32 0.0, %v1923
  %v1925 = vpop.f32.mrb[0].mxu0
  %1926 = vmatprep.mubr.bf16.mxu0 0
  %1927 = vmatmul.mubr.bf16.gmra.mrb[0].mxu0 %v1785
  %v1928 = vpop.f32.mrb[0].mxu0
  %v1929 = vadd.f32 0.0, %v1928
  %v1930 = vpop.f32.mrb[0].mxu0
  %v1931 = vpop.f32.mrb[0].mxu0
  %v1932 = vadd.f32 0.0, %v1931
  %v1933 = vpop.f32.mrb[0].mxu0
  %1934 = vdwg.mxu0
  %v1935 = vpack.c.bf16 %v1828, %v1825
  %v1936 = vpack.c.bf16 %v1836, %v1833
  %v1937 = vpack.c.bf16 %v1844, %v1841
  %v1938 = vpack.c.bf16 %v1852, %v1849
  %v1939 = vpack.c.bf16 %v1860, %v1857
  %v1940 = vpack.c.bf16 %v1868, %v1865
  %v1941 = vpack.c.bf16 %v1876, %v1873
  %v1942 = vpack.c.bf16 %v1884, %v1881
  %v1943 = vpack.c.bf16 %v1892, %v1889
  %v1944 = vpack.c.bf16 %v1900, %v1897
  %v1945 = vpack.c.bf16 %v1908, %v1905
  %v1946 = vpack.c.bf16 %v1916, %v1913
  %v1947 = vpack.c.bf16 %v1924, %v1921
  %v1948 = vpack.c.bf16 %v1932, %v1929
  %v1949 = vld [vmem:[%s5] sm:$0xf]
  %v1950 = vld [vmem:[%s5 + $0x4] sm:$0xf]
  %v1951 = vld [vmem:[%s5 + $0x8] sm:$0xf]
  %v1952 = vld [vmem:[%s5 + $0xc] sm:$0xf]
  %v1953 = vld [vmem:[%s5 + $0x10] sm:$0xf]
  %v1954 = vld [vmem:[%s5 + $0x14] sm:$0xf]
  %v1955 = vld [vmem:[%s5 + $0x18] sm:$0xf]
  %v1956 = vld [vmem:[%s5 + $0x1c] sm:$0xf]
  %s1957 = scalar_lea.vmem %s5, 32
  %v1958 = vld [vmem:[%s1957] sm:$0xf]
  %v1959 = vld [vmem:[%s1957 + $0x4] sm:$0xf]
  %v1960 = vld [vmem:[%s1957 + $0x8] sm:$0xf]
  %v1961 = vld [vmem:[%s1957 + $0xc] sm:$0xf]
  %v1962 = vld [vmem:[%s1957 + $0x10] sm:$0xf]
  %v1963 = vld [vmem:[%s1957 + $0x14] sm:$0xf]
  %v1964 = vld [vmem:[%s1957 + $0x18] sm:$0xf]
  %v1965 = vld [vmem:[%s1957 + $0x1c] sm:$0xf]
  %vm1970 = vcmask 1043456
  %v1971 = vrot.slane %v1938, 4
  %v1972 = vrot.slane %v1939, 4
  %v1973 = vsel %vm1970, %v1971, %v1972
  %v1974 = vrot.slane %v1940, 4
  %v1975 = vsel %vm1970, %v1972, %v1974
  %v1976 = vrot.slane %v1941, 4
  %v1977 = vsel %vm1970, %v1974, %v1976
  %v1986 = vunpack.c.l.b16 %v1958
  %v1987 = vunpack.c.l.b16 %v1959
  %v1988 = vunpack.c.l.b16 %v1960
  %v1989 = vunpack.c.l.b16 %v1961
  %v1990 = vunpack.c.l.b16 %v1962
  %v1991 = vunpack.c.l.b16 %v1963
  %v1992 = vunpack.c.l.b16 %v1964
  %v1993 = vunpack.c.l.b16 %v1965
  %v1994 = vpack.c.b16 %v1987, %v1986
  %v1995 = vpack.c.b16 %v1989, %v1988
  %v1996 = vpack.c.b16 %v1991, %v1990
  %v1997 = vpack.c.b16 %v1993, %v1992
  %vm2002 = vcmask 523264
  %v2004 = vsel %vm2002, %v1973, 0
  %v2007 = vsel %vm2002, %v1975, 0
  %v2010 = vsel %vm2002, %v1977, 0
  %v2013 = vsel %vm2002, %v1976, 0
  %2015 = vmatprep.subr.bf16.mxu0 0
  %2016 = vmatpush1.bf16.msra.mxu0 %v1994
  %2017 = vmatprep.subr.bf16.mxu0 0
  %2018 = vmatpush1.bf16.msra.mxu0 %v1995
  %2019 = vmatprep.subr.bf16.mxu0 0
  %2020 = vmatpush1.bf16.msra.mxu0 %v1996
  %2021 = vmatprep.subr.bf16.mxu0 0
  %2022 = vmatpush1.bf16.msra.mxu0 %v1997
  %2023 = vmatprep.subr.bf16.mxu0 0
  %2024 = vmatpush1.bf16.msra.mxu0 0
  %2025 = vmatprep.subr.bf16.mxu0 0
  %2026 = vmatpush1.bf16.msra.mxu0 0
  %2027 = vmatprep.subr.bf16.mxu0 0
  %2028 = vmatpush1.bf16.msra.mxu0 0
  %2029 = vmatprep.subr.bf16.mxu0 0
  %2030 = vmatpush1.bf16.msra.mxu0 0
  %2031 = vmatprep.subr.bf16.mxu0 0
  %2032 = vmatpush1.bf16.msra.mxu0 0
  %2033 = vmatprep.subr.bf16.mxu0 0
  %2034 = vmatpush1.bf16.msra.mxu0 0
  %2035 = vmatprep.subr.bf16.mxu0 0
  %2036 = vmatpush1.bf16.msra.mxu0 0
  %2037 = vmatprep.subr.bf16.mxu0 0
  %2038 = vmatpush1.bf16.msra.mxu0 0
  %2039 = vmatprep.subr.bf16.mxu0 0
  %2040 = vmatpush1.bf16.msra.mxu0 0
  %2041 = vmatprep.subr.bf16.mxu0 0
  %2042 = vmatpush1.bf16.msra.mxu0 0
  %2043 = vmatprep.subr.bf16.mxu0 0
  %2044 = vmatpush1.bf16.msra.mxu0 0
  %2045 = vmatprep.subr.bf16.mxu0 0
  %2046 = vmatpush1.bf16.msra.mxu0 0
  %2047 = vmatprep.mubr.bf16.mxu0 0
  %2048 = vmatmul.mubr.bf16.gmra.mrb[0].mxu0 %v2004
  %v2049 = vpop.f32.mrb[0].mxu0
  %v2050 = vadd.f32 0.0, %v2049
  %v2051 = vpop.f32.mrb[0].mxu0
  %v2052 = vpop.f32.mrb[0].mxu0
  %v2053 = vadd.f32 0.0, %v2052
  %v2054 = vpop.f32.mrb[0].mxu0
  %2055 = vmatprep.mubr.bf16.mxu0 0
  %2056 = vmatmul.mubr.bf16.gmra.mrb[0].mxu0 %v2007
  %v2057 = vpop.f32.mrb[0].mxu0
  %v2058 = vadd.f32 0.0, %v2057
  %v2059 = vpop.f32.mrb[0].mxu0
  %v2060 = vpop.f32.mrb[0].mxu0
  %v2061 = vadd.f32 0.0, %v2060
  %v2062 = vpop.f32.mrb[0].mxu0
  %2063 = vmatprep.mubr.bf16.mxu0 0
  %2064 = vmatmul.mubr.bf16.gmra.mrb[0].mxu0 %v2010
  %v2065 = vpop.f32.mrb[0].mxu0
  %v2066 = vadd.f32 0.0, %v2065
  %v2067 = vpop.f32.mrb[0].mxu0
  %v2068 = vpop.f32.mrb[0].mxu0
  %v2069 = vadd.f32 0.0, %v2068
  %v2070 = vpop.f32.mrb[0].mxu0
  %2071 = vmatprep.mubr.bf16.mxu0 0
  %2072 = vmatmul.mubr.bf16.gmra.mrb[0].mxu0 %v2013
  %v2073 = vpop.f32.mrb[0].mxu0
  %v2074 = vadd.f32 0.0, %v2073
  %v2075 = vpop.f32.mrb[0].mxu0
  %v2076 = vpop.f32.mrb[0].mxu0
  %v2077 = vpop.f32.mrb[0].mxu0
  %2078 = vdwg.mxu0
  %v2087 = vunpack.c.l.b16 %v1949
  %v2088 = vunpack.c.l.b16 %v1950
  %v2089 = vunpack.c.l.b16 %v1951
  %v2090 = vunpack.c.l.b16 %v1952
  %v2091 = vunpack.c.l.b16 %v1953
  %v2092 = vunpack.c.l.b16 %v1954
  %v2093 = vunpack.c.l.b16 %v1955
  %v2094 = vunpack.c.l.b16 %v1956
  %v2095 = vpack.c.b16 %v2088, %v2087
  %v2096 = vpack.c.b16 %v2090, %v2089
  %v2097 = vpack.c.b16 %v2092, %v2091
  %v2098 = vpack.c.b16 %v2094, %v2093
  %v2104 = vsel %vm2002, %v1935, 0
  %v2107 = vsel %vm2002, %v1936, 0
  %v2110 = vsel %vm2002, %v1937, 0
  %v2113 = vsel %vm2002, %v1938, 0
  %2115 = vmatprep.subr.bf16.mxu0 0
  %2116 = vmatpush1.bf16.msra.mxu0 %v2095
  %2117 = vmatprep.subr.bf16.mxu0 0
  %2118 = vmatpush1.bf16.msra.mxu0 %v2096
  %2119 = vmatprep.subr.bf16.mxu0 0
  %2120 = vmatpush1.bf16.msra.mxu0 %v2097
  %2121 = vmatprep.subr.bf16.mxu0 0
  %2122 = vmatpush1.bf16.msra.mxu0 %v2098
  %2123 = vmatprep.subr.bf16.mxu0 0
  %2124 = vmatpush1.bf16.msra.mxu0 0
  %2125 = vmatprep.subr.bf16.mxu0 0
  %2126 = vmatpush1.bf16.msra.mxu0 0
  %2127 = vmatprep.subr.bf16.mxu0 0
  %2128 = vmatpush1.bf16.msra.mxu0 0
  %2129 = vmatprep.subr.bf16.mxu0 0
  %2130 = vmatpush1.bf16.msra.mxu0 0
  %2131 = vmatprep.subr.bf16.mxu0 0
  %2132 = vmatpush1.bf16.msra.mxu0 0
  %2133 = vmatprep.subr.bf16.mxu0 0
  %2134 = vmatpush1.bf16.msra.mxu0 0
  %2135 = vmatprep.subr.bf16.mxu0 0
  %2136 = vmatpush1.bf16.msra.mxu0 0
  %2137 = vmatprep.subr.bf16.mxu0 0
  %2138 = vmatpush1.bf16.msra.mxu0 0
  %2139 = vmatprep.subr.bf16.mxu0 0
  %2140 = vmatpush1.bf16.msra.mxu0 0
  %2141 = vmatprep.subr.bf16.mxu0 0
  %2142 = vmatpush1.bf16.msra.mxu0 0
  %2143 = vmatprep.subr.bf16.mxu0 0
  %2144 = vmatpush1.bf16.msra.mxu0 0
  %2145 = vmatprep.subr.bf16.mxu0 0
  %2146 = vmatpush1.bf16.msra.mxu0 0
  %2147 = vmatprep.mubr.bf16.mxu0 0
  %2148 = vmatmul.mubr.bf16.gmra.mrb[0].mxu0 %v2104
  %v2149 = vpop.f32.mrb[0].mxu0
  %v2150 = vadd.f32 %v2050, %v2149
  %v2151 = vpop.f32.mrb[0].mxu0
  %v2152 = vpop.f32.mrb[0].mxu0
  %v2153 = vadd.f32 %v2053, %v2152
  %v2154 = vpop.f32.mrb[0].mxu0
  %2155 = vmatprep.mubr.bf16.mxu0 0
  %2156 = vmatmul.mubr.bf16.gmra.mrb[0].mxu0 %v2107
  %v2157 = vpop.f32.mrb[0].mxu0
  %v2158 = vadd.f32 %v2058, %v2157
  %v2159 = vpop.f32.mrb[0].mxu0
  %v2160 = vpop.f32.mrb[0].mxu0
  %v2161 = vadd.f32 %v2061, %v2160
  %v2162 = vpop.f32.mrb[0].mxu0
  %2163 = vmatprep.mubr.bf16.mxu0 0
  %2164 = vmatmul.mubr.bf16.gmra.mrb[0].mxu0 %v2110
  %v2165 = vpop.f32.mrb[0].mxu0
  %v2166 = vadd.f32 %v2066, %v2165
  %v2167 = vpop.f32.mrb[0].mxu0
  %v2168 = vpop.f32.mrb[0].mxu0
  %v2169 = vadd.f32 %v2069, %v2168
  %v2170 = vpop.f32.mrb[0].mxu0
  %2171 = vmatprep.mubr.bf16.mxu0 0
  %2172 = vmatmul.mubr.bf16.gmra.mrb[0].mxu0 %v2113
  %v2173 = vpop.f32.mrb[0].mxu0
  %v2174 = vadd.f32 %v2074, %v2173
  %v2175 = vpop.f32.mrb[0].mxu0
  %v2176 = vpop.f32.mrb[0].mxu0
  %v2177 = vpop.f32.mrb[0].mxu0
  %2178 = vdwg.mxu0
  %s2179 = scalar_lea.vmem %s5, 64
  %v2180 = vld [vmem:[%s2179] sm:$0xf]
  %v2181 = vld [vmem:[%s2179 + $0x4] sm:$0xf]
  %v2182 = vld [vmem:[%s2179 + $0x8] sm:$0xf]
  %v2183 = vld [vmem:[%s2179 + $0xc] sm:$0xf]
  %v2184 = vld [vmem:[%s2179 + $0x10] sm:$0xf]
  %v2185 = vld [vmem:[%s2179 + $0x14] sm:$0xf]
  %v2186 = vld [vmem:[%s2179 + $0x18] sm:$0xf]
  %v2187 = vld [vmem:[%s2179 + $0x1c] sm:$0xf]
  %v2196 = vunpack.c.l.b16 %v2180
  %v2197 = vunpack.c.l.b16 %v2181
  %v2198 = vunpack.c.l.b16 %v2182
  %v2199 = vunpack.c.l.b16 %v2183
  %v2200 = vunpack.c.l.b16 %v2184
  %v2201 = vunpack.c.l.b16 %v2185
  %v2202 = vunpack.c.l.b16 %v2186
  %v2203 = vunpack.c.l.b16 %v2187
  %v2204 = vpack.c.b16 %v2197, %v2196
  %v2205 = vpack.c.b16 %v2199, %v2198
  %v2206 = vpack.c.b16 %v2201, %v2200
  %v2207 = vpack.c.b16 %v2203, %v2202
  %v2213 = vsel %vm2002, %v1942, 0
  %v2216 = vsel %vm2002, %v1943, 0
  %v2219 = vsel %vm2002, %v1944, 0
  %v2222 = vsel %vm2002, %v1945, 0
  %2224 = vmatprep.subr.bf16.mxu0 0
  %2225 = vmatpush1.bf16.msra.mxu0 %v2204
  %2226 = vmatprep.subr.bf16.mxu0 0
  %2227 = vmatpush1.bf16.msra.mxu0 %v2205
  %2228 = vmatprep.subr.bf16.mxu0 0
  %2229 = vmatpush1.bf16.msra.mxu0 %v2206
  %2230 = vmatprep.subr.bf16.mxu0 0
  %2231 = vmatpush1.bf16.msra.mxu0 %v2207
  %2232 = vmatprep.subr.bf16.mxu0 0
  %2233 = vmatpush1.bf16.msra.mxu0 0
  %2234 = vmatprep.subr.bf16.mxu0 0
  %2235 = vmatpush1.bf16.msra.mxu0 0
  %2236 = vmatprep.subr.bf16.mxu0 0
  %2237 = vmatpush1.bf16.msra.mxu0 0
  %2238 = vmatprep.subr.bf16.mxu0 0
  %2239 = vmatpush1.bf16.msra.mxu0 0
  %2240 = vmatprep.subr.bf16.mxu0 0
  %2241 = vmatpush1.bf16.msra.mxu0 0
  %2242 = vmatprep.subr.bf16.mxu0 0
  %2243 = vmatpush1.bf16.msra.mxu0 0
  %2244 = vmatprep.subr.bf16.mxu0 0
  %2245 = vmatpush1.bf16.msra.mxu0 0
  %2246 = vmatprep.subr.bf16.mxu0 0
  %2247 = vmatpush1.bf16.msra.mxu0 0
  %2248 = vmatprep.subr.bf16.mxu0 0
  %2249 = vmatpush1.bf16.msra.mxu0 0
  %2250 = vmatprep.subr.bf16.mxu0 0
  %2251 = vmatpush1.bf16.msra.mxu0 0
  %2252 = vmatprep.subr.bf16.mxu0 0
  %2253 = vmatpush1.bf16.msra.mxu0 0
  %2254 = vmatprep.subr.bf16.mxu0 0
  %2255 = vmatpush1.bf16.msra.mxu0 0
  %2256 = vmatprep.mubr.bf16.mxu0 0
  %2257 = vmatmul.mubr.bf16.gmra.mrb[0].mxu0 %v2213
  %v2258 = vpop.f32.mrb[0].mxu0
  %v2259 = vadd.f32 0.0, %v2258
  %v2260 = vpop.f32.mrb[0].mxu0
  %v2261 = vpop.f32.mrb[0].mxu0
  %v2262 = vadd.f32 0.0, %v2261
  %v2263 = vpop.f32.mrb[0].mxu0
  %2264 = vmatprep.mubr.bf16.mxu0 0
  %2265 = vmatmul.mubr.bf16.gmra.mrb[0].mxu0 %v2216
  %v2266 = vpop.f32.mrb[0].mxu0
  %v2267 = vadd.f32 0.0, %v2266
  %v2268 = vpop.f32.mrb[0].mxu0
  %v2269 = vpop.f32.mrb[0].mxu0
  %v2270 = vadd.f32 0.0, %v2269
  %v2271 = vpop.f32.mrb[0].mxu0
  %2272 = vmatprep.mubr.bf16.mxu0 0
  %2273 = vmatmul.mubr.bf16.gmra.mrb[0].mxu0 %v2219
  %v2274 = vpop.f32.mrb[0].mxu0
  %v2275 = vadd.f32 0.0, %v2274
  %v2276 = vpop.f32.mrb[0].mxu0
  %v2277 = vpop.f32.mrb[0].mxu0
  %v2278 = vadd.f32 0.0, %v2277
  %v2279 = vpop.f32.mrb[0].mxu0
  %2280 = vmatprep.mubr.bf16.mxu0 0
  %2281 = vmatmul.mubr.bf16.gmra.mrb[0].mxu0 %v2222
  %v2282 = vpop.f32.mrb[0].mxu0
  %v2283 = vadd.f32 0.0, %v2282
  %v2284 = vpop.f32.mrb[0].mxu0
  %v2285 = vpop.f32.mrb[0].mxu0
  %v2286 = vpop.f32.mrb[0].mxu0
  %2287 = vdwg.mxu0
  %v2288 = vadd.f32 %v2150, %v2259
  %v2289 = vadd.f32 %v2153, %v2262
  %v2290 = vadd.f32 %v2158, %v2267
  %v2291 = vadd.f32 %v2161, %v2270
  %v2292 = vadd.f32 %v2166, %v2275
  %v2293 = vadd.f32 %v2169, %v2278
  %v2294 = vadd.f32 %v2174, %v2283
  %s2295 = scalar_lea.vmem %s5, 96
  %v2296 = vld [vmem:[%s2295] sm:$0xf]
  %v2297 = vld [vmem:[%s2295 + $0x4] sm:$0xf]
  %v2298 = vld [vmem:[%s2295 + $0x8] sm:$0xf]
  %v2299 = vld [vmem:[%s2295 + $0xc] sm:$0xf]
  %v2300 = vld [vmem:[%s2295 + $0x10] sm:$0xf]
  %v2301 = vld [vmem:[%s2295 + $0x14] sm:$0xf]
  %v2302 = vld [vmem:[%s2295 + $0x18] sm:$0xf]
  %v2303 = vld [vmem:[%s2295 + $0x1c] sm:$0xf]
  %v2308 = vrot.slane %v1945, 4
  %v2309 = vrot.slane %v1946, 4
  %v2310 = vsel %vm1970, %v2308, %v2309
  %v2311 = vrot.slane %v1947, 4
  %v2312 = vsel %vm1970, %v2309, %v2311
  %v2313 = vrot.slane %v1948, 4
  %v2314 = vsel %vm1970, %v2311, %v2313
  %v2323 = vunpack.c.l.b16 %v2296
  %v2324 = vunpack.c.l.b16 %v2297
  %v2325 = vunpack.c.l.b16 %v2298
  %v2326 = vunpack.c.l.b16 %v2299
  %v2327 = vunpack.c.l.b16 %v2300
  %v2328 = vunpack.c.l.b16 %v2301
  %v2329 = vunpack.c.l.b16 %v2302
  %v2330 = vunpack.c.l.b16 %v2303
  %v2331 = vpack.c.b16 %v2324, %v2323
  %v2332 = vpack.c.b16 %v2326, %v2325
  %v2333 = vpack.c.b16 %v2328, %v2327
  %v2334 = vpack.c.b16 %v2330, %v2329
  %v2340 = vsel %vm2002, %v2310, 0
  %v2343 = vsel %vm2002, %v2312, 0
  %v2346 = vsel %vm2002, %v2314, 0
  %v2349 = vsel %vm2002, %v2313, 0
  %2351 = vmatprep.subr.bf16.mxu0 0
  %2352 = vmatpush1.bf16.msra.mxu0 %v2331
  %2353 = vmatprep.subr.bf16.mxu0 0
  %2354 = vmatpush1.bf16.msra.mxu0 %v2332
  %2355 = vmatprep.subr.bf16.mxu0 0
  %2356 = vmatpush1.bf16.msra.mxu0 %v2333
  %2357 = vmatprep.subr.bf16.mxu0 0
  %2358 = vmatpush1.bf16.msra.mxu0 %v2334
  %2359 = vmatprep.subr.bf16.mxu0 0
  %2360 = vmatpush1.bf16.msra.mxu0 0
  %2361 = vmatprep.subr.bf16.mxu0 0
  %2362 = vmatpush1.bf16.msra.mxu0 0
  %2363 = vmatprep.subr.bf16.mxu0 0
  %2364 = vmatpush1.bf16.msra.mxu0 0
  %2365 = vmatprep.subr.bf16.mxu0 0
  %2366 = vmatpush1.bf16.msra.mxu0 0
  %2367 = vmatprep.subr.bf16.mxu0 0
  %2368 = vmatpush1.bf16.msra.mxu0 0
  %2369 = vmatprep.subr.bf16.mxu0 0
  %2370 = vmatpush1.bf16.msra.mxu0 0
  %2371 = vmatprep.subr.bf16.mxu0 0
  %2372 = vmatpush1.bf16.msra.mxu0 0
  %2373 = vmatprep.subr.bf16.mxu0 0
  %2374 = vmatpush1.bf16.msra.mxu0 0
  %2375 = vmatprep.subr.bf16.mxu0 0
  %2376 = vmatpush1.bf16.msra.mxu0 0
  %2377 = vmatprep.subr.bf16.mxu0 0
  %2378 = vmatpush1.bf16.msra.mxu0 0
  %2379 = vmatprep.subr.bf16.mxu0 0
  %2380 = vmatpush1.bf16.msra.mxu0 0
  %2381 = vmatprep.subr.bf16.mxu0 0
  %2382 = vmatpush1.bf16.msra.mxu0 0
  %2383 = vmatprep.mubr.bf16.mxu0 0
  %2384 = vmatmul.mubr.bf16.gmra.mrb[0].mxu0 %v2340
  %v2385 = vpop.f32.mrb[0].mxu0
  %v2386 = vadd.f32 0.0, %v2385
  %v2387 = vpop.f32.mrb[0].mxu0
  %v2388 = vpop.f32.mrb[0].mxu0
  %v2389 = vadd.f32 0.0, %v2388
  %v2390 = vpop.f32.mrb[0].mxu0
  %2391 = vmatprep.mubr.bf16.mxu0 0
  %2392 = vmatmul.mubr.bf16.gmra.mrb[0].mxu0 %v2343
  %v2393 = vpop.f32.mrb[0].mxu0
  %v2394 = vadd.f32 0.0, %v2393
  %v2395 = vpop.f32.mrb[0].mxu0
  %v2396 = vpop.f32.mrb[0].mxu0
  %v2397 = vadd.f32 0.0, %v2396
  %v2398 = vpop.f32.mrb[0].mxu0
  %2399 = vmatprep.mubr.bf16.mxu0 0
  %2400 = vmatmul.mubr.bf16.gmra.mrb[0].mxu0 %v2346
  %v2401 = vpop.f32.mrb[0].mxu0
  %v2402 = vadd.f32 0.0, %v2401
  %v2403 = vpop.f32.mrb[0].mxu0
  %v2404 = vpop.f32.mrb[0].mxu0
  %v2405 = vadd.f32 0.0, %v2404
  %v2406 = vpop.f32.mrb[0].mxu0
  %2407 = vmatprep.mubr.bf16.mxu0 0
  %2408 = vmatmul.mubr.bf16.gmra.mrb[0].mxu0 %v2349
  %v2409 = vpop.f32.mrb[0].mxu0
  %v2410 = vadd.f32 0.0, %v2409
  %v2411 = vpop.f32.mrb[0].mxu0
  %v2412 = vpop.f32.mrb[0].mxu0
  %v2413 = vpop.f32.mrb[0].mxu0
  %2414 = vdwg.mxu0
  %v2415 = vadd.f32 %v2288, %v2386
  %v2416 = vadd.f32 %v2289, %v2389
  %v2417 = vadd.f32 %v2290, %v2394
  %v2418 = vadd.f32 %v2291, %v2397
  %v2419 = vadd.f32 %v2292, %v2402
  %v2420 = vadd.f32 %v2293, %v2405
  %v2421 = vadd.f32 %v2294, %v2410
  %v2422 = vld [vmem:[%s6] sm:$0x1]
  %v2424 = vlaneseq
  %v2425 = vshrl.u32 %v2424, 7
  %v2426 = vsub.s32 0, %v2425
  %v2427 = vrot.slane %v2422, %v2426
  %v2429 = vadd.f32 %v2415, %v2427
  %v2430 = vadd.f32 %v2416, %v2427
  %v2431 = vadd.f32 %v2417, %v2427
  %v2432 = vadd.f32 %v2418, %v2427
  %v2433 = vadd.f32 %v2419, %v2427
  %v2434 = vadd.f32 %v2420, %v2427
  %v2435 = vadd.f32 %v2421, %v2427
  %v2436 = vmax.f32 %v2429, 0.0
  %v2437 = vmax.f32 %v2430, 0.0
  %v2438 = vmax.f32 %v2431, 0.0
  %v2439 = vmax.f32 %v2432, 0.0
  %v2440 = vmax.f32 %v2433, 0.0
  %v2441 = vmax.f32 %v2434, 0.0
  %v2442 = vmax.f32 %v2435, 0.0
  %v2443 = vpack.c.bf16 %v2437, %v2436
  %v2444 = vpack.c.bf16 %v2439, %v2438
  %v2445 = vpack.c.bf16 %v2441, %v2440
  %v2446 = vpack.c.bf16 %v2442, %v2442
  %v2447 = vld [vmem:[%s7] sm:$0x1]
  %v2449 = vlaneseq
  %v2450 = vshrl.u32 %v2449, 7
  %v2451 = vsub.s32 0, %v2450
  %v2452 = vrot.slane %v2447, %v2451
  %2453 = vrot.lane.b32.xlu0 %v2452, 32
  %v2454 = vpop.permute.xlu0 %2453
  %v2456 = vadd.f32 %v2415, %v2454
  %v2457 = vadd.f32 %v2416, %v2454
  %v2458 = vadd.f32 %v2417, %v2454
  %v2459 = vadd.f32 %v2418, %v2454
  %v2460 = vadd.f32 %v2419, %v2454
  %v2461 = vadd.f32 %v2420, %v2454
  %v2462 = vadd.f32 %v2421, %v2454
  %v2463 = vld [vmem:[%s8] sm:$0xf]
  %v2464 = vld [vmem:[%s8 + $0x4] sm:$0xf]
  %v2465 = vld [vmem:[%s8 + $0x8] sm:$0xf]
  %v2466 = vld [vmem:[%s8 + $0xc] sm:$0xf]
  %v2467 = vld [vmem:[%s8 + $0x10] sm:$0xf]
  %v2468 = vld [vmem:[%s8 + $0x14] sm:$0xf]
  %v2469 = vld [vmem:[%s8 + $0x18] sm:$0xf]
  %v2470 = vld [vmem:[%s8 + $0x1c] sm:$0xf]
  %v2471 = vld [vmem:[%s8 + $0x20] sm:$0xf]
  %v2472 = vld [vmem:[%s8 + $0x24] sm:$0xf]
  %v2473 = vld [vmem:[%s8 + $0x28] sm:$0xf]
  %v2474 = vld [vmem:[%s8 + $0x2c] sm:$0xf]
  %v2475 = vld [vmem:[%s8 + $0x30] sm:$0xf]
  %v2476 = vld [vmem:[%s8 + $0x34] sm:$0xf]
  %v2477 = vld [vmem:[%s8 + $0x38] sm:$0xf]
  %v2478 = vld [vmem:[%s8 + $0x3c] sm:$0xf]
  %v2495 = vunpack.c.l.b16 %v2463
  %v2496 = vunpack.c.l.b16 %v2464
  %v2497 = vunpack.c.l.b16 %v2465
  %v2498 = vunpack.c.l.b16 %v2466
  %v2499 = vunpack.c.l.b16 %v2467
  %v2500 = vunpack.c.l.b16 %v2468
  %v2501 = vunpack.c.l.b16 %v2469
  %v2502 = vunpack.c.l.b16 %v2470
  %v2503 = vunpack.c.l.b16 %v2471
  %v2504 = vunpack.c.l.b16 %v2472
  %v2505 = vunpack.c.l.b16 %v2473
  %v2506 = vunpack.c.l.b16 %v2474
  %v2507 = vunpack.c.l.b16 %v2475
  %v2508 = vunpack.c.l.b16 %v2476
  %v2509 = vunpack.c.l.b16 %v2477
  %v2510 = vunpack.c.l.b16 %v2478
  %v2511 = vpack.c.b16 %v2496, %v2495
  %v2512 = vpack.c.b16 %v2498, %v2497
  %v2513 = vpack.c.b16 %v2500, %v2499
  %v2514 = vpack.c.b16 %v2502, %v2501
  %v2515 = vpack.c.b16 %v2504, %v2503
  %v2516 = vpack.c.b16 %v2506, %v2505
  %v2517 = vpack.c.b16 %v2508, %v2507
  %v2518 = vpack.c.b16 %v2510, %v2509
  %vm2519 = vcmask 400384
  %v2521 = vsel %vm2519, %v2511, 0
  %v2524 = vsel %vm2519, %v2512, 0
  %v2527 = vsel %vm2519, %v2513, 0
  %v2530 = vsel %vm2519, %v2514, 0
  %v2533 = vsel %vm2519, %v2515, 0
  %v2536 = vsel %vm2519, %v2516, 0
  %v2539 = vsel %vm2519, %v2517, 0
  %v2542 = vsel %vm2519, %v2518, 0
  %vm2544 = vcmask 1040384
  %v2545 = vsel 0, 4294967295, 65535
  %v2546 = vsel %vm2544, %v2545, 0
  %v2548 = vand.u32 %v2446, %v2546
  %2550 = vmatprep.subr.bf16.mxu0 0
  %2551 = vmatpush1.bf16.msra.mxu0 %v2443
  %2552 = vmatprep.subr.bf16.mxu0 0
  %2553 = vmatpush1.bf16.msra.mxu0 %v2444
  %2554 = vmatprep.subr.bf16.mxu0 0
  %2555 = vmatpush1.bf16.msra.mxu0 %v2445
  %2556 = vmatprep.subr.bf16.mxu0 0
  %2557 = vmatpush1.bf16.msra.mxu0 %v2548
  %2558 = vmatprep.subr.bf16.mxu0 0
  %2559 = vmatpush1.bf16.msra.mxu0 0
  %2560 = vmatprep.subr.bf16.mxu0 0
  %2561 = vmatpush1.bf16.msra.mxu0 0
  %2562 = vmatprep.subr.bf16.mxu0 0
  %2563 = vmatpush1.bf16.msra.mxu0 0
  %2564 = vmatprep.subr.bf16.mxu0 0
  %2565 = vmatpush1.bf16.msra.mxu0 0
  %2566 = vmatprep.subr.bf16.mxu0 0
  %2567 = vmatpush1.bf16.msra.mxu0 0
  %2568 = vmatprep.subr.bf16.mxu0 0
  %2569 = vmatpush1.bf16.msra.mxu0 0
  %2570 = vmatprep.subr.bf16.mxu0 0
  %2571 = vmatpush1.bf16.msra.mxu0 0
  %2572 = vmatprep.subr.bf16.mxu0 0
  %2573 = vmatpush1.bf16.msra.mxu0 0
  %2574 = vmatprep.subr.bf16.mxu0 0
  %2575 = vmatpush1.bf16.msra.mxu0 0
  %2576 = vmatprep.subr.bf16.mxu0 0
  %2577 = vmatpush1.bf16.msra.mxu0 0
  %2578 = vmatprep.subr.bf16.mxu0 0
  %2579 = vmatpush1.bf16.msra.mxu0 0
  %2580 = vmatprep.subr.bf16.mxu0 0
  %2581 = vmatpush1.bf16.msra.mxu0 0
  %2582 = vmatprep.mubr.bf16.mxu0 0
  %2583 = vmatmul.mubr.bf16.gmra.mrb[0].mxu0 %v2521
  %v2584 = vpop.f32.mrb[0].mxu0
  %v2585 = vadd.f32 0.0, %v2584
  %v2586 = vpop.f32.mrb[0].mxu0
  %v2587 = vpop.f32.mrb[0].mxu0
  %v2588 = vadd.f32 0.0, %v2587
  %v2589 = vpop.f32.mrb[0].mxu0
  %2590 = vmatprep.mubr.bf16.mxu0 0
  %2591 = vmatmul.mubr.bf16.gmra.mrb[0].mxu0 %v2524
  %v2592 = vpop.f32.mrb[0].mxu0
  %v2593 = vadd.f32 0.0, %v2592
  %v2594 = vpop.f32.mrb[0].mxu0
  %v2595 = vpop.f32.mrb[0].mxu0
  %v2596 = vadd.f32 0.0, %v2595
  %v2597 = vpop.f32.mrb[0].mxu0
  %2598 = vmatprep.mubr.bf16.mxu0 0
  %2599 = vmatmul.mubr.bf16.gmra.mrb[0].mxu0 %v2527
  %v2600 = vpop.f32.mrb[0].mxu0
  %v2601 = vadd.f32 0.0, %v2600
  %v2602 = vpop.f32.mrb[0].mxu0
  %v2603 = vpop.f32.mrb[0].mxu0
  %v2604 = vadd.f32 0.0, %v2603
  %v2605 = vpop.f32.mrb[0].mxu0
  %2606 = vmatprep.mubr.bf16.mxu0 0
  %2607 = vmatmul.mubr.bf16.gmra.mrb[0].mxu0 %v2530
  %v2608 = vpop.f32.mrb[0].mxu0
  %v2609 = vadd.f32 0.0, %v2608
  %v2610 = vpop.f32.mrb[0].mxu0
  %v2611 = vpop.f32.mrb[0].mxu0
  %v2612 = vadd.f32 0.0, %v2611
  %v2613 = vpop.f32.mrb[0].mxu0
  %2614 = vmatprep.mubr.bf16.mxu0 0
  %2615 = vmatmul.mubr.bf16.gmra.mrb[0].mxu0 %v2533
  %v2616 = vpop.f32.mrb[0].mxu0
  %v2617 = vadd.f32 0.0, %v2616
  %v2618 = vpop.f32.mrb[0].mxu0
  %v2619 = vpop.f32.mrb[0].mxu0
  %v2620 = vadd.f32 0.0, %v2619
  %v2621 = vpop.f32.mrb[0].mxu0
  %2622 = vmatprep.mubr.bf16.mxu0 0
  %2623 = vmatmul.mubr.bf16.gmra.mrb[0].mxu0 %v2536
  %v2624 = vpop.f32.mrb[0].mxu0
  %v2625 = vadd.f32 0.0, %v2624
  %v2626 = vpop.f32.mrb[0].mxu0
  %v2627 = vpop.f32.mrb[0].mxu0
  %v2628 = vadd.f32 0.0, %v2627
  %v2629 = vpop.f32.mrb[0].mxu0
  %2630 = vmatprep.mubr.bf16.mxu0 0
  %2631 = vmatmul.mubr.bf16.gmra.mrb[0].mxu0 %v2539
  %v2632 = vpop.f32.mrb[0].mxu0
  %v2633 = vadd.f32 0.0, %v2632
  %v2634 = vpop.f32.mrb[0].mxu0
  %v2635 = vpop.f32.mrb[0].mxu0
  %v2636 = vadd.f32 0.0, %v2635
  %v2637 = vpop.f32.mrb[0].mxu0
  %2638 = vmatprep.mubr.bf16.mxu0 0
  %2639 = vmatmul.mubr.bf16.gmra.mrb[0].mxu0 %v2542
  %v2640 = vpop.f32.mrb[0].mxu0
  %v2641 = vadd.f32 0.0, %v2640
  %v2642 = vpop.f32.mrb[0].mxu0
  %v2643 = vpop.f32.mrb[0].mxu0
  %v2644 = vadd.f32 0.0, %v2643
  %v2645 = vpop.f32.mrb[0].mxu0
  %2646 = vdwg.mxu0
  %v2647 = vpack.c.bf16 %v2588, %v2585
  %v2648 = vpack.c.bf16 %v2596, %v2593
  %v2649 = vpack.c.bf16 %v2604, %v2601
  %v2650 = vpack.c.bf16 %v2612, %v2609
  %v2651 = vpack.c.bf16 %v2620, %v2617
  %v2652 = vpack.c.bf16 %v2628, %v2625
  %v2653 = vpack.c.bf16 %v2636, %v2633
  %v2654 = vpack.c.bf16 %v2644, %v2641
  %v2655 = vld [vmem:[%s9] sm:$0xf]
  %v2656 = vld [vmem:[%s9 + $0x4] sm:$0xf]
  %v2657 = vld [vmem:[%s9 + $0x8] sm:$0xf]
  %v2658 = vld [vmem:[%s9 + $0xc] sm:$0xf]
  %s2659 = scalar_lea.vmem %s9, 16
  %v2660 = vld [vmem:[%s2659] sm:$0xf]
  %v2661 = vld [vmem:[%s2659 + $0x4] sm:$0xf]
  %v2662 = vld [vmem:[%s2659 + $0x8] sm:$0xf]
  %v2663 = vld [vmem:[%s2659 + $0xc] sm:$0xf]
  %v2668 = vunpack.c.l.b16 %v2660
  %v2669 = vunpack.c.l.b16 %v2661
  %v2670 = vunpack.c.l.b16 %v2662
  %v2671 = vunpack.c.l.b16 %v2663
  %v2672 = vpack.c.b16 %v2669, %v2668
  %v2673 = vpack.c.b16 %v2671, %v2670
  %vm2676 = vcmask 261120
  %v2678 = vsel %vm2676, %v2649, 0
  %v2681 = vsel %vm2676, %v2650, 0
  %2683 = vmatprep.subr.bf16.mxu0 0
  %2684 = vmatpush1.bf16.msra.mxu0 %v2672
  %2685 = vmatprep.subr.bf16.mxu0 0
  %2686 = vmatpush1.bf16.msra.mxu0 %v2673
  %2687 = vmatprep.subr.bf16.mxu0 0
  %2688 = vmatpush1.bf16.msra.mxu0 0
  %2689 = vmatprep.subr.bf16.mxu0 0
  %2690 = vmatpush1.bf16.msra.mxu0 0
  %2691 = vmatprep.subr.bf16.mxu0 0
  %2692 = vmatpush1.bf16.msra.mxu0 0
  %2693 = vmatprep.subr.bf16.mxu0 0
  %2694 = vmatpush1.bf16.msra.mxu0 0
  %2695 = vmatprep.subr.bf16.mxu0 0
  %2696 = vmatpush1.bf16.msra.mxu0 0
  %2697 = vmatprep.subr.bf16.mxu0 0
  %2698 = vmatpush1.bf16.msra.mxu0 0
  %2699 = vmatprep.subr.bf16.mxu0 0
  %2700 = vmatpush1.bf16.msra.mxu0 0
  %2701 = vmatprep.subr.bf16.mxu0 0
  %2702 = vmatpush1.bf16.msra.mxu0 0
  %2703 = vmatprep.subr.bf16.mxu0 0
  %2704 = vmatpush1.bf16.msra.mxu0 0
  %2705 = vmatprep.subr.bf16.mxu0 0
  %2706 = vmatpush1.bf16.msra.mxu0 0
  %2707 = vmatprep.subr.bf16.mxu0 0
  %2708 = vmatpush1.bf16.msra.mxu0 0
  %2709 = vmatprep.subr.bf16.mxu0 0
  %2710 = vmatpush1.bf16.msra.mxu0 0
  %2711 = vmatprep.subr.bf16.mxu0 0
  %2712 = vmatpush1.bf16.msra.mxu0 0
  %2713 = vmatprep.subr.bf16.mxu0 0
  %2714 = vmatpush1.bf16.msra.mxu0 0
  %2715 = vmatprep.mubr.bf16.mxu0 0
  %2716 = vmatmul.mubr.bf16.gmra.mrb[0].mxu0 %v2678
  %v2717 = vpop.f32.mrb[0].mxu0
  %v2718 = vadd.f32 0.0, %v2717
  %v2719 = vpop.f32.mrb[0].mxu0
  %v2720 = vpop.f32.mrb[0].mxu0
  %v2721 = vadd.f32 0.0, %v2720
  %v2722 = vpop.f32.mrb[0].mxu0
  %2723 = vmatprep.mubr.bf16.mxu0 0
  %2724 = vmatmul.mubr.bf16.gmra.mrb[0].mxu0 %v2681
  %v2725 = vpop.f32.mrb[0].mxu0
  %v2726 = vadd.f32 0.0, %v2725
  %v2727 = vpop.f32.mrb[0].mxu0
  %v2728 = vpop.f32.mrb[0].mxu0
  %v2729 = vadd.f32 0.0, %v2728
  %v2730 = vpop.f32.mrb[0].mxu0
  %2731 = vdwg.mxu0
  %v2736 = vunpack.c.l.b16 %v2655
  %v2737 = vunpack.c.l.b16 %v2656
  %v2738 = vunpack.c.l.b16 %v2657
  %v2739 = vunpack.c.l.b16 %v2658
  %v2740 = vpack.c.b16 %v2737, %v2736
  %v2741 = vpack.c.b16 %v2739, %v2738
  %v2745 = vsel %vm2676, %v2647, 0
  %v2748 = vsel %vm2676, %v2648, 0
  %2750 = vmatprep.subr.bf16.mxu0 0
  %2751 = vmatpush1.bf16.msra.mxu0 %v2740
  %2752 = vmatprep.subr.bf16.mxu0 0
  %2753 = vmatpush1.bf16.msra.mxu0 %v2741
  %2754 = vmatprep.subr.bf16.mxu0 0
  %2755 = vmatpush1.bf16.msra.mxu0 0
  %2756 = vmatprep.subr.bf16.mxu0 0
  %2757 = vmatpush1.bf16.msra.mxu0 0
  %2758 = vmatprep.subr.bf16.mxu0 0
  %2759 = vmatpush1.bf16.msra.mxu0 0
  %2760 = vmatprep.subr.bf16.mxu0 0
  %2761 = vmatpush1.bf16.msra.mxu0 0
  %2762 = vmatprep.subr.bf16.mxu0 0
  %2763 = vmatpush1.bf16.msra.mxu0 0
  %2764 = vmatprep.subr.bf16.mxu0 0
  %2765 = vmatpush1.bf16.msra.mxu0 0
  %2766 = vmatprep.subr.bf16.mxu0 0
  %2767 = vmatpush1.bf16.msra.mxu0 0
  %2768 = vmatprep.subr.bf16.mxu0 0
  %2769 = vmatpush1.bf16.msra.mxu0 0
  %2770 = vmatprep.subr.bf16.mxu0 0
  %2771 = vmatpush1.bf16.msra.mxu0 0
  %2772 = vmatprep.subr.bf16.mxu0 0
  %2773 = vmatpush1.bf16.msra.mxu0 0
  %2774 = vmatprep.subr.bf16.mxu0 0
  %2775 = vmatpush1.bf16.msra.mxu0 0
  %2776 = vmatprep.subr.bf16.mxu0 0
  %2777 = vmatpush1.bf16.msra.mxu0 0
  %2778 = vmatprep.subr.bf16.mxu0 0
  %2779 = vmatpush1.bf16.msra.mxu0 0
  %2780 = vmatprep.subr.bf16.mxu0 0
  %2781 = vmatpush1.bf16.msra.mxu0 0
  %2782 = vmatprep.mubr.bf16.mxu0 0
  %2783 = vmatmul.mubr.bf16.gmra.mrb[0].mxu0 %v2745
  %v2784 = vpop.f32.mrb[0].mxu0
  %v2785 = vadd.f32 %v2718, %v2784
  %v2786 = vpop.f32.mrb[0].mxu0
  %v2787 = vpop.f32.mrb[0].mxu0
  %v2788 = vadd.f32 %v2721, %v2787
  %v2789 = vpop.f32.mrb[0].mxu0
  %2790 = vmatprep.mubr.bf16.mxu0 0
  %2791 = vmatmul.mubr.bf16.gmra.mrb[0].mxu0 %v2748
  %v2792 = vpop.f32.mrb[0].mxu0
  %v2793 = vadd.f32 %v2726, %v2792
  %v2794 = vpop.f32.mrb[0].mxu0
  %v2795 = vpop.f32.mrb[0].mxu0
  %v2796 = vadd.f32 %v2729, %v2795
  %v2797 = vpop.f32.mrb[0].mxu0
  %2798 = vdwg.mxu0
  %s2799 = scalar_lea.vmem %s9, 32
  %v2800 = vld [vmem:[%s2799] sm:$0xf]
  %v2801 = vld [vmem:[%s2799 + $0x4] sm:$0xf]
  %v2802 = vld [vmem:[%s2799 + $0x8] sm:$0xf]
  %v2803 = vld [vmem:[%s2799 + $0xc] sm:$0xf]
  %v2808 = vunpack.c.l.b16 %v2800
  %v2809 = vunpack.c.l.b16 %v2801
  %v2810 = vunpack.c.l.b16 %v2802
  %v2811 = vunpack.c.l.b16 %v2803
  %v2812 = vpack.c.b16 %v2809, %v2808
  %v2813 = vpack.c.b16 %v2811, %v2810
  %v2817 = vsel %vm2676, %v2651, 0
  %v2820 = vsel %vm2676, %v2652, 0
  %2822 = vmatprep.subr.bf16.mxu0 0
  %2823 = vmatpush1.bf16.msra.mxu0 %v2812
  %2824 = vmatprep.subr.bf16.mxu0 0
  %2825 = vmatpush1.bf16.msra.mxu0 %v2813
  %2826 = vmatprep.subr.bf16.mxu0 0
  %2827 = vmatpush1.bf16.msra.mxu0 0
  %2828 = vmatprep.subr.bf16.mxu0 0
  %2829 = vmatpush1.bf16.msra.mxu0 0
  %2830 = vmatprep.subr.bf16.mxu0 0
  %2831 = vmatpush1.bf16.msra.mxu0 0
  %2832 = vmatprep.subr.bf16.mxu0 0
  %2833 = vmatpush1.bf16.msra.mxu0 0
  %2834 = vmatprep.subr.bf16.mxu0 0
  %2835 = vmatpush1.bf16.msra.mxu0 0
  %2836 = vmatprep.subr.bf16.mxu0 0
  %2837 = vmatpush1.bf16.msra.mxu0 0
  %2838 = vmatprep.subr.bf16.mxu0 0
  %2839 = vmatpush1.bf16.msra.mxu0 0
  %2840 = vmatprep.subr.bf16.mxu0 0
  %2841 = vmatpush1.bf16.msra.mxu0 0
  %2842 = vmatprep.subr.bf16.mxu0 0
  %2843 = vmatpush1.bf16.msra.mxu0 0
  %2844 = vmatprep.subr.bf16.mxu0 0
  %2845 = vmatpush1.bf16.msra.mxu0 0
  %2846 = vmatprep.subr.bf16.mxu0 0
  %2847 = vmatpush1.bf16.msra.mxu0 0
  %2848 = vmatprep.subr.bf16.mxu0 0
  %2849 = vmatpush1.bf16.msra.mxu0 0
  %2850 = vmatprep.subr.bf16.mxu0 0
  %2851 = vmatpush1.bf16.msra.mxu0 0
  %2852 = vmatprep.subr.bf16.mxu0 0
  %2853 = vmatpush1.bf16.msra.mxu0 0
  %2854 = vmatprep.mubr.bf16.mxu0 0
  %2855 = vmatmul.mubr.bf16.gmra.mrb[0].mxu0 %v2817
  %v2856 = vpop.f32.mrb[0].mxu0
  %v2857 = vadd.f32 0.0, %v2856
  %v2858 = vpop.f32.mrb[0].mxu0
  %v2859 = vpop.f32.mrb[0].mxu0
  %v2860 = vadd.f32 0.0, %v2859
  %v2861 = vpop.f32.mrb[0].mxu0
  %2862 = vmatprep.mubr.bf16.mxu0 0
  %2863 = vmatmul.mubr.bf16.gmra.mrb[0].mxu0 %v2820
  %v2864 = vpop.f32.mrb[0].mxu0
  %v2865 = vadd.f32 0.0, %v2864
  %v2866 = vpop.f32.mrb[0].mxu0
  %v2867 = vpop.f32.mrb[0].mxu0
  %v2868 = vadd.f32 0.0, %v2867
  %v2869 = vpop.f32.mrb[0].mxu0
  %2870 = vdwg.mxu0
  %v2871 = vadd.f32 %v2785, %v2857
  %v2872 = vadd.f32 %v2788, %v2860
  %v2873 = vadd.f32 %v2793, %v2865
  %v2874 = vadd.f32 %v2796, %v2868
  %s2875 = scalar_lea.vmem %s9, 48
  %v2876 = vld [vmem:[%s2875] sm:$0xf]
  %v2877 = vld [vmem:[%s2875 + $0x4] sm:$0xf]
  %v2878 = vld [vmem:[%s2875 + $0x8] sm:$0xf]
  %v2879 = vld [vmem:[%s2875 + $0xc] sm:$0xf]
  %v2884 = vunpack.c.l.b16 %v2876
  %v2885 = vunpack.c.l.b16 %v2877
  %v2886 = vunpack.c.l.b16 %v2878
  %v2887 = vunpack.c.l.b16 %v2879
  %v2888 = vpack.c.b16 %v2885, %v2884
  %v2889 = vpack.c.b16 %v2887, %v2886
  %v2893 = vsel %vm2676, %v2653, 0
  %v2896 = vsel %vm2676, %v2654, 0
  %2898 = vmatprep.subr.bf16.mxu0 0
  %2899 = vmatpush1.bf16.msra.mxu0 %v2888
  %2900 = vmatprep.subr.bf16.mxu0 0
  %2901 = vmatpush1.bf16.msra.mxu0 %v2889
  %2902 = vmatprep.subr.bf16.mxu0 0
  %2903 = vmatpush1.bf16.msra.mxu0 0
  %2904 = vmatprep.subr.bf16.mxu0 0
  %2905 = vmatpush1.bf16.msra.mxu0 0
  %2906 = vmatprep.subr.bf16.mxu0 0
  %2907 = vmatpush1.bf16.msra.mxu0 0
  %2908 = vmatprep.subr.bf16.mxu0 0
  %2909 = vmatpush1.bf16.msra.mxu0 0
  %2910 = vmatprep.subr.bf16.mxu0 0
  %2911 = vmatpush1.bf16.msra.mxu0 0
  %2912 = vmatprep.subr.bf16.mxu0 0
  %2913 = vmatpush1.bf16.msra.mxu0 0
  %2914 = vmatprep.subr.bf16.mxu0 0
  %2915 = vmatpush1.bf16.msra.mxu0 0
  %2916 = vmatprep.subr.bf16.mxu0 0
  %2917 = vmatpush1.bf16.msra.mxu0 0
  %2918 = vmatprep.subr.bf16.mxu0 0
  %2919 = vmatpush1.bf16.msra.mxu0 0
  %2920 = vmatprep.subr.bf16.mxu0 0
  %2921 = vmatpush1.bf16.msra.mxu0 0
  %2922 = vmatprep.subr.bf16.mxu0 0
  %2923 = vmatpush1.bf16.msra.mxu0 0
  %2924 = vmatprep.subr.bf16.mxu0 0
  %2925 = vmatpush1.bf16.msra.mxu0 0
  %2926 = vmatprep.subr.bf16.mxu0 0
  %2927 = vmatpush1.bf16.msra.mxu0 0
  %2928 = vmatprep.subr.bf16.mxu0 0
  %2929 = vmatpush1.bf16.msra.mxu0 0
  %2930 = vmatprep.mubr.bf16.mxu0 0
  %2931 = vmatmul.mubr.bf16.gmra.mrb[0].mxu0 %v2893
  %v2932 = vpop.f32.mrb[0].mxu0
  %v2933 = vadd.f32 0.0, %v2932
  %v2934 = vpop.f32.mrb[0].mxu0
  %v2935 = vpop.f32.mrb[0].mxu0
  %v2936 = vadd.f32 0.0, %v2935
  %v2937 = vpop.f32.mrb[0].mxu0
  %2938 = vmatprep.mubr.bf16.mxu0 0
  %2939 = vmatmul.mubr.bf16.gmra.mrb[0].mxu0 %v2896
  %v2940 = vpop.f32.mrb[0].mxu0
  %v2941 = vadd.f32 0.0, %v2940
  %v2942 = vpop.f32.mrb[0].mxu0
  %v2943 = vpop.f32.mrb[0].mxu0
  %v2944 = vadd.f32 0.0, %v2943
  %v2945 = vpop.f32.mrb[0].mxu0
  %2946 = vdwg.mxu0
  %v2947 = vadd.f32 %v2871, %v2933
  %v2948 = vadd.f32 %v2872, %v2936
  %v2949 = vadd.f32 %v2873, %v2941
  %v2950 = vadd.f32 %v2874, %v2944
  %v2951 = vld [vmem:[%s10] sm:$0xf]
  %v2952 = vld [vmem:[%s10 + $0x4] sm:$0xf]
  %v2953 = vld [vmem:[%s10 + $0x8] sm:$0xf]
  %v2954 = vld [vmem:[%s10 + $0xc] sm:$0x1]
  %v2955 = vpack.c.bf16 %v2457, %v2456
  %v2956 = vpack.c.bf16 %v2459, %v2458
  %v2957 = vpack.c.bf16 %v2461, %v2460
  %v2958 = vpack.c.bf16 %v2462, %v2462
  %v2963 = vunpack.c.l.b16 %v2951
  %v2964 = vunpack.c.l.b16 %v2952
  %v2965 = vunpack.c.l.b16 %v2953
  %v2966 = vunpack.c.l.b16 %v2954
  %v2967 = vpack.c.b16 %v2964, %v2963
  %v2968 = vpack.c.b16 %v2966, %v2965
  %2973 = vrot.lane.b32.xlu0 %v2955, 96
  %v2974 = vpop.permute.xlu0 %2973
  %2975 = vrot.lane.b32.xlu0 %v2956, 96
  %v2976 = vpop.permute.xlu0 %2975
  %2977 = vrot.lane.b32.xlu0 %v2957, 96
  %v2978 = vpop.permute.xlu0 %2977
  %2979 = vrot.lane.b32.xlu0 %v2958, 96
  %v2980 = vpop.permute.xlu0 %2979
  %v2985 = vsel %vm2519, %v2967, 0
  %v2988 = vsel %vm2519, %v2968, 0
  %v2991 = vand.u32 %v2980, %v2546
  %2993 = vmatprep.subr.bf16.mxu0 0
  %2994 = vmatpush1.bf16.msra.mxu0 %v2974
  %2995 = vmatprep.subr.bf16.mxu0 0
  %2996 = vmatpush1.bf16.msra.mxu0 %v2976
  %2997 = vmatprep.subr.bf16.mxu0 0
  %2998 = vmatpush1.bf16.msra.mxu0 %v2978
  %2999 = vmatprep.subr.bf16.mxu0 0
  %3000 = vmatpush1.bf16.msra.mxu0 %v2991
  %3001 = vmatprep.subr.bf16.mxu0 0
  %3002 = vmatpush1.bf16.msra.mxu0 0
  %3003 = vmatprep.subr.bf16.mxu0 0
  %3004 = vmatpush1.bf16.msra.mxu0 0
  %3005 = vmatprep.subr.bf16.mxu0 0
  %3006 = vmatpush1.bf16.msra.mxu0 0
  %3007 = vmatprep.subr.bf16.mxu0 0
  %3008 = vmatpush1.bf16.msra.mxu0 0
  %3009 = vmatprep.subr.bf16.mxu0 0
  %3010 = vmatpush1.bf16.msra.mxu0 0
  %3011 = vmatprep.subr.bf16.mxu0 0
  %3012 = vmatpush1.bf16.msra.mxu0 0
  %3013 = vmatprep.subr.bf16.mxu0 0
  %3014 = vmatpush1.bf16.msra.mxu0 0
  %3015 = vmatprep.subr.bf16.mxu0 0
  %3016 = vmatpush1.bf16.msra.mxu0 0
  %3017 = vmatprep.subr.bf16.mxu0 0
  %3018 = vmatpush1.bf16.msra.mxu0 0
  %3019 = vmatprep.subr.bf16.mxu0 0
  %3020 = vmatpush1.bf16.msra.mxu0 0
  %3021 = vmatprep.subr.bf16.mxu0 0
  %3022 = vmatpush1.bf16.msra.mxu0 0
  %3023 = vmatprep.subr.bf16.mxu0 0
  %3024 = vmatpush1.bf16.msra.mxu0 0
  %3025 = vmatprep.mubr.bf16.mxu0 0
  %3026 = vmatmul.mubr.bf16.gmra.mrb[0].mxu0 %v2985
  %v3027 = vpop.f32.mrb[0].mxu0
  %v3028 = vadd.f32 0.0, %v3027
  %v3029 = vpop.f32.mrb[0].mxu0
  %v3030 = vpop.f32.mrb[0].mxu0
  %v3031 = vadd.f32 0.0, %v3030
  %v3032 = vpop.f32.mrb[0].mxu0
  %3033 = vmatprep.mubr.bf16.mxu0 0
  %3034 = vmatmul.mubr.bf16.gmra.mrb[0].mxu0 %v2988
  %v3035 = vpop.f32.mrb[0].mxu0
  %v3036 = vadd.f32 0.0, %v3035
  %v3037 = vpop.f32.mrb[0].mxu0
  %v3038 = vpop.f32.mrb[0].mxu0
  %v3039 = vadd.f32 0.0, %v3038
  %v3040 = vpop.f32.mrb[0].mxu0
  %3041 = vdwg.mxu0
  %v3042 = vadd.f32 %v2947, %v3028
  %v3043 = vadd.f32 %v2948, %v3031
  %v3044 = vadd.f32 %v2949, %v3036
  %v3045 = vadd.f32 %v2950, %v3039
  %v3046 = vmax.f32 %v3042, 0.0
  %v3047 = vmax.f32 %v3043, 0.0
  %v3048 = vmax.f32 %v3044, 0.0
  %v3049 = vmax.f32 %v3045, 0.0
  %v3050 = vld [vmem:[%s11] sm:$0xff]
  %v3051 = vld [vmem:[%s11 + $0x8] sm:$0xff]
  %v3052 = vld [vmem:[%s11 + $0x10] sm:$0xff]
  %v3053 = vld [vmem:[%s11 + $0x18] sm:$0x1]
  %v3054 = vmul.f32 %v3046, %v3050
  %v3055 = vmul.f32 %v3047, %v3051
  %v3056 = vmul.f32 %v3048, %v3052
  %v3057 = vmul.f32 %v3049, %v3053
  %vm3058 = vcmask 130048
  %v3059 = vsel %vm3058, %v3054, 0.0
  %v3060 = vsel %vm3058, %v3055, 0.0
  %v3061 = vadd.f32 %v3059, %v3060
  %v3062 = vsel %vm3058, %v3056, 0.0
  %v3063 = vadd.f32 %v3061, %v3062
  %vm3064 = vcmask 122880
  %v3065 = vsel %vm3064, %v3057, 0.0
  %v3066 = vadd.f32 %v3063, %v3065
  %v3067 = vrot.slane %v3066, 4
  %v3068 = vadd.f32 %v3066, %v3067
  %v3069 = vrot.slane %v3068, 2
  %v3070 = vadd.f32 %v3068, %v3069
  %v3071 = vrot.slane %v3070, 1
  %v3072 = vadd.f32 %v3070, %v3071
  %s3073 = scalar_lea.vmem %s11, 32
  %v3074 = vld [vmem:[%s3073] sm:$0xff]
  %v3075 = vld [vmem:[%s3073 + $0x8] sm:$0xff]
  %v3076 = vld [vmem:[%s3073 + $0x10] sm:$0xff]
  %v3077 = vld [vmem:[%s3073 + $0x18] sm:$0x1]
  %v3078 = vmul.f32 %v3046, %v3074
  %v3079 = vmul.f32 %v3047, %v3075
  %v3080 = vmul.f32 %v3048, %v3076
  %v3081 = vmul.f32 %v3049, %v3077
  %v3082 = vsel %vm3058, %v3078, 0.0
  %v3083 = vsel %vm3058, %v3079, 0.0
  %v3084 = vadd.f32 %v3082, %v3083
  %v3085 = vsel %vm3058, %v3080, 0.0
  %v3086 = vadd.f32 %v3084, %v3085
  %v3087 = vsel %vm3064, %v3081, 0.0
  %v3088 = vadd.f32 %v3086, %v3087
  %v3089 = vrot.slane %v3088, 4
  %v3090 = vadd.f32 %v3088, %v3089
  %v3091 = vrot.slane %v3090, 2
  %v3092 = vadd.f32 %v3090, %v3091
  %v3093 = vrot.slane %v3092, 1
  %v3094 = vadd.f32 %v3092, %v3093
  %s3095 = scalar_lea.vmem %s11, 64
  %v3096 = vld [vmem:[%s3095] sm:$0xff]
  %v3097 = vld [vmem:[%s3095 + $0x8] sm:$0xff]
  %v3098 = vld [vmem:[%s3095 + $0x10] sm:$0xff]
  %v3099 = vld [vmem:[%s3095 + $0x18] sm:$0x1]
  %v3100 = vmul.f32 %v3046, %v3096
  %v3101 = vmul.f32 %v3047, %v3097
  %v3102 = vmul.f32 %v3048, %v3098
  %v3103 = vmul.f32 %v3049, %v3099
  %v3104 = vsel %vm3058, %v3100, 0.0
  %v3105 = vsel %vm3058, %v3101, 0.0
  %v3106 = vadd.f32 %v3104, %v3105
  %v3107 = vsel %vm3058, %v3102, 0.0
  %v3108 = vadd.f32 %v3106, %v3107
  %v3109 = vsel %vm3064, %v3103, 0.0
  %v3110 = vadd.f32 %v3108, %v3109
  %v3111 = vrot.slane %v3110, 4
  %v3112 = vadd.f32 %v3110, %v3111
  %v3113 = vrot.slane %v3112, 2
  %v3114 = vadd.f32 %v3112, %v3113
  %v3115 = vrot.slane %v3114, 1
  %v3116 = vadd.f32 %v3114, %v3115
  %s3117 = scalar_lea.vmem %s11, 96
  %v3118 = vld [vmem:[%s3117] sm:$0xff]
  %v3119 = vld [vmem:[%s3117 + $0x8] sm:$0xff]
  %v3120 = vld [vmem:[%s3117 + $0x10] sm:$0xff]
  %v3121 = vld [vmem:[%s3117 + $0x18] sm:$0x1]
  %v3122 = vmul.f32 %v3046, %v3118
  %v3123 = vmul.f32 %v3047, %v3119
  %v3124 = vmul.f32 %v3048, %v3120
  %v3125 = vmul.f32 %v3049, %v3121
  %v3126 = vsel %vm3058, %v3122, 0.0
  %v3127 = vsel %vm3058, %v3123, 0.0
  %v3128 = vadd.f32 %v3126, %v3127
  %v3129 = vsel %vm3058, %v3124, 0.0
  %v3130 = vadd.f32 %v3128, %v3129
  %v3131 = vsel %vm3064, %v3125, 0.0
  %v3132 = vadd.f32 %v3130, %v3131
  %v3133 = vrot.slane %v3132, 4
  %v3134 = vadd.f32 %v3132, %v3133
  %v3135 = vrot.slane %v3134, 2
  %v3136 = vadd.f32 %v3134, %v3135
  %v3137 = vrot.slane %v3136, 1
  %v3138 = vadd.f32 %v3136, %v3137
  %s3139 = scalar_lea.vmem %s11, 128
  %v3140 = vld [vmem:[%s3139] sm:$0xff]
  %v3141 = vld [vmem:[%s3139 + $0x8] sm:$0xff]
  %v3142 = vld [vmem:[%s3139 + $0x10] sm:$0xff]
  %v3143 = vld [vmem:[%s3139 + $0x18] sm:$0x1]
  %v3144 = vmul.f32 %v3046, %v3140
  %v3145 = vmul.f32 %v3047, %v3141
  %v3146 = vmul.f32 %v3048, %v3142
  %v3147 = vmul.f32 %v3049, %v3143
  %v3148 = vsel %vm3058, %v3144, 0.0
  %v3149 = vsel %vm3058, %v3145, 0.0
  %v3150 = vadd.f32 %v3148, %v3149
  %v3151 = vsel %vm3058, %v3146, 0.0
  %v3152 = vadd.f32 %v3150, %v3151
  %v3153 = vsel %vm3064, %v3147, 0.0
  %v3154 = vadd.f32 %v3152, %v3153
  %v3155 = vrot.slane %v3154, 4
  %v3156 = vadd.f32 %v3154, %v3155
  %v3157 = vrot.slane %v3156, 2
  %v3158 = vadd.f32 %v3156, %v3157
  %v3159 = vrot.slane %v3158, 1
  %v3160 = vadd.f32 %v3158, %v3159
  %s3161 = scalar_lea.vmem %s11, 160
  %v3162 = vld [vmem:[%s3161] sm:$0xff]
  %v3163 = vld [vmem:[%s3161 + $0x8] sm:$0xff]
  %v3164 = vld [vmem:[%s3161 + $0x10] sm:$0xff]
  %v3165 = vld [vmem:[%s3161 + $0x18] sm:$0x1]
  %v3166 = vmul.f32 %v3046, %v3162
  %v3167 = vmul.f32 %v3047, %v3163
  %v3168 = vmul.f32 %v3048, %v3164
  %v3169 = vmul.f32 %v3049, %v3165
  %v3170 = vsel %vm3058, %v3166, 0.0
  %v3171 = vsel %vm3058, %v3167, 0.0
  %v3172 = vadd.f32 %v3170, %v3171
  %v3173 = vsel %vm3058, %v3168, 0.0
  %v3174 = vadd.f32 %v3172, %v3173
  %v3175 = vsel %vm3064, %v3169, 0.0
  %v3176 = vadd.f32 %v3174, %v3175
  %v3177 = vrot.slane %v3176, 4
  %v3178 = vadd.f32 %v3176, %v3177
  %v3179 = vrot.slane %v3178, 2
  %v3180 = vadd.f32 %v3178, %v3179
  %v3181 = vrot.slane %v3180, 1
  %v3182 = vadd.f32 %v3180, %v3181
  %s3183 = scalar_lea.vmem %s11, 192
  %v3184 = vld [vmem:[%s3183] sm:$0xff]
  %v3185 = vld [vmem:[%s3183 + $0x8] sm:$0xff]
  %v3186 = vld [vmem:[%s3183 + $0x10] sm:$0xff]
  %v3187 = vld [vmem:[%s3183 + $0x18] sm:$0x1]
  %v3188 = vmul.f32 %v3046, %v3184
  %v3189 = vmul.f32 %v3047, %v3185
  %v3190 = vmul.f32 %v3048, %v3186
  %v3191 = vmul.f32 %v3049, %v3187
  %v3192 = vsel %vm3058, %v3188, 0.0
  %v3193 = vsel %vm3058, %v3189, 0.0
  %v3194 = vadd.f32 %v3192, %v3193
  %v3195 = vsel %vm3058, %v3190, 0.0
  %v3196 = vadd.f32 %v3194, %v3195
  %v3197 = vsel %vm3064, %v3191, 0.0
  %v3198 = vadd.f32 %v3196, %v3197
  %v3199 = vrot.slane %v3198, 4
  %v3200 = vadd.f32 %v3198, %v3199
  %v3201 = vrot.slane %v3200, 2
  %v3202 = vadd.f32 %v3200, %v3201
  %v3203 = vrot.slane %v3202, 1
  %v3204 = vadd.f32 %v3202, %v3203
  %s3205 = scalar_lea.vmem %s11, 224
  %v3206 = vld [vmem:[%s3205] sm:$0xff]
  %v3207 = vld [vmem:[%s3205 + $0x8] sm:$0xff]
  %v3208 = vld [vmem:[%s3205 + $0x10] sm:$0xff]
  %v3209 = vld [vmem:[%s3205 + $0x18] sm:$0x1]
  %v3210 = vmul.f32 %v3046, %v3206
  %v3211 = vmul.f32 %v3047, %v3207
  %v3212 = vmul.f32 %v3048, %v3208
  %v3213 = vmul.f32 %v3049, %v3209
  %v3214 = vsel %vm3058, %v3210, 0.0
  %v3215 = vsel %vm3058, %v3211, 0.0
  %v3216 = vadd.f32 %v3214, %v3215
  %v3217 = vsel %vm3058, %v3212, 0.0
  %v3218 = vadd.f32 %v3216, %v3217
  %v3219 = vsel %vm3064, %v3213, 0.0
  %v3220 = vadd.f32 %v3218, %v3219
  %v3221 = vrot.slane %v3220, 4
  %v3222 = vadd.f32 %v3220, %v3221
  %v3223 = vrot.slane %v3222, 2
  %v3224 = vadd.f32 %v3222, %v3223
  %v3225 = vrot.slane %v3224, 1
  %v3226 = vadd.f32 %v3224, %v3225
  %s3227 = scalar_lea.vmem %s11, 256
  %v3228 = vld [vmem:[%s3227] sm:$0xff]
  %v3229 = vld [vmem:[%s3227 + $0x8] sm:$0xff]
  %v3230 = vld [vmem:[%s3227 + $0x10] sm:$0xff]
  %v3231 = vld [vmem:[%s3227 + $0x18] sm:$0x1]
  %v3232 = vmul.f32 %v3046, %v3228
  %v3233 = vmul.f32 %v3047, %v3229
  %v3234 = vmul.f32 %v3048, %v3230
  %v3235 = vmul.f32 %v3049, %v3231
  %v3236 = vsel %vm3058, %v3232, 0.0
  %v3237 = vsel %vm3058, %v3233, 0.0
  %v3238 = vadd.f32 %v3236, %v3237
  %v3239 = vsel %vm3058, %v3234, 0.0
  %v3240 = vadd.f32 %v3238, %v3239
  %v3241 = vsel %vm3064, %v3235, 0.0
  %v3242 = vadd.f32 %v3240, %v3241
  %v3243 = vrot.slane %v3242, 4
  %v3244 = vadd.f32 %v3242, %v3243
  %v3245 = vrot.slane %v3244, 2
  %v3246 = vadd.f32 %v3244, %v3245
  %v3247 = vrot.slane %v3246, 1
  %v3248 = vadd.f32 %v3246, %v3247
  %s3249 = scalar_lea.vmem %s11, 288
  %v3250 = vld [vmem:[%s3249] sm:$0xff]
  %v3251 = vld [vmem:[%s3249 + $0x8] sm:$0xff]
  %v3252 = vld [vmem:[%s3249 + $0x10] sm:$0xff]
  %v3253 = vld [vmem:[%s3249 + $0x18] sm:$0x1]
  %v3254 = vmul.f32 %v3046, %v3250
  %v3255 = vmul.f32 %v3047, %v3251
  %v3256 = vmul.f32 %v3048, %v3252
  %v3257 = vmul.f32 %v3049, %v3253
  %v3258 = vsel %vm3058, %v3254, 0.0
  %v3259 = vsel %vm3058, %v3255, 0.0
  %v3260 = vadd.f32 %v3258, %v3259
  %v3261 = vsel %vm3058, %v3256, 0.0
  %v3262 = vadd.f32 %v3260, %v3261
  %v3263 = vsel %vm3064, %v3257, 0.0
  %v3264 = vadd.f32 %v3262, %v3263
  %v3265 = vrot.slane %v3264, 4
  %v3266 = vadd.f32 %v3264, %v3265
  %v3267 = vrot.slane %v3266, 2
  %v3268 = vadd.f32 %v3266, %v3267
  %v3269 = vrot.slane %v3268, 1
  %v3270 = vadd.f32 %v3268, %v3269
  %v3271 = vsel %vm2544, %v3072, %v3094
  %v3272 = vsel %vm1114, %v3271, %v3116
  %vm3273 = vcmask 1042432
  %v3274 = vsel %vm3273, %v3272, %v3138
  %v3275 = vsel %vm275, %v3274, %v3160
  %vm3276 = vcmask 1044480
  %v3277 = vsel %vm3276, %v3275, %v3182
  %vm3278 = vcmask 1045504
  %v3279 = vsel %vm3278, %v3277, %v3204
  %vm3280 = vcmask 1046528
  %v3281 = vsel %vm3280, %v3279, %v3226
  %v3282 = vsel %vm2544, %v3248, %v3270
  %v3283 = vld [vmem:[%s12] sm:$0xff]
  %v3284 = vld [vmem:[%s12 + $0x8] sm:$0xff]
  %v3285 = vld [vmem:[%s13] sm:$0xff]
  %v3286 = vld [vmem:[%s13 + $0x8] sm:$0x3]
  %3288 = vset.pattern.permute.xlu0 0
  %3289 = vperm.xlu0 %3288, %v3285
  %v3290 = vpop.permute.xlu0 %3289
  %3293 = vset.pattern.permute.xlu0 0
  %3294 = vperm.xlu0 %3293, %v3286
  %v3295 = vpop.permute.xlu0 %3294
  %v3298 = vsel %vm3058, %v3281, 0
  %v3301 = vsel %vm3058, %v3282, 0
  %3303 = vmatprep.subr.mxu0 0.0
  %3304 = vmatpush1.msra.mxu0 %v3283
  %3305 = vmatprep.subr.mxu0 0.0
  %3306 = vmatpush1.msra.mxu0 %v3284
  %3307 = vmatprep.subr.mxu0 0.0
  %3308 = vmatpush1.msra.mxu0 0.0
  %3309 = vmatprep.subr.mxu0 0.0
  %3310 = vmatpush1.msra.mxu0 0.0
  %3311 = vmatprep.subr.mxu0 0.0
  %3312 = vmatpush1.msra.mxu0 0.0
  %3313 = vmatprep.subr.mxu0 0.0
  %3314 = vmatpush1.msra.mxu0 0.0
  %3315 = vmatprep.subr.mxu0 0.0
  %3316 = vmatpush1.msra.mxu0 0.0
  %3317 = vmatprep.subr.mxu0 0.0
  %3318 = vmatpush1.msra.mxu0 0.0
  %3319 = vmatprep.subr.mxu0 0.0
  %3320 = vmatpush1.msra.mxu0 0.0
  %3321 = vmatprep.subr.mxu0 0.0
  %3322 = vmatpush1.msra.mxu0 0.0
  %3323 = vmatprep.subr.mxu0 0.0
  %3324 = vmatpush1.msra.mxu0 0.0
  %3325 = vmatprep.subr.mxu0 0.0
  %3326 = vmatpush1.msra.mxu0 0.0
  %3327 = vmatprep.subr.mxu0 0.0
  %3328 = vmatpush1.msra.mxu0 0.0
  %3329 = vmatprep.subr.mxu0 0.0
  %3330 = vmatpush1.msra.mxu0 0.0
  %3331 = vmatprep.subr.mxu0 0.0
  %3332 = vmatpush1.msra.mxu0 0.0
  %3333 = vmatprep.subr.mxu0 0.0
  %3334 = vmatpush1.msra.mxu0 0.0
  %3335 = vmatprep.subr.mxu0 0.0
  %3336 = vmatpush1.msra.mxu0 0.0
  %3337 = vmatprep.subr.mxu0 0.0
  %3338 = vmatpush1.msra.mxu0 0.0
  %3339 = vmatprep.subr.mxu0 0.0
  %3340 = vmatpush1.msra.mxu0 0.0
  %3341 = vmatprep.subr.mxu0 0.0
  %3342 = vmatpush1.msra.mxu0 0.0
  %3343 = vmatprep.subr.mxu0 0.0
  %3344 = vmatpush1.msra.mxu0 0.0
  %3345 = vmatprep.subr.mxu0 0.0
  %3346 = vmatpush1.msra.mxu0 0.0
  %3347 = vmatprep.subr.mxu0 0.0
  %3348 = vmatpush1.msra.mxu0 0.0
  %3349 = vmatprep.subr.mxu0 0.0
  %3350 = vmatpush1.msra.mxu0 0.0
  %3351 = vmatprep.subr.mxu0 0.0
  %3352 = vmatpush1.msra.mxu0 0.0
  %3353 = vmatprep.subr.mxu0 0.0
  %3354 = vmatpush1.msra.mxu0 0.0
  %3355 = vmatprep.subr.mxu0 0.0
  %3356 = vmatpush1.msra.mxu0 0.0
  %3357 = vmatprep.subr.mxu0 0.0
  %3358 = vmatpush1.msra.mxu0 0.0
  %3359 = vmatprep.subr.mxu0 0.0
  %3360 = vmatpush1.msra.mxu0 0.0
  %3361 = vmatprep.subr.mxu0 0.0
  %3362 = vmatpush1.msra.mxu0 0.0
  %3363 = vmatprep.subr.mxu0 0.0
  %3364 = vmatpush1.msra.mxu0 0.0
  %3365 = vmatprep.subr.mxu0 0.0
  %3366 = vmatpush1.msra.mxu0 0.0
  %3367 = vmatprep.mubr.f32.mxu0 0.0
  %3368 = vmatmul.mubr.f32.gmra.mrb[0].mxu0 %v3298
  %v3369 = vpop.f32.mrb[0].mxu0
  %v3370 = vadd.f32 %v3290, %v3369
  %v3371 = vpop.f32.mrb[0].mxu0
  %3372 = vmatprep.mubr.f32.mxu0 0.0
  %3373 = vmatmul.mubr.f32.gmra.mrb[0].mxu0 %v3301
  %v3374 = vpop.f32.mrb[0].mxu0
  %v3375 = vadd.f32 %v3295, %v3374
  %v3376 = vpop.f32.mrb[0].mxu0
  %3377 = vdwg.mxu0
  %vm3378 = vcmask 15360
  %3379 = vst.msk [vmem:[%s14] sm:$0xff] %vm3378, %v3370
  %vm3380 = vcmask 9216
  %3381 = vst.msk [vmem:[%s14 + $0x8] sm:$0x3] %vm3380, %v3375
  // Predicated region
  $region58: #{single_residual_forward.1} parent=0 // pred_check
    _
  $region59: #{single_residual_forward.1} parent=0 // pred_check_branch
    %3383 = sbr.rel (0) target = $region61
  $region60: #{single_residual_forward.1} parent=0 // pred_region
    _
  $region61: #{single_residual_forward.1} parent=0 // pred_fallthru
    _
  // Predicated region
  $region62: #{single_residual_forward.1} parent=0 // pred_check
    _
  $region63: #{single_residual_forward.1} parent=0 // pred_check_branch
    %3385 = sbr.rel (0) target = $region65
  $region64: #{single_residual_forward.1} parent=0 // pred_region
    _
  $region65: #{single_residual_forward.1} parent=0 // pred_fallthru
    _

</llo_original>
